<compile_context>
chip_gen: v6e
topology: v6e:2x2x1
jax: 0.10.0
libtpu: 0.0.40
codegen_flags: <defaults>
</compile_context>

<pallas_src>
import jax
import jax.numpy as jnp
from jax.experimental import pallas as pl
from jax.experimental.pallas import tpu as pltpu


# ----------------------------------- Pallas kernel ---------------------------

def net_kernel(xs_ref, w1_ref, b1_ref, w2_ref, b2_ref, wf_ref, bf_ref, out_ref):
    nb = xs_ref.shape[0]
    xv = xs_ref[...]                       # (nb, 2, 18, 28): rows split by parity, zero padded
    w1 = w1_ref[...]                       # (140, 384) Toeplitz conv1 weight

    # conv1 as a single Toeplitz matmul per output-row parity (y = 2k + p, k = 0..15).
    def conv1_parity(p):
        pieces = []
        for ky in range(5):
            b = (p + ky) % 2
            a = (p + ky) // 2
            piece = xv[:, b, a:a + 16, :]                  # (nb, 16, 28) == x[n, 2k+p+ky, :]
            pieces.append(piece.reshape(nb * 16, 28))
        lhs = jnp.concatenate(pieces, axis=1)              # (nb*16, 140)
        return jnp.dot(lhs, w1, preferred_element_type=jnp.float32)   # (nb*16, 384)

    # H-pool of conv1 = max over the two parities (rows k = 0..11 valid), then bias.
    h = jnp.maximum(conv1_parity(0), conv1_parity(1))      # (nb*16, 384) lanes = 16*x + c
    h = h + b1_ref[...]                                    # bias tiled over the 24 x-groups
    # W-pool: max with a 16-lane-shifted copy; even x groups (lane 32*x1 + c) hold the
    # pooled values, odd groups are dead lanes that hit zero rows of the conv2 weight.
    h_shift = jnp.concatenate([h[:, 16:], h[:, :16]], axis=1)
    g1 = jnp.maximum(jnp.maximum(h, h_shift), 0.0)         # fused relu
    g1_3d = g1.reshape(nb, 16, 384)                        # rows k (12 valid), lanes (x1, c)

    # conv2 as a single Toeplitz matmul: rows = (n, y2), lanes = 32*x2 + co.
    pieces2 = [g1_3d[:, ky:ky + 8, :].reshape(nb * 8, 384) for ky in range(5)]
    lhs2 = jnp.concatenate(pieces2, axis=1)                # (nb*8, 1920)
    c2 = jnp.dot(lhs2, w2_ref[...], preferred_element_type=jnp.float32)   # (nb*8, 256)
    c2 = c2.reshape(nb, 8, 256)

    # 2x2 pool of conv2 via shifted slices; keep even rows / even column-groups valid
    # (the stride-2 selection is absorbed into the expanded fc weight), then bias+relu.
    hp = jnp.maximum(c2[:, 0:7, :], c2[:, 1:8, :])         # (nb, 7, 256)  row pairs
    wp = jnp.maximum(hp[:, :, 0:224], hp[:, :, 32:256])    # (nb, 7, 224)  col-group pairs
    g2 = jnp.maximum(wp + b2_ref[...], 0.0)                # (nb, 7, 224)

    # fc: gather the 4 valid (even) pooled rows, lane-concat -> (nb, 896), one MXU
    # matmul to a lane-dense 128-wide logits slab (10 real classes + padding).
    feats = jnp.concatenate(
        [g2[:, 0, :], g2[:, 2, :], g2[:, 4, :], g2[:, 6, :]], axis=1)     # (nb, 896)
    logits = jnp.dot(feats, wf_ref[...],
                     preferred_element_type=jnp.float32) + bf_ref[...]    # (nb, 128)

    # log_softmax over the class dim (padded classes have -1e30 bias -> exp == 0).
    m = jnp.max(logits, axis=-1, keepdims=True)
    z = logits - m
    lse = jnp.log(jnp.sum(jnp.exp(z), axis=-1, keepdims=True))
    out_ref[...] = z - lse


# ------------------------- weight pre-expansion (wrapper-side, plain XLA) ----

def _conv1_toeplitz(w1_hwio):
    # rhs[ky*28 + w', 16*x + co] = w1[ky, w'-x, 0, co]   for 0 <= w'-x < 5
    blocks = []
    for ky in range(5):
        blk = jnp.zeros((28, 24, 16), jnp.float32)
        for kx in range(5):
            eye = jnp.eye(28, 24, k=-kx, dtype=jnp.float32)   # 1 iff x = w' - kx
            blk = blk + eye[:, :, None] * w1_hwio[ky, kx, 0][None, None, :]
        blocks.append(blk.reshape(28, 24 * 16))
    return jnp.concatenate(blocks, axis=0)                    # (140, 384)


def _conv2_toeplitz(w2_hwio):
    # rhs[ky*384 + 32*x1 + c, 32*x2 + co] = w2[ky, x1-x2, c, co]  (0<=x1-x2<5, c<16)
    blocks = []
    for ky in range(5):
        blk = jnp.zeros((12, 32, 8, 32), jnp.float32)         # [x1, c_pad, x2, co]
        for kx in range(5):
            eye = jnp.eye(12, 8, k=-kx, dtype=jnp.float32)    # 1 iff x2 = x1 - kx
            wpad = jnp.zeros((32, 32), jnp.float32).at[:16, :].set(w2_hwio[ky, kx])
            blk = blk + eye[:, None, :, None] * wpad[None, :, None, :]
        blocks.append(blk.reshape(12 * 32, 8 * 32))
    return jnp.concatenate(blocks, axis=0)                    # (1920, 256)


def _fc_weight(wfc):
    # feats lane = j*224 + 32*x2 + co, valid at even x2 (px = x2//2, py = j).
    # PyTorch flatten (C,H,W) order: feature = co*16 + py*4 + px.
    wfc_r = wfc.reshape(10, 32, 4, 4)                         # [cls, co, py, px]
    wsel = jnp.zeros((4, 7, 32, 128), jnp.float32)            # [py, x2, co, cls_pad]
    for px in range(4):
        wsel = wsel.at[:, 2 * px, :, :10].set(
            jnp.transpose(wfc_r[:, :, :, px], (2, 1, 0)))     # (py, co, cls)
    return wsel.reshape(4 * 7 * 32, 128)                      # (896, 128)


# ----------------------------------- wrapper ---------------------------------

def net_forward(x_nchw, params):
    """Forward pass. x_nchw: (N, 1, 28, 28) float32, PyTorch-layout params."""
    w1, b1, w2, b2, wfc, bfc = params
    n = x_nchw.shape[0]
    x = x_nchw.reshape(n, 28, 28).astype(jnp.float32)

    # Batch tile: multiple of 8, capped at 64 rows (intermediates + double-buffered
    # Toeplitz weights stay well inside v7x's 64 MiB VMEM at the 32 MiB scoped limit).
    nb = min(64, max(8, ((n + 7) // 8) * 8))
    n_pad = ((n + nb - 1) // nb) * nb

    # Split input rows by parity (y = 2i + p) so the conv1 H-pool needs no strides;
    # pad the i-axis to 18 (zeros) so in-kernel slices of 16 rows stay in bounds.
    xs = x.reshape(n, 14, 2, 28).transpose(0, 2, 1, 3)                    # (n, 2, 14, 28)
    xs = jnp.pad(xs, ((0, n_pad - n), (0, 0), (0, 4), (0, 0)))            # (n_pad, 2, 18, 28)

    w1_hwio = jnp.transpose(w1, (2, 3, 1, 0)).astype(jnp.float32)         # (5,5,1,16)
    w2_hwio = jnp.transpose(w2, (2, 3, 1, 0)).astype(jnp.float32)         # (5,5,16,32)
    rhs1 = _conv1_toeplitz(w1_hwio)                                       # (140, 384)
    rhs2 = _conv2_toeplitz(w2_hwio)                                       # (1920, 256)
    b1t = jnp.tile(b1.astype(jnp.float32), 24).reshape(1, 384)
    b2t = jnp.tile(b2.astype(jnp.float32), 7).reshape(1, 224)
    wf_sel = _fc_weight(wfc.astype(jnp.float32))                          # (896, 128)
    bf_pad = jnp.full((1, 128), -1e30, jnp.float32).at[0, :10].set(bfc.astype(jnp.float32))

    grid = (n_pad // nb,)
    out = pl.pallas_call(
        net_kernel,
        out_shape=jax.ShapeDtypeStruct((n_pad, 128), jnp.float32),
        grid_spec=pltpu.PrefetchScalarGridSpec(
            num_scalar_prefetch=0,
            grid=grid,
            in_specs=[
                pl.BlockSpec((nb, 2, 18, 28), lambda i: (i, 0, 0, 0)),
                pl.BlockSpec((140, 384), lambda i: (0, 0)),
                pl.BlockSpec((1, 384), lambda i: (0, 0)),
                pl.BlockSpec((1920, 256), lambda i: (0, 0)),
                pl.BlockSpec((1, 224), lambda i: (0, 0)),
                pl.BlockSpec((896, 128), lambda i: (0, 0)),
                pl.BlockSpec((1, 128), lambda i: (0, 0)),
            ],
            out_specs=pl.BlockSpec((nb, 128), lambda i: (i, 0)),
        ),
        compiler_params=pltpu.CompilerParams(
            dimension_semantics=("parallel",),
            vmem_limit_bytes=32 * 1024 * 1024,
        ),
    )(xs, rhs1, b1t, rhs2, b2t, wf_sel, bf_pad)

    return out[:n, :10]


# ------------------------------ pure-JAX reference ----------------------------

def net_reference(x_nchw, params):
    w1, b1, w2, b2, wfc, bfc = params
    dn = ('NCHW', 'OIHW', 'NCHW')
    h = jax.lax.conv_general_dilated(x_nchw, w1, (1, 1), 'VALID', dimension_numbers=dn)
    h = h + b1[None, :, None, None]
    h = jax.lax.reduce_window(h, -jnp.inf, jax.lax.max, (1, 1, 2, 2), (1, 1, 2, 2), 'VALID')
    h = jnp.maximum(h, 0.0)
    g = jax.lax.conv_general_dilated(h, w2, (1, 1), 'VALID', dimension_numbers=dn)
    g = g + b2[None, :, None, None]
    g = jax.lax.reduce_window(g, -jnp.inf, jax.lax.max, (1, 1, 2, 2), (1, 1, 2, 2), 'VALID')
    g = jnp.maximum(g, 0.0)
    flat = g.reshape(x_nchw.shape[0], -1)
    logits = flat @ wfc.T + bfc
    return jax.nn.log_softmax(logits, axis=-1)


# ------------------------------------ main ------------------------------------

if __name__ == "__main__":
    key = jax.random.PRNGKey(0)
    k_x, k_w1, k_b1, k_w2, k_b2, k_wf, k_bf = jax.random.split(key, 7)

    batch = 2
    x = jax.random.normal(k_x, (batch, 1, 28, 28), jnp.float32)

    # Deterministic synthetic parameters in PyTorch shapes.
    w1 = 0.1 * jax.random.normal(k_w1, (16, 1, 5, 5), jnp.float32)    # conv1.weight
    b1 = 0.1 * jax.random.normal(k_b1, (16,), jnp.float32)            # conv1.bias
    w2 = 0.05 * jax.random.normal(k_w2, (32, 16, 5, 5), jnp.float32)  # conv2.weight
    b2 = 0.05 * jax.random.normal(k_b2, (32,), jnp.float32)           # conv2.bias
    wfc = 0.05 * jax.random.normal(k_wf, (10, 512), jnp.float32)      # fc.weight
    bfc = 0.05 * jax.random.normal(k_bf, (10,), jnp.float32)          # fc.bias
    params = (w1, b1, w2, b2, wfc, bfc)

    out = jax.block_until_ready(net_forward(x, params))
    ref = jax.block_until_ready(net_reference(x, params))

    assert out.shape == (batch, 10)
    assert bool(jnp.all(jnp.isfinite(out)))
    # f32 accumulation order differs (Toeplitz matmuls) -> allow a small tolerance.
    assert bool(jnp.allclose(out, ref, rtol=1e-3, atol=3e-3)), "mismatch vs reference"

    print("KERNEL_OK")
</pallas_src>

<mosaic_0001>
module attributes {stable_mosaic.version = 11 : i64} {
  func.func @net_kernel(%arg0: i32, %arg1: memref<8x2x18x28xf32, #tpu.memory_space<vmem>>, %arg2: memref<140x384xf32, #tpu.memory_space<vmem>>, %arg3: memref<1x384xf32, #tpu.memory_space<vmem>>, %arg4: memref<1920x256xf32, #tpu.memory_space<vmem>>, %arg5: memref<1x224xf32, #tpu.memory_space<vmem>>, %arg6: memref<896x128xf32, #tpu.memory_space<vmem>>, %arg7: memref<1x128xf32, #tpu.memory_space<vmem>>, %arg8: memref<8x128xf32, #tpu.memory_space<vmem>>) attributes {dimension_semantics = [#tpu.dimension_semantics<parallel>], iteration_bounds = array<i64: 1>, scalar_prefetch = 0 : i64, scratch_operands = 0 : i64, tpu.core_type = #tpu.core_type<tc>, window_params = [{transform_indices = @transform_0, window_bounds = array<i64: 8, 2, 18, 28>}, {pipeline_mode = #tpu.pipeline_mode<synchronous>, transform_indices = @transform_1, window_bounds = array<i64: 140, 384>}, {pipeline_mode = #tpu.pipeline_mode<synchronous>, transform_indices = @transform_2, window_bounds = array<i64: 1, 384>}, {pipeline_mode = #tpu.pipeline_mode<synchronous>, transform_indices = @transform_3, window_bounds = array<i64: 1920, 256>}, {pipeline_mode = #tpu.pipeline_mode<synchronous>, transform_indices = @transform_4, window_bounds = array<i64: 1, 224>}, {pipeline_mode = #tpu.pipeline_mode<synchronous>, transform_indices = @transform_5, window_bounds = array<i64: 896, 128>}, {pipeline_mode = #tpu.pipeline_mode<synchronous>, transform_indices = @transform_6, window_bounds = array<i64: 1, 128>}, {transform_indices = @transform_7, window_bounds = array<i64: 8, 128>}]} {
    %c0 = arith.constant 0 : index
    %c0_0 = arith.constant 0 : index
    %c0_1 = arith.constant 0 : index
    %c0_2 = arith.constant 0 : index
    %0 = vector.load %arg1[%c0, %c0_0, %c0_1, %c0_2] : memref<8x2x18x28xf32, #tpu.memory_space<vmem>>, vector<8x2x18x28xf32>
    %c0_3 = arith.constant 0 : index
    %c0_4 = arith.constant 0 : index
    %1 = vector.load %arg2[%c0_3, %c0_4] : memref<140x384xf32, #tpu.memory_space<vmem>>, vector<140x384xf32>
    %2 = vector.extract_strided_slice %0 {offsets = [0, 0, 0, 0], sizes = [8, 1, 16, 28], strides = [1, 1, 1, 1]} : vector<8x2x18x28xf32> to vector<8x1x16x28xf32>
    %3 = vector.shape_cast %2 : vector<8x1x16x28xf32> to vector<8x16x28xf32>
    %4 = vector.shape_cast %3 : vector<8x16x28xf32> to vector<128x28xf32>
    %5 = vector.extract_strided_slice %0 {offsets = [0, 1, 0, 0], sizes = [8, 1, 16, 28], strides = [1, 1, 1, 1]} : vector<8x2x18x28xf32> to vector<8x1x16x28xf32>
    %6 = vector.shape_cast %5 : vector<8x1x16x28xf32> to vector<8x16x28xf32>
    %7 = vector.shape_cast %6 : vector<8x16x28xf32> to vector<128x28xf32>
    %8 = vector.extract_strided_slice %0 {offsets = [0, 0, 1, 0], sizes = [8, 1, 16, 28], strides = [1, 1, 1, 1]} : vector<8x2x18x28xf32> to vector<8x1x16x28xf32>
    %9 = vector.shape_cast %8 : vector<8x1x16x28xf32> to vector<8x16x28xf32>
    %10 = vector.shape_cast %9 : vector<8x16x28xf32> to vector<128x28xf32>
    %11 = vector.extract_strided_slice %0 {offsets = [0, 1, 1, 0], sizes = [8, 1, 16, 28], strides = [1, 1, 1, 1]} : vector<8x2x18x28xf32> to vector<8x1x16x28xf32>
    %12 = vector.shape_cast %11 : vector<8x1x16x28xf32> to vector<8x16x28xf32>
    %13 = vector.shape_cast %12 : vector<8x16x28xf32> to vector<128x28xf32>
    %14 = vector.extract_strided_slice %0 {offsets = [0, 0, 2, 0], sizes = [8, 1, 16, 28], strides = [1, 1, 1, 1]} : vector<8x2x18x28xf32> to vector<8x1x16x28xf32>
    %15 = vector.shape_cast %14 : vector<8x1x16x28xf32> to vector<8x16x28xf32>
    %16 = vector.shape_cast %15 : vector<8x16x28xf32> to vector<128x28xf32>
    %17 = tpu.concatenate %4, %7, %10, %13, %16 in 1 : vector<128x28xf32>, vector<128x28xf32>, vector<128x28xf32>, vector<128x28xf32>, vector<128x28xf32> -> vector<128x140xf32>
    %cst = arith.constant dense<0.000000e+00> : vector<128x384xf32>
    %18 = tpu.matmul %17, %1, %cst {dimension_numbers = #tpu.dot_dimension_numbers<[1], [0], [0], [1], [0, 0, 1, 1], [], []>} : vector<128x140xf32>, vector<140x384xf32>, vector<128x384xf32> -> vector<128x384xf32>
    %19 = vector.extract_strided_slice %0 {offsets = [0, 1, 0, 0], sizes = [8, 1, 16, 28], strides = [1, 1, 1, 1]} : vector<8x2x18x28xf32> to vector<8x1x16x28xf32>
    %20 = vector.shape_cast %19 : vector<8x1x16x28xf32> to vector<8x16x28xf32>
    %21 = vector.shape_cast %20 : vector<8x16x28xf32> to vector<128x28xf32>
    %22 = vector.extract_strided_slice %0 {offsets = [0, 0, 1, 0], sizes = [8, 1, 16, 28], strides = [1, 1, 1, 1]} : vector<8x2x18x28xf32> to vector<8x1x16x28xf32>
    %23 = vector.shape_cast %22 : vector<8x1x16x28xf32> to vector<8x16x28xf32>
    %24 = vector.shape_cast %23 : vector<8x16x28xf32> to vector<128x28xf32>
    %25 = vector.extract_strided_slice %0 {offsets = [0, 1, 1, 0], sizes = [8, 1, 16, 28], strides = [1, 1, 1, 1]} : vector<8x2x18x28xf32> to vector<8x1x16x28xf32>
    %26 = vector.shape_cast %25 : vector<8x1x16x28xf32> to vector<8x16x28xf32>
    %27 = vector.shape_cast %26 : vector<8x16x28xf32> to vector<128x28xf32>
    %28 = vector.extract_strided_slice %0 {offsets = [0, 0, 2, 0], sizes = [8, 1, 16, 28], strides = [1, 1, 1, 1]} : vector<8x2x18x28xf32> to vector<8x1x16x28xf32>
    %29 = vector.shape_cast %28 : vector<8x1x16x28xf32> to vector<8x16x28xf32>
    %30 = vector.shape_cast %29 : vector<8x16x28xf32> to vector<128x28xf32>
    %31 = vector.extract_strided_slice %0 {offsets = [0, 1, 2, 0], sizes = [8, 1, 16, 28], strides = [1, 1, 1, 1]} : vector<8x2x18x28xf32> to vector<8x1x16x28xf32>
    %32 = vector.shape_cast %31 : vector<8x1x16x28xf32> to vector<8x16x28xf32>
    %33 = vector.shape_cast %32 : vector<8x16x28xf32> to vector<128x28xf32>
    %34 = tpu.concatenate %21, %24, %27, %30, %33 in 1 : vector<128x28xf32>, vector<128x28xf32>, vector<128x28xf32>, vector<128x28xf32>, vector<128x28xf32> -> vector<128x140xf32>
    %cst_5 = arith.constant dense<0.000000e+00> : vector<128x384xf32>
    %35 = tpu.matmul %34, %1, %cst_5 {dimension_numbers = #tpu.dot_dimension_numbers<[1], [0], [0], [1], [0, 0, 1, 1], [], []>} : vector<128x140xf32>, vector<140x384xf32>, vector<128x384xf32> -> vector<128x384xf32>
    %36 = arith.maximumf %18, %35 : vector<128x384xf32>
    %c0_6 = arith.constant 0 : index
    %c0_7 = arith.constant 0 : index
    %37 = vector.load %arg3[%c0_6, %c0_7] : memref<1x384xf32, #tpu.memory_space<vmem>>, vector<1x384xf32>
    %38 = vector.broadcast %37 : vector<1x384xf32> to vector<128x384xf32>
    %39 = arith.addf %36, %38 : vector<128x384xf32>
    %40 = vector.extract_strided_slice %39 {offsets = [0, 16], sizes = [128, 368], strides = [1, 1]} : vector<128x384xf32> to vector<128x368xf32>
    %41 = vector.extract_strided_slice %39 {offsets = [0, 0], sizes = [128, 16], strides = [1, 1]} : vector<128x384xf32> to vector<128x16xf32>
    %42 = tpu.concatenate %40, %41 in 1 : vector<128x368xf32>, vector<128x16xf32> -> vector<128x384xf32>
    %43 = arith.maximumf %39, %42 : vector<128x384xf32>
    %cst_8 = arith.constant 0.000000e+00 : f32
    %44 = vector.broadcast %cst_8 : f32 to vector<128x384xf32>
    %45 = arith.maximumf %43, %44 : vector<128x384xf32>
    %46 = vector.shape_cast %45 : vector<128x384xf32> to vector<8x16x384xf32>
    %47 = vector.extract_strided_slice %46 {offsets = [0, 0, 0], sizes = [8, 8, 384], strides = [1, 1, 1]} : vector<8x16x384xf32> to vector<8x8x384xf32>
    %48 = vector.shape_cast %47 : vector<8x8x384xf32> to vector<64x384xf32>
    %49 = vector.extract_strided_slice %46 {offsets = [0, 1, 0], sizes = [8, 8, 384], strides = [1, 1, 1]} : vector<8x16x384xf32> to vector<8x8x384xf32>
    %50 = vector.shape_cast %49 : vector<8x8x384xf32> to vector<64x384xf32>
    %51 = vector.extract_strided_slice %46 {offsets = [0, 2, 0], sizes = [8, 8, 384], strides = [1, 1, 1]} : vector<8x16x384xf32> to vector<8x8x384xf32>
    %52 = vector.shape_cast %51 : vector<8x8x384xf32> to vector<64x384xf32>
    %53 = vector.extract_strided_slice %46 {offsets = [0, 3, 0], sizes = [8, 8, 384], strides = [1, 1, 1]} : vector<8x16x384xf32> to vector<8x8x384xf32>
    %54 = vector.shape_cast %53 : vector<8x8x384xf32> to vector<64x384xf32>
    %55 = vector.extract_strided_slice %46 {offsets = [0, 4, 0], sizes = [8, 8, 384], strides = [1, 1, 1]} : vector<8x16x384xf32> to vector<8x8x384xf32>
    %56 = vector.shape_cast %55 : vector<8x8x384xf32> to vector<64x384xf32>
    %57 = tpu.concatenate %48, %50, %52, %54, %56 in 1 : vector<64x384xf32>, vector<64x384xf32>, vector<64x384xf32>, vector<64x384xf32>, vector<64x384xf32> -> vector<64x1920xf32>
    %c0_9 = arith.constant 0 : index
    %c0_10 = arith.constant 0 : index
    %58 = vector.load %arg4[%c0_9, %c0_10] : memref<1920x256xf32, #tpu.memory_space<vmem>>, vector<1920x256xf32>
    %cst_11 = arith.constant dense<0.000000e+00> : vector<64x256xf32>
    %59 = tpu.matmul %57, %58, %cst_11 {dimension_numbers = #tpu.dot_dimension_numbers<[1], [0], [0], [1], [0, 0, 1, 1], [], []>} : vector<64x1920xf32>, vector<1920x256xf32>, vector<64x256xf32> -> vector<64x256xf32>
    %60 = vector.shape_cast %59 : vector<64x256xf32> to vector<8x8x256xf32>
    %61 = vector.extract_strided_slice %60 {offsets = [0, 0, 0], sizes = [8, 7, 256], strides = [1, 1, 1]} : vector<8x8x256xf32> to vector<8x7x256xf32>
    %62 = vector.extract_strided_slice %60 {offsets = [0, 1, 0], sizes = [8, 7, 256], strides = [1, 1, 1]} : vector<8x8x256xf32> to vector<8x7x256xf32>
    %63 = arith.maximumf %61, %62 : vector<8x7x256xf32>
    %64 = vector.extract_strided_slice %63 {offsets = [0, 0, 0], sizes = [8, 7, 224], strides = [1, 1, 1]} : vector<8x7x256xf32> to vector<8x7x224xf32>
    %65 = vector.extract_strided_slice %63 {offsets = [0, 0, 32], sizes = [8, 7, 224], strides = [1, 1, 1]} : vector<8x7x256xf32> to vector<8x7x224xf32>
    %66 = arith.maximumf %64, %65 : vector<8x7x224xf32>
    %c0_12 = arith.constant 0 : index
    %c0_13 = arith.constant 0 : index
    %67 = vector.load %arg5[%c0_12, %c0_13] : memref<1x224xf32, #tpu.memory_space<vmem>>, vector<1x224xf32>
    %68 = vector.shape_cast %67 : vector<1x224xf32> to vector<1x1x224xf32>
    %69 = vector.broadcast %68 : vector<1x1x224xf32> to vector<8x7x224xf32>
    %70 = arith.addf %66, %69 : vector<8x7x224xf32>
    %cst_14 = arith.constant 0.000000e+00 : f32
    %71 = vector.broadcast %cst_14 : f32 to vector<8x7x224xf32>
    %72 = arith.maximumf %70, %71 : vector<8x7x224xf32>
    %73 = vector.extract_strided_slice %72 {offsets = [0, 0, 0], sizes = [8, 1, 224], strides = [1, 1, 1]} : vector<8x7x224xf32> to vector<8x1x224xf32>
    %74 = vector.shape_cast %73 : vector<8x1x224xf32> to vector<8x224xf32>
    %75 = vector.extract_strided_slice %72 {offsets = [0, 2, 0], sizes = [8, 1, 224], strides = [1, 1, 1]} : vector<8x7x224xf32> to vector<8x1x224xf32>
    %76 = vector.shape_cast %75 : vector<8x1x224xf32> to vector<8x224xf32>
    %77 = vector.extract_strided_slice %72 {offsets = [0, 4, 0], sizes = [8, 1, 224], strides = [1, 1, 1]} : vector<8x7x224xf32> to vector<8x1x224xf32>
    %78 = vector.shape_cast %77 : vector<8x1x224xf32> to vector<8x224xf32>
    %79 = vector.extract_strided_slice %72 {offsets = [0, 6, 0], sizes = [8, 1, 224], strides = [1, 1, 1]} : vector<8x7x224xf32> to vector<8x1x224xf32>
    %80 = vector.shape_cast %79 : vector<8x1x224xf32> to vector<8x224xf32>
    %81 = tpu.concatenate %74, %76, %78, %80 in 1 : vector<8x224xf32>, vector<8x224xf32>, vector<8x224xf32>, vector<8x224xf32> -> vector<8x896xf32>
    %c0_15 = arith.constant 0 : index
    %c0_16 = arith.constant 0 : index
    %82 = vector.load %arg6[%c0_15, %c0_16] : memref<896x128xf32, #tpu.memory_space<vmem>>, vector<896x128xf32>
    %cst_17 = arith.constant dense<0.000000e+00> : vector<8x128xf32>
    %83 = tpu.matmul %81, %82, %cst_17 {dimension_numbers = #tpu.dot_dimension_numbers<[1], [0], [0], [1], [0, 0, 1, 1], [], []>} : vector<8x896xf32>, vector<896x128xf32>, vector<8x128xf32> -> vector<8x128xf32>
    %c0_18 = arith.constant 0 : index
    %c0_19 = arith.constant 0 : index
    %84 = vector.load %arg7[%c0_18, %c0_19] : memref<1x128xf32, #tpu.memory_space<vmem>>, vector<1x128xf32>
    %85 = vector.broadcast %84 : vector<1x128xf32> to vector<8x128xf32>
    %86 = arith.addf %83, %85 : vector<8x128xf32>
    %cst_20 = arith.constant dense<0xFF800000> : vector<8xf32>
    %87 = vector.multi_reduction <maximumf>, %86, %cst_20 [1] : vector<8x128xf32> to vector<8xf32>
    %88 = vector.shape_cast %87 : vector<8xf32> to vector<8x1xf32>
    %89 = vector.broadcast %88 : vector<8x1xf32> to vector<8x128xf32>
    %90 = arith.subf %86, %89 : vector<8x128xf32>
    %91 = math.exp %90 : vector<8x128xf32>
    %cst_21 = arith.constant dense<0.000000e+00> : vector<8xf32>
    %92 = vector.multi_reduction <add>, %91, %cst_21 [1] : vector<8x128xf32> to vector<8xf32>
    %93 = vector.shape_cast %92 : vector<8xf32> to vector<8x1xf32>
    %94 = math.log %93 : vector<8x1xf32>
    %95 = vector.broadcast %94 : vector<8x1xf32> to vector<8x128xf32>
    %96 = arith.subf %90, %95 : vector<8x128xf32>
    %c0_22 = arith.constant 0 : index
    %c0_23 = arith.constant 0 : index
    %97 = vector.load %arg8[%c0_22, %c0_23] : memref<8x128xf32, #tpu.memory_space<vmem>>, vector<8x128xf32>
    tpu.vector_store %arg8[%c0_22, %c0_23], %96 {strides = array<i32>} : memref<8x128xf32, #tpu.memory_space<vmem>>, vector<8x128xf32>,
    return
  }
  func.func @transform_0(%arg0: i32) -> (i32, i32, i32, i32) {
    %c0_i32 = arith.constant 0 : i32
    %c0_i32_0 = arith.constant 0 : i32
    %c0_i32_1 = arith.constant 0 : i32
    %c0_i32_2 = arith.constant 0 : i32
    return %arg0, %c0_i32, %c0_i32_0, %c0_i32_1 : i32, i32, i32, i32
  }
  func.func @transform_1(%arg0: i32) -> (i32, i32) {
    %c0_i32 = arith.constant 0 : i32
    %c0_i32_0 = arith.constant 0 : i32
    %c0_i32_1 = arith.constant 0 : i32
    return %c0_i32, %c0_i32_0 : i32, i32
  }
  func.func @transform_2(%arg0: i32) -> (i32, i32) {
    %c0_i32 = arith.constant 0 : i32
    %c0_i32_0 = arith.constant 0 : i32
    %c0_i32_1 = arith.constant 0 : i32
    return %c0_i32, %c0_i32_0 : i32, i32
  }
  func.func @transform_3(%arg0: i32) -> (i32, i32) {
    %c0_i32 = arith.constant 0 : i32
    %c0_i32_0 = arith.constant 0 : i32
    %c0_i32_1 = arith.constant 0 : i32
    return %c0_i32, %c0_i32_0 : i32, i32
  }
  func.func @transform_4(%arg0: i32) -> (i32, i32) {
    %c0_i32 = arith.constant 0 : i32
    %c0_i32_0 = arith.constant 0 : i32
    %c0_i32_1 = arith.constant 0 : i32
    return %c0_i32, %c0_i32_0 : i32, i32
  }
  func.func @transform_5(%arg0: i32) -> (i32, i32) {
    %c0_i32 = arith.constant 0 : i32
    %c0_i32_0 = arith.constant 0 : i32
    %c0_i32_1 = arith.constant 0 : i32
    return %c0_i32, %c0_i32_0 : i32, i32
  }
  func.func @transform_6(%arg0: i32) -> (i32, i32) {
    %c0_i32 = arith.constant 0 : i32
    %c0_i32_0 = arith.constant 0 : i32
    %c0_i32_1 = arith.constant 0 : i32
    return %c0_i32, %c0_i32_0 : i32, i32
  }
  func.func @transform_7(%arg0: i32) -> (i32, i32) {
    %c0_i32 = arith.constant 0 : i32
    %c0_i32_0 = arith.constant 0 : i32
    return %arg0, %c0_i32 : i32, i32
  }
}

</mosaic_0001>

<llo_original>
// kernel: tpu_custom_call.1
$region0: #{tpu_custom_call.1}
  #allocation0 [shape = 'u32[]', space=smem, size = 0x4, offset = 0x4, fixed_abs, tag = 'smem constant byte address 0x4 - core index']
  #allocation1 [shape = 'u32[144,128]{1,0:T(1,128)}', space=vmem, size = 0x12000, scoped, tag = 'internal scratch']
  %s0 = inlined_call_operand.vmem [shape: f32[8,2,18,28], index: 0, kind: input, shape index: {}]
  %s1 = inlined_call_operand.hbm [shape: f32[140,384], index: 1, kind: input, shape index: {}]
  %s2 = inlined_call_operand.hbm [shape: f32[1,384], index: 2, kind: input, shape index: {}]
  %s3 = inlined_call_operand.hbm [shape: f32[1920,256], index: 3, kind: input, shape index: {}]
  %s4 = inlined_call_operand.hbm [shape: f32[1,224], index: 4, kind: input, shape index: {}]
  %s5 = inlined_call_operand.hbm [shape: f32[896,128], index: 5, kind: input, shape index: {}]
  %s6 = inlined_call_operand.hbm [shape: f32[1,128], index: 6, kind: input, shape index: {}]
  %s7 = inlined_call_operand.hbm [shape: f32[8,128], index: 7, kind: output, shape index: {}]
  %s8 = sld [smem:[#allocation0]]
  $region62: #{tpu_custom_call.1} parent=0
    _
  %s10 = ssub.s32 1, %s8
  %s11 = scalar_select 0, %s10, %s8
  $region1: #{tpu_custom_call.1} parent=0
    #allocation2 [shape = 'u8[221184]{0}', space=vmem, size = 0x36000, scoped, tag = 'input window, operand 1, single buffered']
    #allocation3 [shape = 's32[1]{0}', space=sflag, size = 0x4, scoped, tag = 'scoped memory for tpu_custom_call.1']
    #allocation4 [shape = 's32[1]{0}', space=sflag, size = 0x4, scoped, tag = 'scoped memory for tpu_custom_call.1']
    #allocation5 [shape = 'u8[1536]{0}', space=vmem, size = 0x800, scoped, tag = 'input window, operand 2, single buffered']
    #allocation6 [shape = 's32[1]{0}', space=sflag, size = 0x4, scoped, tag = 'scoped memory for tpu_custom_call.1']
    #allocation7 [shape = 'u8[1966080]{0}', space=vmem, size = 0x1e0000, scoped, tag = 'input window, operand 3, single buffered']
    #allocation8 [shape = 'u8[1024]{0}', space=vmem, size = 0x400, scoped, tag = 'input window, operand 4, single buffered']
    #allocation9 [shape = 's32[1]{0}', space=sflag, size = 0x4, scoped, tag = 'scoped memory for tpu_custom_call.1']
    #allocation10 [shape = 'u8[458752]{0}', space=vmem, size = 0x70000, scoped, tag = 'input window, operand 5, single buffered']
    #allocation11 [shape = 'u8[512]{0}', space=vmem, size = 0x400, scoped, tag = 'input window, operand 6, single buffered']
    #allocation12 [shape = 's32[1]{0}', space=sflag, size = 0x4, scoped, tag = 'scoped memory for tpu_custom_call.1']
    #allocation13 [shape = 'u8[4096]{0}', space=vmem, size = 0x1000, scoped, tag = 'output window, operand 0, single buffered']
    %12 = vsyncpa [#allocation3], 0
    %13 = vsyncpa [#allocation6], 0
    %14 = vsyncpa [#allocation9], 0
    %15 = vsyncpa [#allocation12], 0
    %16 = vsyncpa [#allocation4], 0
    // Predicated region
    $region2: #{tpu_custom_call.1} parent=1 // pred_check
      _
    $region3: #{tpu_custom_call.1} parent=1 // pred_check_branch
      %18 = sbr.rel (0) target = $region5
    $region4: #{tpu_custom_call.1} parent=1 // pred_region
      _
    $region5: #{tpu_custom_call.1} parent=1 // pred_fallthru
      _
    // Predicated region
    $region6: #{tpu_custom_call.1} parent=1 // pred_check
      _
    $region7: #{tpu_custom_call.1} parent=1 // pred_check_branch
      %20 = sbr.rel (0) target = $region9
    $region8: #{tpu_custom_call.1} parent=1 // pred_region
      %s22 = ssub.s32 6912, 6912
      %23 = vsyncadd [#allocation3], %s22
      %s24 = sshll.u32 [#allocation2], 4
      %s25 = int_to_ptr.vmem [resolvable:$true] %s24
      %30 = dma.hbm_to_vmem [thread:$0]  %s1, 6912, %s25, [#allocation3], 384, 384, 24
    $region9: #{tpu_custom_call.1} parent=1 // pred_fallthru
      _
    // Predicated region
    $region10: #{tpu_custom_call.1} parent=1 // pred_check
      _
    $region11: #{tpu_custom_call.1} parent=1 // pred_check_branch
      %32 = sbr.rel (0) target = $region13
    $region12: #{tpu_custom_call.1} parent=1 // pred_region
      %s34 = ssub.s32 48, 48
      %35 = vsyncadd [#allocation6], %s34
      %s37 = sshll.u32 [#allocation5], 4
      %s38 = int_to_ptr.vmem [resolvable:$true] %s37
      %40 = dma.hbm_to_vmem [thread:$0]  %s2, 48, %s38, [#allocation6]
    $region13: #{tpu_custom_call.1} parent=1 // pred_fallthru
      _
    // Predicated region
    $region14: #{tpu_custom_call.1} parent=1 // pred_check
      _
    $region15: #{tpu_custom_call.1} parent=1 // pred_check_branch
      %42 = sbr.rel (0) target = $region17
    $region16: #{tpu_custom_call.1} parent=1 // pred_region
      %s44 = ssub.s32 61440, 61440
      %45 = vsyncadd [#allocation6], %s44
      %s46 = sshll.u32 [#allocation7], 4
      %s47 = int_to_ptr.vmem [resolvable:$true] %s46
      %52 = dma.hbm_to_vmem [thread:$0]  %s3, 61440, %s47, [#allocation6], 256, 256, 16
    $region17: #{tpu_custom_call.1} parent=1 // pred_fallthru
      _
    // Predicated region
    $region18: #{tpu_custom_call.1} parent=1 // pred_check
      _
    $region19: #{tpu_custom_call.1} parent=1 // pred_check_branch
      %54 = sbr.rel (0) target = $region21
    $region20: #{tpu_custom_call.1} parent=1 // pred_region
      %s56 = ssub.s32 32, 32
      %57 = vsyncadd [#allocation9], %s56
      %s59 = sshll.u32 [#allocation8], 4
      %s60 = int_to_ptr.vmem [resolvable:$true] %s59
      %62 = dma.hbm_to_vmem [thread:$0]  %s4, 32, %s60, [#allocation9]
    $region21: #{tpu_custom_call.1} parent=1 // pred_fallthru
      _
    // Predicated region
    $region22: #{tpu_custom_call.1} parent=1 // pred_check
      _
    $region23: #{tpu_custom_call.1} parent=1 // pred_check_branch
      %64 = sbr.rel (0) target = $region25
    $region24: #{tpu_custom_call.1} parent=1 // pred_region
      %s66 = ssub.s32 14336, 14336
      %67 = vsyncadd [#allocation9], %s66
      %s68 = sshll.u32 [#allocation10], 4
      %s69 = int_to_ptr.vmem [resolvable:$true] %s68
      %74 = dma.hbm_to_vmem [thread:$0]  %s5, 14336, %s69, [#allocation9], 128, 128, 8
    $region25: #{tpu_custom_call.1} parent=1 // pred_fallthru
      _
    // Predicated region
    $region26: #{tpu_custom_call.1} parent=1 // pred_check
      _
    $region27: #{tpu_custom_call.1} parent=1 // pred_check_branch
      %76 = sbr.rel (0) target = $region29
    $region28: #{tpu_custom_call.1} parent=1 // pred_region
      %s78 = ssub.s32 16, 16
      %79 = vsyncadd [#allocation12], %s78
      %s81 = sshll.u32 [#allocation11], 4
      %s82 = int_to_ptr.vmem [resolvable:$true] %s81
      %84 = dma.hbm_to_vmem [thread:$0]  %s6, 16, %s82, [#allocation12]
    $region29: #{tpu_custom_call.1} parent=1 // pred_fallthru
      _
    // Predicated region
    $region30: #{tpu_custom_call.1} parent=1 // pred_check
      _
    $region31: #{tpu_custom_call.1} parent=1 // pred_check_branch
      %86 = sbr.rel (0) target = $region33
    $region32: #{tpu_custom_call.1} parent=1 // pred_region
      %87 = dma.done [#allocation3], 6912
    $region33: #{tpu_custom_call.1} parent=1 // pred_fallthru
      _
    // Predicated region
    $region34: #{tpu_custom_call.1} parent=1 // pred_check
      _
    $region35: #{tpu_custom_call.1} parent=1 // pred_check_branch
      %89 = sbr.rel (0) target = $region37
    $region36: #{tpu_custom_call.1} parent=1 // pred_region
      %90 = dma.done [#allocation6], 48
    $region37: #{tpu_custom_call.1} parent=1 // pred_fallthru
      _
    // Predicated region
    $region38: #{tpu_custom_call.1} parent=1 // pred_check
      _
    $region39: #{tpu_custom_call.1} parent=1 // pred_check_branch
      %92 = sbr.rel (0) target = $region41
    $region40: #{tpu_custom_call.1} parent=1 // pred_region
      %93 = dma.done [#allocation6], 61440
    $region41: #{tpu_custom_call.1} parent=1 // pred_fallthru
      _
    // Predicated region
    $region42: #{tpu_custom_call.1} parent=1 // pred_check
      _
    $region43: #{tpu_custom_call.1} parent=1 // pred_check_branch
      %95 = sbr.rel (0) target = $region45
    $region44: #{tpu_custom_call.1} parent=1 // pred_region
      %96 = dma.done [#allocation9], 32
    $region45: #{tpu_custom_call.1} parent=1 // pred_fallthru
      _
    // Predicated region
    $region46: #{tpu_custom_call.1} parent=1 // pred_check
      _
    $region47: #{tpu_custom_call.1} parent=1 // pred_check_branch
      %98 = sbr.rel (0) target = $region49
    $region48: #{tpu_custom_call.1} parent=1 // pred_region
      %99 = dma.done [#allocation9], 14336
    $region49: #{tpu_custom_call.1} parent=1 // pred_fallthru
      _
    // Predicated region
    $region50: #{tpu_custom_call.1} parent=1 // pred_check
      _
    $region51: #{tpu_custom_call.1} parent=1 // pred_check_branch
      %101 = sbr.rel (0) target = $region53
    $region52: #{tpu_custom_call.1} parent=1 // pred_region
      %102 = dma.done [#allocation12], 16
    $region53: #{tpu_custom_call.1} parent=1 // pred_fallthru
      _
    %v103 = vld [vmem:[%s0] sm:$0xff]
    %v104 = vld [vmem:[%s0 + $0x8] sm:$0xff]
    %v105 = vld [vmem:[%s0 + $0x10] sm:$0x3]
    %v106 = vld [vmem:[%s0 + $0x18] sm:$0xff]
    %v107 = vld [vmem:[%s0 + $0x20] sm:$0xff]
    %v108 = vld [vmem:[%s0 + $0x28] sm:$0x3]
    %v109 = vld [vmem:[%s0 + $0x30] sm:$0xff]
    %v110 = vld [vmem:[%s0 + $0x38] sm:$0xff]
    %v111 = vld [vmem:[%s0 + $0x40] sm:$0x3]
    %v112 = vld [vmem:[%s0 + $0x48] sm:$0xff]
    %v113 = vld [vmem:[%s0 + $0x50] sm:$0xff]
    %v114 = vld [vmem:[%s0 + $0x58] sm:$0x3]
    %v115 = vld [vmem:[%s0 + $0x60] sm:$0xff]
    %v116 = vld [vmem:[%s0 + $0x68] sm:$0xff]
    %v117 = vld [vmem:[%s0 + $0x70] sm:$0x3]
    %v118 = vld [vmem:[%s0 + $0x78] sm:$0xff]
    %v119 = vld [vmem:[%s0 + $0x80] sm:$0xff]
    %v120 = vld [vmem:[%s0 + $0x88] sm:$0x3]
    %v121 = vld [vmem:[%s0 + $0x90] sm:$0xff]
    %v122 = vld [vmem:[%s0 + $0x98] sm:$0xff]
    %v123 = vld [vmem:[%s0 + $0xa0] sm:$0x3]
    %v124 = vld [vmem:[%s0 + $0xa8] sm:$0xff]
    %v125 = vld [vmem:[%s0 + $0xb0] sm:$0xff]
    %v126 = vld [vmem:[%s0 + $0xb8] sm:$0x3]
    %v127 = vld [vmem:[%s0 + $0xc0] sm:$0xff]
    %v128 = vld [vmem:[%s0 + $0xc8] sm:$0xff]
    %v129 = vld [vmem:[%s0 + $0xd0] sm:$0x3]
    %v130 = vld [vmem:[%s0 + $0xd8] sm:$0xff]
    %v131 = vld [vmem:[%s0 + $0xe0] sm:$0xff]
    %v132 = vld [vmem:[%s0 + $0xe8] sm:$0x3]
    %v133 = vld [vmem:[%s0 + $0xf0] sm:$0xff]
    %v134 = vld [vmem:[%s0 + $0xf8] sm:$0xff]
    %v135 = vld [vmem:[%s0 + $0x100] sm:$0x3]
    %v136 = vld [vmem:[%s0 + $0x108] sm:$0xff]
    %v137 = vld [vmem:[%s0 + $0x110] sm:$0xff]
    %v138 = vld [vmem:[%s0 + $0x118] sm:$0x3]
    %v139 = vld [vmem:[%s0 + $0x120] sm:$0xff]
    %v140 = vld [vmem:[%s0 + $0x128] sm:$0xff]
    %v141 = vld [vmem:[%s0 + $0x130] sm:$0x3]
    %v142 = vld [vmem:[%s0 + $0x138] sm:$0xff]
    %v143 = vld [vmem:[%s0 + $0x140] sm:$0xff]
    %v144 = vld [vmem:[%s0 + $0x148] sm:$0x3]
    %v145 = vld [vmem:[%s0 + $0x150] sm:$0xff]
    %v146 = vld [vmem:[%s0 + $0x158] sm:$0xff]
    %v147 = vld [vmem:[%s0 + $0x160] sm:$0x3]
    %v148 = vld [vmem:[%s0 + $0x168] sm:$0xff]
    %v149 = vld [vmem:[%s0 + $0x170] sm:$0xff]
    %v150 = vld [vmem:[%s0 + $0x178] sm:$0x3]
    %v151 = vld [vmem:[#allocation2] sm:$0xff]
    %v152 = vld [vmem:[#allocation2 + $0x8] sm:$0xff]
    %v153 = vld [vmem:[#allocation2 + $0x10] sm:$0xff]
    %v154 = vld [vmem:[#allocation2 + $0x18] sm:$0xff]
    %v155 = vld [vmem:[#allocation2 + $0x20] sm:$0xff]
    %v156 = vld [vmem:[#allocation2 + $0x28] sm:$0xff]
    %v157 = vld [vmem:[#allocation2 + $0x30] sm:$0xff]
    %v158 = vld [vmem:[#allocation2 + $0x38] sm:$0xff]
    %v159 = vld [vmem:[#allocation2 + $0x40] sm:$0xff]
    %v160 = vld [vmem:[#allocation2 + $0x48] sm:$0xff]
    %v161 = vld [vmem:[#allocation2 + $0x50] sm:$0xff]
    %v162 = vld [vmem:[#allocation2 + $0x58] sm:$0xff]
    %v163 = vld [vmem:[#allocation2 + $0x60] sm:$0xff]
    %v164 = vld [vmem:[#allocation2 + $0x68] sm:$0xff]
    %v165 = vld [vmem:[#allocation2 + $0x70] sm:$0xff]
    %v166 = vld [vmem:[#allocation2 + $0x78] sm:$0xff]
    %v167 = vld [vmem:[#allocation2 + $0x80] sm:$0xff]
    %v168 = vld [vmem:[#allocation2 + $0x88] sm:$0xff]
    %v169 = vld [vmem:[#allocation2 + $0x90] sm:$0xff]
    %v170 = vld [vmem:[#allocation2 + $0x98] sm:$0xff]
    %v171 = vld [vmem:[#allocation2 + $0xa0] sm:$0xff]
    %v172 = vld [vmem:[#allocation2 + $0xa8] sm:$0xff]
    %v173 = vld [vmem:[#allocation2 + $0xb0] sm:$0xff]
    %v174 = vld [vmem:[#allocation2 + $0xb8] sm:$0xff]
    %v175 = vld [vmem:[#allocation2 + $0xc0] sm:$0xff]
    %v176 = vld [vmem:[#allocation2 + $0xc8] sm:$0xff]
    %v177 = vld [vmem:[#allocation2 + $0xd0] sm:$0xff]
    %v178 = vld [vmem:[#allocation2 + $0xd8] sm:$0xff]
    %v179 = vld [vmem:[#allocation2 + $0xe0] sm:$0xff]
    %v180 = vld [vmem:[#allocation2 + $0xe8] sm:$0xff]
    %v181 = vld [vmem:[#allocation2 + $0xf0] sm:$0xff]
    %v182 = vld [vmem:[#allocation2 + $0xf8] sm:$0xff]
    %v183 = vld [vmem:[#allocation2 + $0x100] sm:$0xff]
    %v184 = vld [vmem:[#allocation2 + $0x108] sm:$0xff]
    %v185 = vld [vmem:[#allocation2 + $0x110] sm:$0xff]
    %v186 = vld [vmem:[#allocation2 + $0x118] sm:$0xff]
    %v187 = vld [vmem:[#allocation2 + $0x120] sm:$0xff]
    %v188 = vld [vmem:[#allocation2 + $0x128] sm:$0xff]
    %v189 = vld [vmem:[#allocation2 + $0x130] sm:$0xff]
    %v190 = vld [vmem:[#allocation2 + $0x138] sm:$0xff]
    %v191 = vld [vmem:[#allocation2 + $0x140] sm:$0xff]
    %v192 = vld [vmem:[#allocation2 + $0x148] sm:$0xff]
    %v193 = vld [vmem:[#allocation2 + $0x150] sm:$0xff]
    %v194 = vld [vmem:[#allocation2 + $0x158] sm:$0xff]
    %v195 = vld [vmem:[#allocation2 + $0x160] sm:$0xff]
    %v196 = vld [vmem:[#allocation2 + $0x168] sm:$0xff]
    %v197 = vld [vmem:[#allocation2 + $0x170] sm:$0xff]
    %v198 = vld [vmem:[#allocation2 + $0x178] sm:$0xff]
    %v199 = vld [vmem:[#allocation2 + $0x180] sm:$0xff]
    %v200 = vld [vmem:[#allocation2 + $0x188] sm:$0xff]
    %v201 = vld [vmem:[#allocation2 + $0x190] sm:$0xff]
    %v202 = vld [vmem:[#allocation2 + $0x198] sm:$0xf]
    %v203 = vld [vmem:[#allocation2 + $0x1a0] sm:$0xf]
    %v204 = vld [vmem:[#allocation2 + $0x1a8] sm:$0xf]
    %vm229 = vcmask 1046528
    %v230 = vrot.slane %v103, 1
    %v231 = vrot.slane %v104, 1
    %v232 = vsel %vm229, %v230, %v231
    %v233 = vrot.slane %v105, 1
    %v234 = vsel %vm229, %v231, %v233
    %v235 = vrot.slane %v109, 1
    %v236 = vrot.slane %v110, 1
    %v237 = vsel %vm229, %v235, %v236
    %v238 = vrot.slane %v111, 1
    %v239 = vsel %vm229, %v236, %v238
    %v240 = vrot.slane %v115, 1
    %v241 = vrot.slane %v116, 1
    %v242 = vsel %vm229, %v240, %v241
    %v243 = vrot.slane %v117, 1
    %v244 = vsel %vm229, %v241, %v243
    %v245 = vrot.slane %v121, 1
    %v246 = vrot.slane %v122, 1
    %v247 = vsel %vm229, %v245, %v246
    %v248 = vrot.slane %v123, 1
    %v249 = vsel %vm229, %v246, %v248
    %v250 = vrot.slane %v127, 1
    %v251 = vrot.slane %v128, 1
    %v252 = vsel %vm229, %v250, %v251
    %v253 = vrot.slane %v129, 1
    %v254 = vsel %vm229, %v251, %v253
    %v255 = vrot.slane %v133, 1
    %v256 = vrot.slane %v134, 1
    %v257 = vsel %vm229, %v255, %v256
    %v258 = vrot.slane %v135, 1
    %v259 = vsel %vm229, %v256, %v258
    %v260 = vrot.slane %v139, 1
    %v261 = vrot.slane %v140, 1
    %v262 = vsel %vm229, %v260, %v261
    %v263 = vrot.slane %v141, 1
    %v264 = vsel %vm229, %v261, %v263
    %v265 = vrot.slane %v145, 1
    %v266 = vrot.slane %v146, 1
    %v267 = vsel %vm229, %v265, %v266
    %v268 = vrot.slane %v147, 1
    %v269 = vsel %vm229, %v266, %v268
    %v294 = vrot.slane %v106, 1
    %v295 = vrot.slane %v107, 1
    %v296 = vsel %vm229, %v294, %v295
    %v297 = vrot.slane %v108, 1
    %v298 = vsel %vm229, %v295, %v297
    %v299 = vrot.slane %v112, 1
    %v300 = vrot.slane %v113, 1
    %v301 = vsel %vm229, %v299, %v300
    %v302 = vrot.slane %v114, 1
    %v303 = vsel %vm229, %v300, %v302
    %v304 = vrot.slane %v118, 1
    %v305 = vrot.slane %v119, 1
    %v306 = vsel %vm229, %v304, %v305
    %v307 = vrot.slane %v120, 1
    %v308 = vsel %vm229, %v305, %v307
    %v309 = vrot.slane %v124, 1
    %v310 = vrot.slane %v125, 1
    %v311 = vsel %vm229, %v309, %v310
    %v312 = vrot.slane %v126, 1
    %v313 = vsel %vm229, %v310, %v312
    %v314 = vrot.slane %v130, 1
    %v315 = vrot.slane %v131, 1
    %v316 = vsel %vm229, %v314, %v315
    %v317 = vrot.slane %v132, 1
    %v318 = vsel %vm229, %v315, %v317
    %v319 = vrot.slane %v136, 1
    %v320 = vrot.slane %v137, 1
    %v321 = vsel %vm229, %v319, %v320
    %v322 = vrot.slane %v138, 1
    %v323 = vsel %vm229, %v320, %v322
    %v324 = vrot.slane %v142, 1
    %v325 = vrot.slane %v143, 1
    %v326 = vsel %vm229, %v324, %v325
    %v327 = vrot.slane %v144, 1
    %v328 = vsel %vm229, %v325, %v327
    %v329 = vrot.slane %v148, 1
    %v330 = vrot.slane %v149, 1
    %v331 = vsel %vm229, %v329, %v330
    %v332 = vrot.slane %v150, 1
    %v333 = vsel %vm229, %v330, %v332
    %vm334 = vcmask 1045504
    %v335 = vrot.slane %v103, 2
    %v336 = vrot.slane %v104, 2
    %v337 = vsel %vm334, %v335, %v336
    %v338 = vrot.slane %v105, 2
    %v339 = vsel %vm334, %v336, %v338
    %v340 = vrot.slane %v109, 2
    %v341 = vrot.slane %v110, 2
    %v342 = vsel %vm334, %v340, %v341
    %v343 = vrot.slane %v111, 2
    %v344 = vsel %vm334, %v341, %v343
    %v345 = vrot.slane %v115, 2
    %v346 = vrot.slane %v116, 2
    %v347 = vsel %vm334, %v345, %v346
    %v348 = vrot.slane %v117, 2
    %v349 = vsel %vm334, %v346, %v348
    %v350 = vrot.slane %v121, 2
    %v351 = vrot.slane %v122, 2
    %v352 = vsel %vm334, %v350, %v351
    %v353 = vrot.slane %v123, 2
    %v354 = vsel %vm334, %v351, %v353
    %v355 = vrot.slane %v127, 2
    %v356 = vrot.slane %v128, 2
    %v357 = vsel %vm334, %v355, %v356
    %v358 = vrot.slane %v129, 2
    %v359 = vsel %vm334, %v356, %v358
    %v360 = vrot.slane %v133, 2
    %v361 = vrot.slane %v134, 2
    %v362 = vsel %vm334, %v360, %v361
    %v363 = vrot.slane %v135, 2
    %v364 = vsel %vm334, %v361, %v363
    %v365 = vrot.slane %v139, 2
    %v366 = vrot.slane %v140, 2
    %v367 = vsel %vm334, %v365, %v366
    %v368 = vrot.slane %v141, 2
    %v369 = vsel %vm334, %v366, %v368
    %v370 = vrot.slane %v145, 2
    %v371 = vrot.slane %v146, 2
    %v372 = vsel %vm334, %v370, %v371
    %v373 = vrot.slane %v147, 2
    %v374 = vsel %vm334, %v371, %v373
    %375 = vrot.lane.b32.xlu0 %v106, 28
    %v376 = vpop.permute.xlu0 %375
    %377 = vrot.lane.b32.xlu0 %v107, 28
    %v378 = vpop.permute.xlu0 %377
    %379 = vrot.lane.b32.xlu0 %v112, 28
    %v380 = vpop.permute.xlu0 %379
    %381 = vrot.lane.b32.xlu0 %v113, 28
    %v382 = vpop.permute.xlu0 %381
    %383 = vrot.lane.b32.xlu0 %v118, 28
    %v384 = vpop.permute.xlu0 %383
    %385 = vrot.lane.b32.xlu0 %v119, 28
    %v386 = vpop.permute.xlu0 %385
    %387 = vrot.lane.b32.xlu0 %v124, 28
    %v388 = vpop.permute.xlu0 %387
    %389 = vrot.lane.b32.xlu0 %v125, 28
    %v390 = vpop.permute.xlu0 %389
    %391 = vrot.lane.b32.xlu0 %v130, 28
    %v392 = vpop.permute.xlu0 %391
    %393 = vrot.lane.b32.xlu0 %v131, 28
    %v394 = vpop.permute.xlu0 %393
    %395 = vrot.lane.b32.xlu0 %v136, 28
    %v396 = vpop.permute.xlu0 %395
    %397 = vrot.lane.b32.xlu0 %v137, 28
    %v398 = vpop.permute.xlu0 %397
    %399 = vrot.lane.b32.xlu0 %v142, 28
    %v400 = vpop.permute.xlu0 %399
    %401 = vrot.lane.b32.xlu0 %v143, 28
    %v402 = vpop.permute.xlu0 %401
    %403 = vrot.lane.b32.xlu0 %v148, 28
    %v404 = vpop.permute.xlu0 %403
    %405 = vrot.lane.b32.xlu0 %v149, 28
    %v406 = vpop.permute.xlu0 %405
    %423 = vrot.lane.b32.xlu0 %v232, 56
    %v424 = vpop.permute.xlu0 %423
    %425 = vrot.lane.b32.xlu0 %v234, 56
    %v426 = vpop.permute.xlu0 %425
    %427 = vrot.lane.b32.xlu0 %v237, 56
    %v428 = vpop.permute.xlu0 %427
    %429 = vrot.lane.b32.xlu0 %v239, 56
    %v430 = vpop.permute.xlu0 %429
    %431 = vrot.lane.b32.xlu0 %v242, 56
    %v432 = vpop.permute.xlu0 %431
    %433 = vrot.lane.b32.xlu0 %v244, 56
    %v434 = vpop.permute.xlu0 %433
    %435 = vrot.lane.b32.xlu0 %v247, 56
    %v436 = vpop.permute.xlu0 %435
    %437 = vrot.lane.b32.xlu0 %v249, 56
    %v438 = vpop.permute.xlu0 %437
    %439 = vrot.lane.b32.xlu0 %v252, 56
    %v440 = vpop.permute.xlu0 %439
    %441 = vrot.lane.b32.xlu0 %v254, 56
    %v442 = vpop.permute.xlu0 %441
    %443 = vrot.lane.b32.xlu0 %v257, 56
    %v444 = vpop.permute.xlu0 %443
    %445 = vrot.lane.b32.xlu0 %v259, 56
    %v446 = vpop.permute.xlu0 %445
    %447 = vrot.lane.b32.xlu0 %v262, 56
    %v448 = vpop.permute.xlu0 %447
    %449 = vrot.lane.b32.xlu0 %v264, 56
    %v450 = vpop.permute.xlu0 %449
    %451 = vrot.lane.b32.xlu0 %v267, 56
    %v452 = vpop.permute.xlu0 %451
    %453 = vrot.lane.b32.xlu0 %v269, 56
    %v454 = vpop.permute.xlu0 %453
    %471 = vrot.lane.b32.xlu0 %v296, 84
    %v472 = vpop.permute.xlu0 %471
    %473 = vrot.lane.b32.xlu0 %v298, 84
    %v474 = vpop.permute.xlu0 %473
    %475 = vrot.lane.b32.xlu0 %v301, 84
    %v476 = vpop.permute.xlu0 %475
    %477 = vrot.lane.b32.xlu0 %v303, 84
    %v478 = vpop.permute.xlu0 %477
    %479 = vrot.lane.b32.xlu0 %v306, 84
    %v480 = vpop.permute.xlu0 %479
    %481 = vrot.lane.b32.xlu0 %v308, 84
    %v482 = vpop.permute.xlu0 %481
    %483 = vrot.lane.b32.xlu0 %v311, 84
    %v484 = vpop.permute.xlu0 %483
    %485 = vrot.lane.b32.xlu0 %v313, 84
    %v486 = vpop.permute.xlu0 %485
    %487 = vrot.lane.b32.xlu0 %v316, 84
    %v488 = vpop.permute.xlu0 %487
    %489 = vrot.lane.b32.xlu0 %v318, 84
    %v490 = vpop.permute.xlu0 %489
    %491 = vrot.lane.b32.xlu0 %v321, 84
    %v492 = vpop.permute.xlu0 %491
    %493 = vrot.lane.b32.xlu0 %v323, 84
    %v494 = vpop.permute.xlu0 %493
    %495 = vrot.lane.b32.xlu0 %v326, 84
    %v496 = vpop.permute.xlu0 %495
    %497 = vrot.lane.b32.xlu0 %v328, 84
    %v498 = vpop.permute.xlu0 %497
    %499 = vrot.lane.b32.xlu0 %v331, 84
    %v500 = vpop.permute.xlu0 %499
    %501 = vrot.lane.b32.xlu0 %v333, 84
    %v502 = vpop.permute.xlu0 %501
    %519 = vrot.lane.b32.xlu0 %v337, 112
    %v520 = vpop.permute.xlu0 %519
    %521 = vrot.lane.b32.xlu0 %v339, 112
    %v522 = vpop.permute.xlu0 %521
    %523 = vrot.lane.b32.xlu0 %v342, 112
    %v524 = vpop.permute.xlu0 %523
    %525 = vrot.lane.b32.xlu0 %v344, 112
    %v526 = vpop.permute.xlu0 %525
    %527 = vrot.lane.b32.xlu0 %v347, 112
    %v528 = vpop.permute.xlu0 %527
    %529 = vrot.lane.b32.xlu0 %v349, 112
    %v530 = vpop.permute.xlu0 %529
    %531 = vrot.lane.b32.xlu0 %v352, 112
    %v532 = vpop.permute.xlu0 %531
    %533 = vrot.lane.b32.xlu0 %v354, 112
    %v534 = vpop.permute.xlu0 %533
    %535 = vrot.lane.b32.xlu0 %v357, 112
    %v536 = vpop.permute.xlu0 %535
    %537 = vrot.lane.b32.xlu0 %v359, 112
    %v538 = vpop.permute.xlu0 %537
    %539 = vrot.lane.b32.xlu0 %v362, 112
    %v540 = vpop.permute.xlu0 %539
    %541 = vrot.lane.b32.xlu0 %v364, 112
    %v542 = vpop.permute.xlu0 %541
    %543 = vrot.lane.b32.xlu0 %v367, 112
    %v544 = vpop.permute.xlu0 %543
    %545 = vrot.lane.b32.xlu0 %v369, 112
    %v546 = vpop.permute.xlu0 %545
    %547 = vrot.lane.b32.xlu0 %v372, 112
    %v548 = vpop.permute.xlu0 %547
    %549 = vrot.lane.b32.xlu0 %v374, 112
    %v550 = vpop.permute.xlu0 %549
    %vm567 = vcmask 228352
    %v568 = vsel %vm567, %v103, %v376
    %v569 = vsel %vm567, %v104, %v378
    %v570 = vsel %vm567, %v109, %v380
    %v571 = vsel %vm567, %v110, %v382
    %v572 = vsel %vm567, %v115, %v384
    %v573 = vsel %vm567, %v116, %v386
    %v574 = vsel %vm567, %v121, %v388
    %v575 = vsel %vm567, %v122, %v390
    %v576 = vsel %vm567, %v127, %v392
    %v577 = vsel %vm567, %v128, %v394
    %v578 = vsel %vm567, %v133, %v396
    %v579 = vsel %vm567, %v134, %v398
    %v580 = vsel %vm567, %v139, %v400
    %v581 = vsel %vm567, %v140, %v402
    %v582 = vsel %vm567, %v145, %v404
    %v583 = vsel %vm567, %v146, %v406
    %vm584 = vcmask 457728
    %v585 = vsel %vm584, %v568, %v424
    %v586 = vsel %vm584, %v569, %v426
    %v587 = vsel %vm584, %v570, %v428
    %v588 = vsel %vm584, %v571, %v430
    %v589 = vsel %vm584, %v572, %v432
    %v590 = vsel %vm584, %v573, %v434
    %v591 = vsel %vm584, %v574, %v436
    %v592 = vsel %vm584, %v575, %v438
    %v593 = vsel %vm584, %v576, %v440
    %v594 = vsel %vm584, %v577, %v442
    %v595 = vsel %vm584, %v578, %v444
    %v596 = vsel %vm584, %v579, %v446
    %v597 = vsel %vm584, %v580, %v448
    %v598 = vsel %vm584, %v581, %v450
    %v599 = vsel %vm584, %v582, %v452
    %v600 = vsel %vm584, %v583, %v454
    %vm601 = vcmask 687104
    %v602 = vsel %vm601, %v585, %v472
    %v603 = vsel %vm601, %v586, %v474
    %v604 = vsel %vm601, %v587, %v476
    %v605 = vsel %vm601, %v588, %v478
    %v606 = vsel %vm601, %v589, %v480
    %v607 = vsel %vm601, %v590, %v482
    %v608 = vsel %vm601, %v591, %v484
    %v609 = vsel %vm601, %v592, %v486
    %v610 = vsel %vm601, %v593, %v488
    %v611 = vsel %vm601, %v594, %v490
    %v612 = vsel %vm601, %v595, %v492
    %v613 = vsel %vm601, %v596, %v494
    %v614 = vsel %vm601, %v597, %v496
    %v615 = vsel %vm601, %v598, %v498
    %v616 = vsel %vm601, %v599, %v500
    %v617 = vsel %vm601, %v600, %v502
    %vm618 = vcmask 916480
    %v619 = vsel %vm618, %v602, %v520
    %v620 = vsel %vm618, %v603, %v522
    %v621 = vsel %vm618, %v604, %v524
    %v622 = vsel %vm618, %v605, %v526
    %v623 = vsel %vm618, %v606, %v528
    %v624 = vsel %vm618, %v607, %v530
    %v625 = vsel %vm618, %v608, %v532
    %v626 = vsel %vm618, %v609, %v534
    %v627 = vsel %vm618, %v610, %v536
    %v628 = vsel %vm618, %v611, %v538
    %v629 = vsel %vm618, %v612, %v540
    %v630 = vsel %vm618, %v613, %v542
    %v631 = vsel %vm618, %v614, %v544
    %v632 = vsel %vm618, %v615, %v546
    %v633 = vsel %vm618, %v616, %v548
    %v634 = vsel %vm618, %v617, %v550
    %vm635 = vcmask 97280
    %v636 = vsel %vm635, %v520, 0
    %v638 = vsel %vm635, %v522, 0
    %v640 = vsel %vm635, %v524, 0
    %v642 = vsel %vm635, %v526, 0
    %v644 = vsel %vm635, %v528, 0
    %v646 = vsel %vm635, %v530, 0
    %v648 = vsel %vm635, %v532, 0
    %v650 = vsel %vm635, %v534, 0
    %v652 = vsel %vm635, %v536, 0
    %v654 = vsel %vm635, %v538, 0
    %v656 = vsel %vm635, %v540, 0
    %v658 = vsel %vm635, %v542, 0
    %v660 = vsel %vm635, %v544, 0
    %v662 = vsel %vm635, %v546, 0
    %v664 = vsel %vm635, %v548, 0
    %v666 = vsel %vm635, %v550, 0
    %vm668 = vcmask 1043456
    %v670 = vsel %vm668, %v202, 0
    %v673 = vsel %vm668, %v203, 0
    %v676 = vsel %vm668, %v204, 0
    %678 = vmatprep.subr.mxu0 %v197
    %679 = vmatpush1.msra.mxu0 %v196
    %680 = vmatprep.subr.mxu0 %v194
    %681 = vmatpush1.msra.mxu0 %v193
    %682 = vmatprep.subr.mxu0 %v191
    %683 = vmatpush1.msra.mxu0 %v190
    %684 = vmatprep.subr.mxu0 %v188
    %685 = vmatpush1.msra.mxu0 %v187
    %686 = vmatprep.subr.mxu0 %v185
    %687 = vmatpush1.msra.mxu0 %v184
    %688 = vmatprep.subr.mxu0 %v182
    %689 = vmatpush1.msra.mxu0 %v181
    %690 = vmatprep.subr.mxu0 %v179
    %691 = vmatpush1.msra.mxu0 %v178
    %692 = vmatprep.subr.mxu0 %v176
    %693 = vmatpush1.msra.mxu0 %v175
    %694 = vmatprep.subr.mxu0 %v173
    %695 = vmatpush1.msra.mxu0 %v172
    %696 = vmatprep.subr.mxu0 %v170
    %697 = vmatpush1.msra.mxu0 %v169
    %698 = vmatprep.subr.mxu0 %v167
    %699 = vmatpush1.msra.mxu0 %v166
    %700 = vmatprep.subr.mxu0 %v164
    %701 = vmatpush1.msra.mxu0 %v163
    %702 = vmatprep.subr.mxu0 %v161
    %703 = vmatpush1.msra.mxu0 %v160
    %704 = vmatprep.subr.mxu0 %v158
    %705 = vmatpush1.msra.mxu0 %v157
    %706 = vmatprep.subr.mxu0 %v155
    %707 = vmatpush1.msra.mxu0 %v154
    %708 = vmatprep.subr.mxu0 %v152
    %709 = vmatpush1.msra.mxu0 %v151
    %710 = vmatprep.subr.mxu0 0.0
    %711 = vmatpush2.msra.mxu0 0.0
    %712 = vmatprep.subr.mxu0 0.0
    %713 = vmatpush2.msra.mxu0 0.0
    %714 = vmatprep.subr.mxu0 0.0
    %715 = vmatpush2.msra.mxu0 0.0
    %716 = vmatprep.subr.mxu0 0.0
    %717 = vmatpush2.msra.mxu0 0.0
    %718 = vmatprep.subr.mxu0 0.0
    %719 = vmatpush2.msra.mxu0 0.0
    %720 = vmatprep.subr.mxu0 0.0
    %721 = vmatpush2.msra.mxu0 0.0
    %722 = vmatprep.subr.mxu0 0.0
    %723 = vmatpush2.msra.mxu0 0.0
    %724 = vmatprep.subr.mxu0 0.0
    %725 = vmatpush2.msra.mxu0 0.0
    %726 = vmatprep.subr.mxu0 0.0
    %727 = vmatpush2.msra.mxu0 0.0
    %728 = vmatprep.subr.mxu0 0.0
    %729 = vmatpush2.msra.mxu0 0.0
    %730 = vmatprep.subr.mxu0 0.0
    %731 = vmatpush2.msra.mxu0 0.0
    %732 = vmatprep.subr.mxu0 0.0
    %733 = vmatpush2.msra.mxu0 0.0
    %734 = vmatprep.subr.mxu0 0.0
    %735 = vmatpush2.msra.mxu0 0.0
    %736 = vmatprep.subr.mxu0 0.0
    %737 = vmatpush2.msra.mxu0 0.0
    %738 = vmatprep.subr.mxu0 %v673
    %739 = vmatpush2.msra.mxu0 %v670
    %740 = vmatprep.subr.mxu0 %v200
    %741 = vmatpush2.msra.mxu0 %v199
    %742 = vmatprep.mubr.f32.mxu0 %v636
    %743 = vmatmul.mubr.f32.gmra.mxu0 %v619
    %v744 = vpop.f32.mrf.mxu0
    %v745 = vadd.f32 0.0, %v744
    %v746 = vpop.f32.mrf.mxu0
    %v747 = vadd.f32 0.0, %v746
    %748 = vmatprep.mubr.f32.mxu0 %v638
    %749 = vmatmul.mubr.f32.gmra.mxu0 %v620
    %v750 = vpop.f32.mrf.mxu0
    %v751 = vadd.f32 0.0, %v750
    %v752 = vpop.f32.mrf.mxu0
    %v753 = vadd.f32 0.0, %v752
    %754 = vmatprep.mubr.f32.mxu0 %v640
    %755 = vmatmul.mubr.f32.gmra.mxu0 %v621
    %v756 = vpop.f32.mrf.mxu0
    %v757 = vadd.f32 0.0, %v756
    %v758 = vpop.f32.mrf.mxu0
    %v759 = vadd.f32 0.0, %v758
    %760 = vmatprep.mubr.f32.mxu0 %v642
    %761 = vmatmul.mubr.f32.gmra.mxu0 %v622
    %v762 = vpop.f32.mrf.mxu0
    %v763 = vadd.f32 0.0, %v762
    %v764 = vpop.f32.mrf.mxu0
    %v765 = vadd.f32 0.0, %v764
    %766 = vmatprep.mubr.f32.mxu0 %v644
    %767 = vmatmul.mubr.f32.gmra.mxu0 %v623
    %v768 = vpop.f32.mrf.mxu0
    %v769 = vadd.f32 0.0, %v768
    %v770 = vpop.f32.mrf.mxu0
    %v771 = vadd.f32 0.0, %v770
    %772 = vmatprep.mubr.f32.mxu0 %v646
    %773 = vmatmul.mubr.f32.gmra.mxu0 %v624
    %v774 = vpop.f32.mrf.mxu0
    %v775 = vadd.f32 0.0, %v774
    %v776 = vpop.f32.mrf.mxu0
    %v777 = vadd.f32 0.0, %v776
    %778 = vmatprep.mubr.f32.mxu0 %v648
    %779 = vmatmul.mubr.f32.gmra.mxu0 %v625
    %v780 = vpop.f32.mrf.mxu0
    %v781 = vadd.f32 0.0, %v780
    %v782 = vpop.f32.mrf.mxu0
    %v783 = vadd.f32 0.0, %v782
    %784 = vmatprep.mubr.f32.mxu0 %v650
    %785 = vmatmul.mubr.f32.gmra.mxu0 %v626
    %v786 = vpop.f32.mrf.mxu0
    %v787 = vadd.f32 0.0, %v786
    %v788 = vpop.f32.mrf.mxu0
    %v789 = vadd.f32 0.0, %v788
    %790 = vmatprep.mubr.f32.mxu0 %v652
    %791 = vmatmul.mubr.f32.gmra.mxu0 %v627
    %v792 = vpop.f32.mrf.mxu0
    %v793 = vadd.f32 0.0, %v792
    %v794 = vpop.f32.mrf.mxu0
    %v795 = vadd.f32 0.0, %v794
    %796 = vmatprep.mubr.f32.mxu0 %v654
    %797 = vmatmul.mubr.f32.gmra.mxu0 %v628
    %v798 = vpop.f32.mrf.mxu0
    %v799 = vadd.f32 0.0, %v798
    %v800 = vpop.f32.mrf.mxu0
    %v801 = vadd.f32 0.0, %v800
    %802 = vmatprep.mubr.f32.mxu0 %v656
    %803 = vmatmul.mubr.f32.gmra.mxu0 %v629
    %v804 = vpop.f32.mrf.mxu0
    %v805 = vadd.f32 0.0, %v804
    %v806 = vpop.f32.mrf.mxu0
    %v807 = vadd.f32 0.0, %v806
    %808 = vmatprep.mubr.f32.mxu0 %v658
    %809 = vmatmul.mubr.f32.gmra.mxu0 %v630
    %v810 = vpop.f32.mrf.mxu0
    %v811 = vadd.f32 0.0, %v810
    %v812 = vpop.f32.mrf.mxu0
    %v813 = vadd.f32 0.0, %v812
    %814 = vmatprep.mubr.f32.mxu0 %v660
    %815 = vmatmul.mubr.f32.gmra.mxu0 %v631
    %v816 = vpop.f32.mrf.mxu0
    %v817 = vadd.f32 0.0, %v816
    %v818 = vpop.f32.mrf.mxu0
    %v819 = vadd.f32 0.0, %v818
    %820 = vmatprep.mubr.f32.mxu0 %v662
    %821 = vmatmul.mubr.f32.gmra.mxu0 %v632
    %v822 = vpop.f32.mrf.mxu0
    %v823 = vadd.f32 0.0, %v822
    %v824 = vpop.f32.mrf.mxu0
    %v825 = vadd.f32 0.0, %v824
    %826 = vmatprep.mubr.f32.mxu0 %v664
    %827 = vmatmul.mubr.f32.gmra.mxu0 %v633
    %v828 = vpop.f32.mrf.mxu0
    %v829 = vadd.f32 0.0, %v828
    %v830 = vpop.f32.mrf.mxu0
    %v831 = vadd.f32 0.0, %v830
    %832 = vmatprep.mubr.f32.mxu0 %v666
    %833 = vmatmul.mubr.f32.gmra.mxu0 %v634
    %v834 = vpop.f32.mrf.mxu0
    %v835 = vadd.f32 0.0, %v834
    %v836 = vpop.f32.mrf.mxu0
    %v837 = vadd.f32 0.0, %v836
    %838 = vdwg.mxu0
    %839 = vmatprep.subr.mxu0 0.0
    %840 = vmatpush1.msra.mxu0 %v198
    %841 = vmatprep.subr.mxu0 0.0
    %842 = vmatpush1.msra.mxu0 %v195
    %843 = vmatprep.subr.mxu0 0.0
    %844 = vmatpush1.msra.mxu0 %v192
    %845 = vmatprep.subr.mxu0 0.0
    %846 = vmatpush1.msra.mxu0 %v189
    %847 = vmatprep.subr.mxu0 0.0
    %848 = vmatpush1.msra.mxu0 %v186
    %849 = vmatprep.subr.mxu0 0.0
    %850 = vmatpush1.msra.mxu0 %v183
    %851 = vmatprep.subr.mxu0 0.0
    %852 = vmatpush1.msra.mxu0 %v180
    %853 = vmatprep.subr.mxu0 0.0
    %854 = vmatpush1.msra.mxu0 %v177
    %855 = vmatprep.subr.mxu0 0.0
    %856 = vmatpush1.msra.mxu0 %v174
    %857 = vmatprep.subr.mxu0 0.0
    %858 = vmatpush1.msra.mxu0 %v171
    %859 = vmatprep.subr.mxu0 0.0
    %860 = vmatpush1.msra.mxu0 %v168
    %861 = vmatprep.subr.mxu0 0.0
    %862 = vmatpush1.msra.mxu0 %v165
    %863 = vmatprep.subr.mxu0 0.0
    %864 = vmatpush1.msra.mxu0 %v162
    %865 = vmatprep.subr.mxu0 0.0
    %866 = vmatpush1.msra.mxu0 %v159
    %867 = vmatprep.subr.mxu0 0.0
    %868 = vmatpush1.msra.mxu0 %v156
    %869 = vmatprep.subr.mxu0 0.0
    %870 = vmatpush1.msra.mxu0 %v153
    %871 = vmatprep.subr.mxu0 0.0
    %872 = vmatpush2.msra.mxu0 0.0
    %873 = vmatprep.subr.mxu0 0.0
    %874 = vmatpush2.msra.mxu0 0.0
    %875 = vmatprep.subr.mxu0 0.0
    %876 = vmatpush2.msra.mxu0 0.0
    %877 = vmatprep.subr.mxu0 0.0
    %878 = vmatpush2.msra.mxu0 0.0
    %879 = vmatprep.subr.mxu0 0.0
    %880 = vmatpush2.msra.mxu0 0.0
    %881 = vmatprep.subr.mxu0 0.0
    %882 = vmatpush2.msra.mxu0 0.0
    %883 = vmatprep.subr.mxu0 0.0
    %884 = vmatpush2.msra.mxu0 0.0
    %885 = vmatprep.subr.mxu0 0.0
    %886 = vmatpush2.msra.mxu0 0.0
    %887 = vmatprep.subr.mxu0 0.0
    %888 = vmatpush2.msra.mxu0 0.0
    %889 = vmatprep.subr.mxu0 0.0
    %890 = vmatpush2.msra.mxu0 0.0
    %891 = vmatprep.subr.mxu0 0.0
    %892 = vmatpush2.msra.mxu0 0.0
    %893 = vmatprep.subr.mxu0 0.0
    %894 = vmatpush2.msra.mxu0 0.0
    %895 = vmatprep.subr.mxu0 0.0
    %896 = vmatpush2.msra.mxu0 0.0
    %897 = vmatprep.subr.mxu0 0.0
    %898 = vmatpush2.msra.mxu0 0.0
    %899 = vmatprep.subr.mxu0 0.0
    %900 = vmatpush2.msra.mxu0 %v676
    %901 = vmatprep.subr.mxu0 0.0
    %902 = vmatpush2.msra.mxu0 %v201
    %903 = vmatprep.mubr.f32.mxu0 %v636
    %904 = vmatmul.mubr.f32.gmra.mxu0 %v619
    %v905 = vpop.f32.mrf.mxu0
    %v906 = vadd.f32 0.0, %v905
    %v907 = vpop.f32.mrf.mxu0
    %908 = vmatprep.mubr.f32.mxu0 %v638
    %909 = vmatmul.mubr.f32.gmra.mxu0 %v620
    %v910 = vpop.f32.mrf.mxu0
    %v911 = vadd.f32 0.0, %v910
    %v912 = vpop.f32.mrf.mxu0
    %913 = vmatprep.mubr.f32.mxu0 %v640
    %914 = vmatmul.mubr.f32.gmra.mxu0 %v621
    %v915 = vpop.f32.mrf.mxu0
    %v916 = vadd.f32 0.0, %v915
    %v917 = vpop.f32.mrf.mxu0
    %918 = vmatprep.mubr.f32.mxu0 %v642
    %919 = vmatmul.mubr.f32.gmra.mxu0 %v622
    %v920 = vpop.f32.mrf.mxu0
    %v921 = vadd.f32 0.0, %v920
    %v922 = vpop.f32.mrf.mxu0
    %923 = vmatprep.mubr.f32.mxu0 %v644
    %924 = vmatmul.mubr.f32.gmra.mxu0 %v623
    %v925 = vpop.f32.mrf.mxu0
    %v926 = vadd.f32 0.0, %v925
    %v927 = vpop.f32.mrf.mxu0
    %928 = vmatprep.mubr.f32.mxu0 %v646
    %929 = vmatmul.mubr.f32.gmra.mxu0 %v624
    %v930 = vpop.f32.mrf.mxu0
    %v931 = vadd.f32 0.0, %v930
    %v932 = vpop.f32.mrf.mxu0
    %933 = vmatprep.mubr.f32.mxu0 %v648
    %934 = vmatmul.mubr.f32.gmra.mxu0 %v625
    %v935 = vpop.f32.mrf.mxu0
    %v936 = vadd.f32 0.0, %v935
    %v937 = vpop.f32.mrf.mxu0
    %938 = vmatprep.mubr.f32.mxu0 %v650
    %939 = vmatmul.mubr.f32.gmra.mxu0 %v626
    %v940 = vpop.f32.mrf.mxu0
    %v941 = vadd.f32 0.0, %v940
    %v942 = vpop.f32.mrf.mxu0
    %943 = vmatprep.mubr.f32.mxu0 %v652
    %944 = vmatmul.mubr.f32.gmra.mxu0 %v627
    %v945 = vpop.f32.mrf.mxu0
    %v946 = vadd.f32 0.0, %v945
    %v947 = vpop.f32.mrf.mxu0
    %948 = vmatprep.mubr.f32.mxu0 %v654
    %949 = vmatmul.mubr.f32.gmra.mxu0 %v628
    %v950 = vpop.f32.mrf.mxu0
    %v951 = vadd.f32 0.0, %v950
    %v952 = vpop.f32.mrf.mxu0
    %953 = vmatprep.mubr.f32.mxu0 %v656
    %954 = vmatmul.mubr.f32.gmra.mxu0 %v629
    %v955 = vpop.f32.mrf.mxu0
    %v956 = vadd.f32 0.0, %v955
    %v957 = vpop.f32.mrf.mxu0
    %958 = vmatprep.mubr.f32.mxu0 %v658
    %959 = vmatmul.mubr.f32.gmra.mxu0 %v630
    %v960 = vpop.f32.mrf.mxu0
    %v961 = vadd.f32 0.0, %v960
    %v962 = vpop.f32.mrf.mxu0
    %963 = vmatprep.mubr.f32.mxu0 %v660
    %964 = vmatmul.mubr.f32.gmra.mxu0 %v631
    %v965 = vpop.f32.mrf.mxu0
    %v966 = vadd.f32 0.0, %v965
    %v967 = vpop.f32.mrf.mxu0
    %968 = vmatprep.mubr.f32.mxu0 %v662
    %969 = vmatmul.mubr.f32.gmra.mxu0 %v632
    %v970 = vpop.f32.mrf.mxu0
    %v971 = vadd.f32 0.0, %v970
    %v972 = vpop.f32.mrf.mxu0
    %973 = vmatprep.mubr.f32.mxu0 %v664
    %974 = vmatmul.mubr.f32.gmra.mxu0 %v633
    %v975 = vpop.f32.mrf.mxu0
    %v976 = vadd.f32 0.0, %v975
    %v977 = vpop.f32.mrf.mxu0
    %978 = vmatprep.mubr.f32.mxu0 %v666
    %979 = vmatmul.mubr.f32.gmra.mxu0 %v634
    %v980 = vpop.f32.mrf.mxu0
    %v981 = vadd.f32 0.0, %v980
    %v982 = vpop.f32.mrf.mxu0
    %983 = vdwg.mxu0
    %v984 = vrot.slane %v106, 2
    %v985 = vrot.slane %v107, 2
    %v986 = vsel %vm334, %v984, %v985
    %v987 = vrot.slane %v108, 2
    %v988 = vsel %vm334, %v985, %v987
    %v989 = vrot.slane %v112, 2
    %v990 = vrot.slane %v113, 2
    %v991 = vsel %vm334, %v989, %v990
    %v992 = vrot.slane %v114, 2
    %v993 = vsel %vm334, %v990, %v992
    %v994 = vrot.slane %v118, 2
    %v995 = vrot.slane %v119, 2
    %v996 = vsel %vm334, %v994, %v995
    %v997 = vrot.slane %v120, 2
    %v998 = vsel %vm334, %v995, %v997
    %v999 = vrot.slane %v124, 2
    %v1000 = vrot.slane %v125, 2
    %v1001 = vsel %vm334, %v999, %v1000
    %v1002 = vrot.slane %v126, 2
    %v1003 = vsel %vm334, %v1000, %v1002
    %v1004 = vrot.slane %v130, 2
    %v1005 = vrot.slane %v131, 2
    %v1006 = vsel %vm334, %v1004, %v1005
    %v1007 = vrot.slane %v132, 2
    %v1008 = vsel %vm334, %v1005, %v1007
    %v1009 = vrot.slane %v136, 2
    %v1010 = vrot.slane %v137, 2
    %v1011 = vsel %vm334, %v1009, %v1010
    %v1012 = vrot.slane %v138, 2
    %v1013 = vsel %vm334, %v1010, %v1012
    %v1014 = vrot.slane %v142, 2
    %v1015 = vrot.slane %v143, 2
    %v1016 = vsel %vm334, %v1014, %v1015
    %v1017 = vrot.slane %v144, 2
    %v1018 = vsel %vm334, %v1015, %v1017
    %v1019 = vrot.slane %v148, 2
    %v1020 = vrot.slane %v149, 2
    %v1021 = vsel %vm334, %v1019, %v1020
    %v1022 = vrot.slane %v150, 2
    %v1023 = vsel %vm334, %v1020, %v1022
    %1024 = vrot.lane.b32.xlu0 %v232, 28
    %v1025 = vpop.permute.xlu0 %1024
    %1026 = vrot.lane.b32.xlu0 %v234, 28
    %v1027 = vpop.permute.xlu0 %1026
    %1028 = vrot.lane.b32.xlu0 %v237, 28
    %v1029 = vpop.permute.xlu0 %1028
    %1030 = vrot.lane.b32.xlu0 %v239, 28
    %v1031 = vpop.permute.xlu0 %1030
    %1032 = vrot.lane.b32.xlu0 %v242, 28
    %v1033 = vpop.permute.xlu0 %1032
    %1034 = vrot.lane.b32.xlu0 %v244, 28
    %v1035 = vpop.permute.xlu0 %1034
    %1036 = vrot.lane.b32.xlu0 %v247, 28
    %v1037 = vpop.permute.xlu0 %1036
    %1038 = vrot.lane.b32.xlu0 %v249, 28
    %v1039 = vpop.permute.xlu0 %1038
    %1040 = vrot.lane.b32.xlu0 %v252, 28
    %v1041 = vpop.permute.xlu0 %1040
    %1042 = vrot.lane.b32.xlu0 %v254, 28
    %v1043 = vpop.permute.xlu0 %1042
    %1044 = vrot.lane.b32.xlu0 %v257, 28
    %v1045 = vpop.permute.xlu0 %1044
    %1046 = vrot.lane.b32.xlu0 %v259, 28
    %v1047 = vpop.permute.xlu0 %1046
    %1048 = vrot.lane.b32.xlu0 %v262, 28
    %v1049 = vpop.permute.xlu0 %1048
    %1050 = vrot.lane.b32.xlu0 %v264, 28
    %v1051 = vpop.permute.xlu0 %1050
    %1052 = vrot.lane.b32.xlu0 %v267, 28
    %v1053 = vpop.permute.xlu0 %1052
    %1054 = vrot.lane.b32.xlu0 %v269, 28
    %v1055 = vpop.permute.xlu0 %1054
    %1072 = vrot.lane.b32.xlu0 %v296, 56
    %v1073 = vpop.permute.xlu0 %1072
    %1074 = vrot.lane.b32.xlu0 %v298, 56
    %v1075 = vpop.permute.xlu0 %1074
    %1076 = vrot.lane.b32.xlu0 %v301, 56
    %v1077 = vpop.permute.xlu0 %1076
    %1078 = vrot.lane.b32.xlu0 %v303, 56
    %v1079 = vpop.permute.xlu0 %1078
    %1080 = vrot.lane.b32.xlu0 %v306, 56
    %v1081 = vpop.permute.xlu0 %1080
    %1082 = vrot.lane.b32.xlu0 %v308, 56
    %v1083 = vpop.permute.xlu0 %1082
    %1084 = vrot.lane.b32.xlu0 %v311, 56
    %v1085 = vpop.permute.xlu0 %1084
    %1086 = vrot.lane.b32.xlu0 %v313, 56
    %v1087 = vpop.permute.xlu0 %1086
    %1088 = vrot.lane.b32.xlu0 %v316, 56
    %v1089 = vpop.permute.xlu0 %1088
    %1090 = vrot.lane.b32.xlu0 %v318, 56
    %v1091 = vpop.permute.xlu0 %1090
    %1092 = vrot.lane.b32.xlu0 %v321, 56
    %v1093 = vpop.permute.xlu0 %1092
    %1094 = vrot.lane.b32.xlu0 %v323, 56
    %v1095 = vpop.permute.xlu0 %1094
    %1096 = vrot.lane.b32.xlu0 %v326, 56
    %v1097 = vpop.permute.xlu0 %1096
    %1098 = vrot.lane.b32.xlu0 %v328, 56
    %v1099 = vpop.permute.xlu0 %1098
    %1100 = vrot.lane.b32.xlu0 %v331, 56
    %v1101 = vpop.permute.xlu0 %1100
    %1102 = vrot.lane.b32.xlu0 %v333, 56
    %v1103 = vpop.permute.xlu0 %1102
    %1120 = vrot.lane.b32.xlu0 %v337, 84
    %v1121 = vpop.permute.xlu0 %1120
    %1122 = vrot.lane.b32.xlu0 %v339, 84
    %v1123 = vpop.permute.xlu0 %1122
    %1124 = vrot.lane.b32.xlu0 %v342, 84
    %v1125 = vpop.permute.xlu0 %1124
    %1126 = vrot.lane.b32.xlu0 %v344, 84
    %v1127 = vpop.permute.xlu0 %1126
    %1128 = vrot.lane.b32.xlu0 %v347, 84
    %v1129 = vpop.permute.xlu0 %1128
    %1130 = vrot.lane.b32.xlu0 %v349, 84
    %v1131 = vpop.permute.xlu0 %1130
    %1132 = vrot.lane.b32.xlu0 %v352, 84
    %v1133 = vpop.permute.xlu0 %1132
    %1134 = vrot.lane.b32.xlu0 %v354, 84
    %v1135 = vpop.permute.xlu0 %1134
    %1136 = vrot.lane.b32.xlu0 %v357, 84
    %v1137 = vpop.permute.xlu0 %1136
    %1138 = vrot.lane.b32.xlu0 %v359, 84
    %v1139 = vpop.permute.xlu0 %1138
    %1140 = vrot.lane.b32.xlu0 %v362, 84
    %v1141 = vpop.permute.xlu0 %1140
    %1142 = vrot.lane.b32.xlu0 %v364, 84
    %v1143 = vpop.permute.xlu0 %1142
    %1144 = vrot.lane.b32.xlu0 %v367, 84
    %v1145 = vpop.permute.xlu0 %1144
    %1146 = vrot.lane.b32.xlu0 %v369, 84
    %v1147 = vpop.permute.xlu0 %1146
    %1148 = vrot.lane.b32.xlu0 %v372, 84
    %v1149 = vpop.permute.xlu0 %1148
    %1150 = vrot.lane.b32.xlu0 %v374, 84
    %v1151 = vpop.permute.xlu0 %1150
    %1168 = vrot.lane.b32.xlu0 %v986, 112
    %v1169 = vpop.permute.xlu0 %1168
    %1170 = vrot.lane.b32.xlu0 %v988, 112
    %v1171 = vpop.permute.xlu0 %1170
    %1172 = vrot.lane.b32.xlu0 %v991, 112
    %v1173 = vpop.permute.xlu0 %1172
    %1174 = vrot.lane.b32.xlu0 %v993, 112
    %v1175 = vpop.permute.xlu0 %1174
    %1176 = vrot.lane.b32.xlu0 %v996, 112
    %v1177 = vpop.permute.xlu0 %1176
    %1178 = vrot.lane.b32.xlu0 %v998, 112
    %v1179 = vpop.permute.xlu0 %1178
    %1180 = vrot.lane.b32.xlu0 %v1001, 112
    %v1181 = vpop.permute.xlu0 %1180
    %1182 = vrot.lane.b32.xlu0 %v1003, 112
    %v1183 = vpop.permute.xlu0 %1182
    %1184 = vrot.lane.b32.xlu0 %v1006, 112
    %v1185 = vpop.permute.xlu0 %1184
    %1186 = vrot.lane.b32.xlu0 %v1008, 112
    %v1187 = vpop.permute.xlu0 %1186
    %1188 = vrot.lane.b32.xlu0 %v1011, 112
    %v1189 = vpop.permute.xlu0 %1188
    %1190 = vrot.lane.b32.xlu0 %v1013, 112
    %v1191 = vpop.permute.xlu0 %1190
    %1192 = vrot.lane.b32.xlu0 %v1016, 112
    %v1193 = vpop.permute.xlu0 %1192
    %1194 = vrot.lane.b32.xlu0 %v1018, 112
    %v1195 = vpop.permute.xlu0 %1194
    %1196 = vrot.lane.b32.xlu0 %v1021, 112
    %v1197 = vpop.permute.xlu0 %1196
    %1198 = vrot.lane.b32.xlu0 %v1023, 112
    %v1199 = vpop.permute.xlu0 %1198
    %v1216 = vsel %vm567, %v106, %v1025
    %v1217 = vsel %vm567, %v107, %v1027
    %v1218 = vsel %vm567, %v112, %v1029
    %v1219 = vsel %vm567, %v113, %v1031
    %v1220 = vsel %vm567, %v118, %v1033
    %v1221 = vsel %vm567, %v119, %v1035
    %v1222 = vsel %vm567, %v124, %v1037
    %v1223 = vsel %vm567, %v125, %v1039
    %v1224 = vsel %vm567, %v130, %v1041
    %v1225 = vsel %vm567, %v131, %v1043
    %v1226 = vsel %vm567, %v136, %v1045
    %v1227 = vsel %vm567, %v137, %v1047
    %v1228 = vsel %vm567, %v142, %v1049
    %v1229 = vsel %vm567, %v143, %v1051
    %v1230 = vsel %vm567, %v148, %v1053
    %v1231 = vsel %vm567, %v149, %v1055
    %v1232 = vsel %vm584, %v1216, %v1073
    %v1233 = vsel %vm584, %v1217, %v1075
    %v1234 = vsel %vm584, %v1218, %v1077
    %v1235 = vsel %vm584, %v1219, %v1079
    %v1236 = vsel %vm584, %v1220, %v1081
    %v1237 = vsel %vm584, %v1221, %v1083
    %v1238 = vsel %vm584, %v1222, %v1085
    %v1239 = vsel %vm584, %v1223, %v1087
    %v1240 = vsel %vm584, %v1224, %v1089
    %v1241 = vsel %vm584, %v1225, %v1091
    %v1242 = vsel %vm584, %v1226, %v1093
    %v1243 = vsel %vm584, %v1227, %v1095
    %v1244 = vsel %vm584, %v1228, %v1097
    %v1245 = vsel %vm584, %v1229, %v1099
    %v1246 = vsel %vm584, %v1230, %v1101
    %v1247 = vsel %vm584, %v1231, %v1103
    %v1248 = vsel %vm601, %v1232, %v1121
    %v1249 = vsel %vm601, %v1233, %v1123
    %v1250 = vsel %vm601, %v1234, %v1125
    %v1251 = vsel %vm601, %v1235, %v1127
    %v1252 = vsel %vm601, %v1236, %v1129
    %v1253 = vsel %vm601, %v1237, %v1131
    %v1254 = vsel %vm601, %v1238, %v1133
    %v1255 = vsel %vm601, %v1239, %v1135
    %v1256 = vsel %vm601, %v1240, %v1137
    %v1257 = vsel %vm601, %v1241, %v1139
    %v1258 = vsel %vm601, %v1242, %v1141
    %v1259 = vsel %vm601, %v1243, %v1143
    %v1260 = vsel %vm601, %v1244, %v1145
    %v1261 = vsel %vm601, %v1245, %v1147
    %v1262 = vsel %vm601, %v1246, %v1149
    %v1263 = vsel %vm601, %v1247, %v1151
    %v1264 = vsel %vm618, %v1248, %v1169
    %v1265 = vsel %vm618, %v1249, %v1171
    %v1266 = vsel %vm618, %v1250, %v1173
    %v1267 = vsel %vm618, %v1251, %v1175
    %v1268 = vsel %vm618, %v1252, %v1177
    %v1269 = vsel %vm618, %v1253, %v1179
    %v1270 = vsel %vm618, %v1254, %v1181
    %v1271 = vsel %vm618, %v1255, %v1183
    %v1272 = vsel %vm618, %v1256, %v1185
    %v1273 = vsel %vm618, %v1257, %v1187
    %v1274 = vsel %vm618, %v1258, %v1189
    %v1275 = vsel %vm618, %v1259, %v1191
    %v1276 = vsel %vm618, %v1260, %v1193
    %v1277 = vsel %vm618, %v1261, %v1195
    %v1278 = vsel %vm618, %v1262, %v1197
    %v1279 = vsel %vm618, %v1263, %v1199
    %v1280 = vsel %vm635, %v1169, 0
    %v1282 = vsel %vm635, %v1171, 0
    %v1284 = vsel %vm635, %v1173, 0
    %v1286 = vsel %vm635, %v1175, 0
    %v1288 = vsel %vm635, %v1177, 0
    %v1290 = vsel %vm635, %v1179, 0
    %v1292 = vsel %vm635, %v1181, 0
    %v1294 = vsel %vm635, %v1183, 0
    %v1296 = vsel %vm635, %v1185, 0
    %v1298 = vsel %vm635, %v1187, 0
    %v1300 = vsel %vm635, %v1189, 0
    %v1302 = vsel %vm635, %v1191, 0
    %v1304 = vsel %vm635, %v1193, 0
    %v1306 = vsel %vm635, %v1195, 0
    %v1308 = vsel %vm635, %v1197, 0
    %v1310 = vsel %vm635, %v1199, 0
    %1312 = vmatprep.subr.mxu0 %v197
    %1313 = vmatpush1.msra.mxu0 %v196
    %1314 = vmatprep.subr.mxu0 %v194
    %1315 = vmatpush1.msra.mxu0 %v193
    %1316 = vmatprep.subr.mxu0 %v191
    %1317 = vmatpush1.msra.mxu0 %v190
    %1318 = vmatprep.subr.mxu0 %v188
    %1319 = vmatpush1.msra.mxu0 %v187
    %1320 = vmatprep.subr.mxu0 %v185
    %1321 = vmatpush1.msra.mxu0 %v184
    %1322 = vmatprep.subr.mxu0 %v182
    %1323 = vmatpush1.msra.mxu0 %v181
    %1324 = vmatprep.subr.mxu0 %v179
    %1325 = vmatpush1.msra.mxu0 %v178
    %1326 = vmatprep.subr.mxu0 %v176
    %1327 = vmatpush1.msra.mxu0 %v175
    %1328 = vmatprep.subr.mxu0 %v173
    %1329 = vmatpush1.msra.mxu0 %v172
    %1330 = vmatprep.subr.mxu0 %v170
    %1331 = vmatpush1.msra.mxu0 %v169
    %1332 = vmatprep.subr.mxu0 %v167
    %1333 = vmatpush1.msra.mxu0 %v166
    %1334 = vmatprep.subr.mxu0 %v164
    %1335 = vmatpush1.msra.mxu0 %v163
    %1336 = vmatprep.subr.mxu0 %v161
    %1337 = vmatpush1.msra.mxu0 %v160
    %1338 = vmatprep.subr.mxu0 %v158
    %1339 = vmatpush1.msra.mxu0 %v157
    %1340 = vmatprep.subr.mxu0 %v155
    %1341 = vmatpush1.msra.mxu0 %v154
    %1342 = vmatprep.subr.mxu0 %v152
    %1343 = vmatpush1.msra.mxu0 %v151
    %1344 = vmatprep.subr.mxu0 0.0
    %1345 = vmatpush2.msra.mxu0 0.0
    %1346 = vmatprep.subr.mxu0 0.0
    %1347 = vmatpush2.msra.mxu0 0.0
    %1348 = vmatprep.subr.mxu0 0.0
    %1349 = vmatpush2.msra.mxu0 0.0
    %1350 = vmatprep.subr.mxu0 0.0
    %1351 = vmatpush2.msra.mxu0 0.0
    %1352 = vmatprep.subr.mxu0 0.0
    %1353 = vmatpush2.msra.mxu0 0.0
    %1354 = vmatprep.subr.mxu0 0.0
    %1355 = vmatpush2.msra.mxu0 0.0
    %1356 = vmatprep.subr.mxu0 0.0
    %1357 = vmatpush2.msra.mxu0 0.0
    %1358 = vmatprep.subr.mxu0 0.0
    %1359 = vmatpush2.msra.mxu0 0.0
    %1360 = vmatprep.subr.mxu0 0.0
    %1361 = vmatpush2.msra.mxu0 0.0
    %1362 = vmatprep.subr.mxu0 0.0
    %1363 = vmatpush2.msra.mxu0 0.0
    %1364 = vmatprep.subr.mxu0 0.0
    %1365 = vmatpush2.msra.mxu0 0.0
    %1366 = vmatprep.subr.mxu0 0.0
    %1367 = vmatpush2.msra.mxu0 0.0
    %1368 = vmatprep.subr.mxu0 0.0
    %1369 = vmatpush2.msra.mxu0 0.0
    %1370 = vmatprep.subr.mxu0 0.0
    %1371 = vmatpush2.msra.mxu0 0.0
    %1372 = vmatprep.subr.mxu0 %v673
    %1373 = vmatpush2.msra.mxu0 %v670
    %1374 = vmatprep.subr.mxu0 %v200
    %1375 = vmatpush2.msra.mxu0 %v199
    %1376 = vmatprep.mubr.f32.mxu0 %v1280
    %1377 = vmatmul.mubr.f32.gmra.mxu0 %v1264
    %v1378 = vpop.f32.mrf.mxu0
    %v1379 = vadd.f32 0.0, %v1378
    %v1380 = vpop.f32.mrf.mxu0
    %v1381 = vadd.f32 0.0, %v1380
    %1382 = vmatprep.mubr.f32.mxu0 %v1282
    %1383 = vmatmul.mubr.f32.gmra.mxu0 %v1265
    %v1384 = vpop.f32.mrf.mxu0
    %v1385 = vadd.f32 0.0, %v1384
    %v1386 = vpop.f32.mrf.mxu0
    %v1387 = vadd.f32 0.0, %v1386
    %1388 = vmatprep.mubr.f32.mxu0 %v1284
    %1389 = vmatmul.mubr.f32.gmra.mxu0 %v1266
    %v1390 = vpop.f32.mrf.mxu0
    %v1391 = vadd.f32 0.0, %v1390
    %v1392 = vpop.f32.mrf.mxu0
    %v1393 = vadd.f32 0.0, %v1392
    %1394 = vmatprep.mubr.f32.mxu0 %v1286
    %1395 = vmatmul.mubr.f32.gmra.mxu0 %v1267
    %v1396 = vpop.f32.mrf.mxu0
    %v1397 = vadd.f32 0.0, %v1396
    %v1398 = vpop.f32.mrf.mxu0
    %v1399 = vadd.f32 0.0, %v1398
    %1400 = vmatprep.mubr.f32.mxu0 %v1288
    %1401 = vmatmul.mubr.f32.gmra.mxu0 %v1268
    %v1402 = vpop.f32.mrf.mxu0
    %v1403 = vadd.f32 0.0, %v1402
    %v1404 = vpop.f32.mrf.mxu0
    %v1405 = vadd.f32 0.0, %v1404
    %1406 = vmatprep.mubr.f32.mxu0 %v1290
    %1407 = vmatmul.mubr.f32.gmra.mxu0 %v1269
    %v1408 = vpop.f32.mrf.mxu0
    %v1409 = vadd.f32 0.0, %v1408
    %v1410 = vpop.f32.mrf.mxu0
    %v1411 = vadd.f32 0.0, %v1410
    %1412 = vmatprep.mubr.f32.mxu0 %v1292
    %1413 = vmatmul.mubr.f32.gmra.mxu0 %v1270
    %v1414 = vpop.f32.mrf.mxu0
    %v1415 = vadd.f32 0.0, %v1414
    %v1416 = vpop.f32.mrf.mxu0
    %v1417 = vadd.f32 0.0, %v1416
    %1418 = vmatprep.mubr.f32.mxu0 %v1294
    %1419 = vmatmul.mubr.f32.gmra.mxu0 %v1271
    %v1420 = vpop.f32.mrf.mxu0
    %v1421 = vadd.f32 0.0, %v1420
    %v1422 = vpop.f32.mrf.mxu0
    %v1423 = vadd.f32 0.0, %v1422
    %1424 = vmatprep.mubr.f32.mxu0 %v1296
    %1425 = vmatmul.mubr.f32.gmra.mxu0 %v1272
    %v1426 = vpop.f32.mrf.mxu0
    %v1427 = vadd.f32 0.0, %v1426
    %v1428 = vpop.f32.mrf.mxu0
    %v1429 = vadd.f32 0.0, %v1428
    %1430 = vmatprep.mubr.f32.mxu0 %v1298
    %1431 = vmatmul.mubr.f32.gmra.mxu0 %v1273
    %v1432 = vpop.f32.mrf.mxu0
    %v1433 = vadd.f32 0.0, %v1432
    %v1434 = vpop.f32.mrf.mxu0
    %v1435 = vadd.f32 0.0, %v1434
    %1436 = vmatprep.mubr.f32.mxu0 %v1300
    %1437 = vmatmul.mubr.f32.gmra.mxu0 %v1274
    %v1438 = vpop.f32.mrf.mxu0
    %v1439 = vadd.f32 0.0, %v1438
    %v1440 = vpop.f32.mrf.mxu0
    %v1441 = vadd.f32 0.0, %v1440
    %1442 = vmatprep.mubr.f32.mxu0 %v1302
    %1443 = vmatmul.mubr.f32.gmra.mxu0 %v1275
    %v1444 = vpop.f32.mrf.mxu0
    %v1445 = vadd.f32 0.0, %v1444
    %v1446 = vpop.f32.mrf.mxu0
    %v1447 = vadd.f32 0.0, %v1446
    %1448 = vmatprep.mubr.f32.mxu0 %v1304
    %1449 = vmatmul.mubr.f32.gmra.mxu0 %v1276
    %v1450 = vpop.f32.mrf.mxu0
    %v1451 = vadd.f32 0.0, %v1450
    %v1452 = vpop.f32.mrf.mxu0
    %v1453 = vadd.f32 0.0, %v1452
    %1454 = vmatprep.mubr.f32.mxu0 %v1306
    %1455 = vmatmul.mubr.f32.gmra.mxu0 %v1277
    %v1456 = vpop.f32.mrf.mxu0
    %v1457 = vadd.f32 0.0, %v1456
    %v1458 = vpop.f32.mrf.mxu0
    %v1459 = vadd.f32 0.0, %v1458
    %1460 = vmatprep.mubr.f32.mxu0 %v1308
    %1461 = vmatmul.mubr.f32.gmra.mxu0 %v1278
    %v1462 = vpop.f32.mrf.mxu0
    %v1463 = vadd.f32 0.0, %v1462
    %v1464 = vpop.f32.mrf.mxu0
    %v1465 = vadd.f32 0.0, %v1464
    %1466 = vmatprep.mubr.f32.mxu0 %v1310
    %1467 = vmatmul.mubr.f32.gmra.mxu0 %v1279
    %v1468 = vpop.f32.mrf.mxu0
    %v1469 = vadd.f32 0.0, %v1468
    %v1470 = vpop.f32.mrf.mxu0
    %v1471 = vadd.f32 0.0, %v1470
    %1472 = vdwg.mxu0
    %1473 = vmatprep.subr.mxu0 0.0
    %1474 = vmatpush1.msra.mxu0 %v198
    %1475 = vmatprep.subr.mxu0 0.0
    %1476 = vmatpush1.msra.mxu0 %v195
    %1477 = vmatprep.subr.mxu0 0.0
    %1478 = vmatpush1.msra.mxu0 %v192
    %1479 = vmatprep.subr.mxu0 0.0
    %1480 = vmatpush1.msra.mxu0 %v189
    %1481 = vmatprep.subr.mxu0 0.0
    %1482 = vmatpush1.msra.mxu0 %v186
    %1483 = vmatprep.subr.mxu0 0.0
    %1484 = vmatpush1.msra.mxu0 %v183
    %1485 = vmatprep.subr.mxu0 0.0
    %1486 = vmatpush1.msra.mxu0 %v180
    %1487 = vmatprep.subr.mxu0 0.0
    %1488 = vmatpush1.msra.mxu0 %v177
    %1489 = vmatprep.subr.mxu0 0.0
    %1490 = vmatpush1.msra.mxu0 %v174
    %1491 = vmatprep.subr.mxu0 0.0
    %1492 = vmatpush1.msra.mxu0 %v171
    %1493 = vmatprep.subr.mxu0 0.0
    %1494 = vmatpush1.msra.mxu0 %v168
    %1495 = vmatprep.subr.mxu0 0.0
    %1496 = vmatpush1.msra.mxu0 %v165
    %1497 = vmatprep.subr.mxu0 0.0
    %1498 = vmatpush1.msra.mxu0 %v162
    %1499 = vmatprep.subr.mxu0 0.0
    %1500 = vmatpush1.msra.mxu0 %v159
    %1501 = vmatprep.subr.mxu0 0.0
    %1502 = vmatpush1.msra.mxu0 %v156
    %1503 = vmatprep.subr.mxu0 0.0
    %1504 = vmatpush1.msra.mxu0 %v153
    %1505 = vmatprep.subr.mxu0 0.0
    %1506 = vmatpush2.msra.mxu0 0.0
    %1507 = vmatprep.subr.mxu0 0.0
    %1508 = vmatpush2.msra.mxu0 0.0
    %1509 = vmatprep.subr.mxu0 0.0
    %1510 = vmatpush2.msra.mxu0 0.0
    %1511 = vmatprep.subr.mxu0 0.0
    %1512 = vmatpush2.msra.mxu0 0.0
    %1513 = vmatprep.subr.mxu0 0.0
    %1514 = vmatpush2.msra.mxu0 0.0
    %1515 = vmatprep.subr.mxu0 0.0
    %1516 = vmatpush2.msra.mxu0 0.0
    %1517 = vmatprep.subr.mxu0 0.0
    %1518 = vmatpush2.msra.mxu0 0.0
    %1519 = vmatprep.subr.mxu0 0.0
    %1520 = vmatpush2.msra.mxu0 0.0
    %1521 = vmatprep.subr.mxu0 0.0
    %1522 = vmatpush2.msra.mxu0 0.0
    %1523 = vmatprep.subr.mxu0 0.0
    %1524 = vmatpush2.msra.mxu0 0.0
    %1525 = vmatprep.subr.mxu0 0.0
    %1526 = vmatpush2.msra.mxu0 0.0
    %1527 = vmatprep.subr.mxu0 0.0
    %1528 = vmatpush2.msra.mxu0 0.0
    %1529 = vmatprep.subr.mxu0 0.0
    %1530 = vmatpush2.msra.mxu0 0.0
    %1531 = vmatprep.subr.mxu0 0.0
    %1532 = vmatpush2.msra.mxu0 0.0
    %1533 = vmatprep.subr.mxu0 0.0
    %1534 = vmatpush2.msra.mxu0 %v676
    %1535 = vmatprep.subr.mxu0 0.0
    %1536 = vmatpush2.msra.mxu0 %v201
    %1537 = vmatprep.mubr.f32.mxu0 %v1280
    %1538 = vmatmul.mubr.f32.gmra.mxu0 %v1264
    %v1539 = vpop.f32.mrf.mxu0
    %v1540 = vadd.f32 0.0, %v1539
    %v1541 = vpop.f32.mrf.mxu0
    %1542 = vmatprep.mubr.f32.mxu0 %v1282
    %1543 = vmatmul.mubr.f32.gmra.mxu0 %v1265
    %v1544 = vpop.f32.mrf.mxu0
    %v1545 = vadd.f32 0.0, %v1544
    %v1546 = vpop.f32.mrf.mxu0
    %1547 = vmatprep.mubr.f32.mxu0 %v1284
    %1548 = vmatmul.mubr.f32.gmra.mxu0 %v1266
    %v1549 = vpop.f32.mrf.mxu0
    %v1550 = vadd.f32 0.0, %v1549
    %v1551 = vpop.f32.mrf.mxu0
    %1552 = vmatprep.mubr.f32.mxu0 %v1286
    %1553 = vmatmul.mubr.f32.gmra.mxu0 %v1267
    %v1554 = vpop.f32.mrf.mxu0
    %v1555 = vadd.f32 0.0, %v1554
    %v1556 = vpop.f32.mrf.mxu0
    %1557 = vmatprep.mubr.f32.mxu0 %v1288
    %1558 = vmatmul.mubr.f32.gmra.mxu0 %v1268
    %v1559 = vpop.f32.mrf.mxu0
    %v1560 = vadd.f32 0.0, %v1559
    %v1561 = vpop.f32.mrf.mxu0
    %1562 = vmatprep.mubr.f32.mxu0 %v1290
    %1563 = vmatmul.mubr.f32.gmra.mxu0 %v1269
    %v1564 = vpop.f32.mrf.mxu0
    %v1565 = vadd.f32 0.0, %v1564
    %v1566 = vpop.f32.mrf.mxu0
    %1567 = vmatprep.mubr.f32.mxu0 %v1292
    %1568 = vmatmul.mubr.f32.gmra.mxu0 %v1270
    %v1569 = vpop.f32.mrf.mxu0
    %v1570 = vadd.f32 0.0, %v1569
    %v1571 = vpop.f32.mrf.mxu0
    %1572 = vmatprep.mubr.f32.mxu0 %v1294
    %1573 = vmatmul.mubr.f32.gmra.mxu0 %v1271
    %v1574 = vpop.f32.mrf.mxu0
    %v1575 = vadd.f32 0.0, %v1574
    %v1576 = vpop.f32.mrf.mxu0
    %1577 = vmatprep.mubr.f32.mxu0 %v1296
    %1578 = vmatmul.mubr.f32.gmra.mxu0 %v1272
    %v1579 = vpop.f32.mrf.mxu0
    %v1580 = vadd.f32 0.0, %v1579
    %v1581 = vpop.f32.mrf.mxu0
    %1582 = vmatprep.mubr.f32.mxu0 %v1298
    %1583 = vmatmul.mubr.f32.gmra.mxu0 %v1273
    %v1584 = vpop.f32.mrf.mxu0
    %v1585 = vadd.f32 0.0, %v1584
    %v1586 = vpop.f32.mrf.mxu0
    %1587 = vmatprep.mubr.f32.mxu0 %v1300
    %1588 = vmatmul.mubr.f32.gmra.mxu0 %v1274
    %v1589 = vpop.f32.mrf.mxu0
    %v1590 = vadd.f32 0.0, %v1589
    %v1591 = vpop.f32.mrf.mxu0
    %1592 = vmatprep.mubr.f32.mxu0 %v1302
    %1593 = vmatmul.mubr.f32.gmra.mxu0 %v1275
    %v1594 = vpop.f32.mrf.mxu0
    %v1595 = vadd.f32 0.0, %v1594
    %v1596 = vpop.f32.mrf.mxu0
    %1597 = vmatprep.mubr.f32.mxu0 %v1304
    %1598 = vmatmul.mubr.f32.gmra.mxu0 %v1276
    %v1599 = vpop.f32.mrf.mxu0
    %v1600 = vadd.f32 0.0, %v1599
    %v1601 = vpop.f32.mrf.mxu0
    %1602 = vmatprep.mubr.f32.mxu0 %v1306
    %1603 = vmatmul.mubr.f32.gmra.mxu0 %v1277
    %v1604 = vpop.f32.mrf.mxu0
    %v1605 = vadd.f32 0.0, %v1604
    %v1606 = vpop.f32.mrf.mxu0
    %1607 = vmatprep.mubr.f32.mxu0 %v1308
    %1608 = vmatmul.mubr.f32.gmra.mxu0 %v1278
    %v1609 = vpop.f32.mrf.mxu0
    %v1610 = vadd.f32 0.0, %v1609
    %v1611 = vpop.f32.mrf.mxu0
    %1612 = vmatprep.mubr.f32.mxu0 %v1310
    %1613 = vmatmul.mubr.f32.gmra.mxu0 %v1279
    %v1614 = vpop.f32.mrf.mxu0
    %v1615 = vadd.f32 0.0, %v1614
    %v1616 = vpop.f32.mrf.mxu0
    %1617 = vdwg.mxu0
    %v1618 = vmax.f32 %v745, %v1379
    %v1619 = vmax.f32 %v747, %v1381
    %v1620 = vmax.f32 %v906, %v1540
    %v1621 = vmax.f32 %v751, %v1385
    %v1622 = vmax.f32 %v753, %v1387
    %v1623 = vmax.f32 %v911, %v1545
    %v1624 = vmax.f32 %v757, %v1391
    %v1625 = vmax.f32 %v759, %v1393
    %v1626 = vmax.f32 %v916, %v1550
    %v1627 = vmax.f32 %v763, %v1397
    %v1628 = vmax.f32 %v765, %v1399
    %v1629 = vmax.f32 %v921, %v1555
    %v1630 = vmax.f32 %v769, %v1403
    %v1631 = vmax.f32 %v771, %v1405
    %v1632 = vmax.f32 %v926, %v1560
    %v1633 = vmax.f32 %v775, %v1409
    %v1634 = vmax.f32 %v777, %v1411
    %v1635 = vmax.f32 %v931, %v1565
    %v1636 = vmax.f32 %v781, %v1415
    %v1637 = vmax.f32 %v783, %v1417
    %v1638 = vmax.f32 %v936, %v1570
    %v1639 = vmax.f32 %v787, %v1421
    %v1640 = vmax.f32 %v789, %v1423
    %v1641 = vmax.f32 %v941, %v1575
    %v1642 = vmax.f32 %v793, %v1427
    %v1643 = vmax.f32 %v795, %v1429
    %v1644 = vmax.f32 %v946, %v1580
    %v1645 = vmax.f32 %v799, %v1433
    %v1646 = vmax.f32 %v801, %v1435
    %v1647 = vmax.f32 %v951, %v1585
    %v1648 = vmax.f32 %v805, %v1439
    %v1649 = vmax.f32 %v807, %v1441
    %v1650 = vmax.f32 %v956, %v1590
    %v1651 = vmax.f32 %v811, %v1445
    %v1652 = vmax.f32 %v813, %v1447
    %v1653 = vmax.f32 %v961, %v1595
    %v1654 = vmax.f32 %v817, %v1451
    %v1655 = vmax.f32 %v819, %v1453
    %v1656 = vmax.f32 %v966, %v1600
    %v1657 = vmax.f32 %v823, %v1457
    %v1658 = vmax.f32 %v825, %v1459
    %v1659 = vmax.f32 %v971, %v1605
    %v1660 = vmax.f32 %v829, %v1463
    %v1661 = vmax.f32 %v831, %v1465
    %v1662 = vmax.f32 %v976, %v1610
    %v1663 = vmax.f32 %v835, %v1469
    %v1664 = vmax.f32 %v837, %v1471
    %v1665 = vmax.f32 %v981, %v1615
    %v1666 = vld [vmem:[#allocation5] sm:$0x7]
    %v1668 = vlaneseq
    %v1669 = vshrl.u32 %v1668, 7
    %v1670 = vsub.s32 0, %v1669
    %v1671 = vrot.slane %v1666, %v1670
    %v1672 = vlaneseq
    %v1673 = vshrl.u32 %v1672, 7
    %v1674 = vsub.s32 1, %v1673
    %v1675 = vrot.slane %v1666, %v1674
    %v1676 = vlaneseq
    %v1677 = vshrl.u32 %v1676, 7
    %v1678 = vsub.s32 2, %v1677
    %v1679 = vrot.slane %v1666, %v1678
    %v1683 = vadd.f32 %v1618, %v1671
    %v1684 = vadd.f32 %v1619, %v1675
    %v1685 = vadd.f32 %v1620, %v1679
    %v1686 = vadd.f32 %v1621, %v1671
    %v1687 = vadd.f32 %v1622, %v1675
    %v1688 = vadd.f32 %v1623, %v1679
    %v1689 = vadd.f32 %v1624, %v1671
    %v1690 = vadd.f32 %v1625, %v1675
    %v1691 = vadd.f32 %v1626, %v1679
    %v1692 = vadd.f32 %v1627, %v1671
    %v1693 = vadd.f32 %v1628, %v1675
    %v1694 = vadd.f32 %v1629, %v1679
    %v1695 = vadd.f32 %v1630, %v1671
    %v1696 = vadd.f32 %v1631, %v1675
    %v1697 = vadd.f32 %v1632, %v1679
    %v1698 = vadd.f32 %v1633, %v1671
    %v1699 = vadd.f32 %v1634, %v1675
    %v1700 = vadd.f32 %v1635, %v1679
    %v1701 = vadd.f32 %v1636, %v1671
    %v1702 = vadd.f32 %v1637, %v1675
    %v1703 = vadd.f32 %v1638, %v1679
    %v1704 = vadd.f32 %v1639, %v1671
    %v1705 = vadd.f32 %v1640, %v1675
    %v1706 = vadd.f32 %v1641, %v1679
    %v1707 = vadd.f32 %v1642, %v1671
    %v1708 = vadd.f32 %v1643, %v1675
    %v1709 = vadd.f32 %v1644, %v1679
    %v1710 = vadd.f32 %v1645, %v1671
    %v1711 = vadd.f32 %v1646, %v1675
    %v1712 = vadd.f32 %v1647, %v1679
    %v1713 = vadd.f32 %v1648, %v1671
    %v1714 = vadd.f32 %v1649, %v1675
    %v1715 = vadd.f32 %v1650, %v1679
    %v1716 = vadd.f32 %v1651, %v1671
    %v1717 = vadd.f32 %v1652, %v1675
    %v1718 = vadd.f32 %v1653, %v1679
    %v1719 = vadd.f32 %v1654, %v1671
    %v1720 = vadd.f32 %v1655, %v1675
    %v1721 = vadd.f32 %v1656, %v1679
    %v1722 = vadd.f32 %v1657, %v1671
    %v1723 = vadd.f32 %v1658, %v1675
    %v1724 = vadd.f32 %v1659, %v1679
    %v1725 = vadd.f32 %v1660, %v1671
    %v1726 = vadd.f32 %v1661, %v1675
    %v1727 = vadd.f32 %v1662, %v1679
    %v1728 = vadd.f32 %v1663, %v1671
    %v1729 = vadd.f32 %v1664, %v1675
    %v1730 = vadd.f32 %v1665, %v1679
    %1779 = vrot.lane.b32.xlu0 %v1683, 112
    %v1780 = vpop.permute.xlu0 %1779
    %1781 = vrot.lane.b32.xlu0 %v1684, 112
    %v1782 = vpop.permute.xlu0 %1781
    %1783 = vrot.lane.b32.xlu0 %v1685, 112
    %v1784 = vpop.permute.xlu0 %1783
    %1785 = vrot.lane.b32.xlu0 %v1686, 112
    %v1786 = vpop.permute.xlu0 %1785
    %1787 = vrot.lane.b32.xlu0 %v1687, 112
    %v1788 = vpop.permute.xlu0 %1787
    %1789 = vrot.lane.b32.xlu0 %v1688, 112
    %v1790 = vpop.permute.xlu0 %1789
    %1791 = vrot.lane.b32.xlu0 %v1689, 112
    %v1792 = vpop.permute.xlu0 %1791
    %1793 = vrot.lane.b32.xlu0 %v1690, 112
    %v1794 = vpop.permute.xlu0 %1793
    %1795 = vrot.lane.b32.xlu0 %v1691, 112
    %v1796 = vpop.permute.xlu0 %1795
    %1797 = vrot.lane.b32.xlu0 %v1692, 112
    %v1798 = vpop.permute.xlu0 %1797
    %1799 = vrot.lane.b32.xlu0 %v1693, 112
    %v1800 = vpop.permute.xlu0 %1799
    %1801 = vrot.lane.b32.xlu0 %v1694, 112
    %v1802 = vpop.permute.xlu0 %1801
    %1803 = vrot.lane.b32.xlu0 %v1695, 112
    %v1804 = vpop.permute.xlu0 %1803
    %1805 = vrot.lane.b32.xlu0 %v1696, 112
    %v1806 = vpop.permute.xlu0 %1805
    %1807 = vrot.lane.b32.xlu0 %v1697, 112
    %v1808 = vpop.permute.xlu0 %1807
    %1809 = vrot.lane.b32.xlu0 %v1698, 112
    %v1810 = vpop.permute.xlu0 %1809
    %1811 = vrot.lane.b32.xlu0 %v1699, 112
    %v1812 = vpop.permute.xlu0 %1811
    %1813 = vrot.lane.b32.xlu0 %v1700, 112
    %v1814 = vpop.permute.xlu0 %1813
    %1815 = vrot.lane.b32.xlu0 %v1701, 112
    %v1816 = vpop.permute.xlu0 %1815
    %1817 = vrot.lane.b32.xlu0 %v1702, 112
    %v1818 = vpop.permute.xlu0 %1817
    %1819 = vrot.lane.b32.xlu0 %v1703, 112
    %v1820 = vpop.permute.xlu0 %1819
    %1821 = vrot.lane.b32.xlu0 %v1704, 112
    %v1822 = vpop.permute.xlu0 %1821
    %1823 = vrot.lane.b32.xlu0 %v1705, 112
    %v1824 = vpop.permute.xlu0 %1823
    %1825 = vrot.lane.b32.xlu0 %v1706, 112
    %v1826 = vpop.permute.xlu0 %1825
    %1827 = vrot.lane.b32.xlu0 %v1707, 112
    %v1828 = vpop.permute.xlu0 %1827
    %1829 = vrot.lane.b32.xlu0 %v1708, 112
    %v1830 = vpop.permute.xlu0 %1829
    %1831 = vrot.lane.b32.xlu0 %v1709, 112
    %v1832 = vpop.permute.xlu0 %1831
    %1833 = vrot.lane.b32.xlu0 %v1710, 112
    %v1834 = vpop.permute.xlu0 %1833
    %1835 = vrot.lane.b32.xlu0 %v1711, 112
    %v1836 = vpop.permute.xlu0 %1835
    %1837 = vrot.lane.b32.xlu0 %v1712, 112
    %v1838 = vpop.permute.xlu0 %1837
    %1839 = vrot.lane.b32.xlu0 %v1713, 112
    %v1840 = vpop.permute.xlu0 %1839
    %1841 = vrot.lane.b32.xlu0 %v1714, 112
    %v1842 = vpop.permute.xlu0 %1841
    %1843 = vrot.lane.b32.xlu0 %v1715, 112
    %v1844 = vpop.permute.xlu0 %1843
    %1845 = vrot.lane.b32.xlu0 %v1716, 112
    %v1846 = vpop.permute.xlu0 %1845
    %1847 = vrot.lane.b32.xlu0 %v1717, 112
    %v1848 = vpop.permute.xlu0 %1847
    %1849 = vrot.lane.b32.xlu0 %v1718, 112
    %v1850 = vpop.permute.xlu0 %1849
    %1851 = vrot.lane.b32.xlu0 %v1719, 112
    %v1852 = vpop.permute.xlu0 %1851
    %1853 = vrot.lane.b32.xlu0 %v1720, 112
    %v1854 = vpop.permute.xlu0 %1853
    %1855 = vrot.lane.b32.xlu0 %v1721, 112
    %v1856 = vpop.permute.xlu0 %1855
    %1857 = vrot.lane.b32.xlu0 %v1722, 112
    %v1858 = vpop.permute.xlu0 %1857
    %1859 = vrot.lane.b32.xlu0 %v1723, 112
    %v1860 = vpop.permute.xlu0 %1859
    %1861 = vrot.lane.b32.xlu0 %v1724, 112
    %v1862 = vpop.permute.xlu0 %1861
    %1863 = vrot.lane.b32.xlu0 %v1725, 112
    %v1864 = vpop.permute.xlu0 %1863
    %1865 = vrot.lane.b32.xlu0 %v1726, 112
    %v1866 = vpop.permute.xlu0 %1865
    %1867 = vrot.lane.b32.xlu0 %v1727, 112
    %v1868 = vpop.permute.xlu0 %1867
    %1869 = vrot.lane.b32.xlu0 %v1728, 112
    %v1870 = vpop.permute.xlu0 %1869
    %1871 = vrot.lane.b32.xlu0 %v1729, 112
    %v1872 = vpop.permute.xlu0 %1871
    %1873 = vrot.lane.b32.xlu0 %v1730, 112
    %v1874 = vpop.permute.xlu0 %1873
    %v1875 = vsel %vm618, %v1780, %v1782
    %v1876 = vsel %vm618, %v1782, %v1784
    %v1877 = vsel %vm618, %v1786, %v1788
    %v1878 = vsel %vm618, %v1788, %v1790
    %v1879 = vsel %vm618, %v1792, %v1794
    %v1880 = vsel %vm618, %v1794, %v1796
    %v1881 = vsel %vm618, %v1798, %v1800
    %v1882 = vsel %vm618, %v1800, %v1802
    %v1883 = vsel %vm618, %v1804, %v1806
    %v1884 = vsel %vm618, %v1806, %v1808
    %v1885 = vsel %vm618, %v1810, %v1812
    %v1886 = vsel %vm618, %v1812, %v1814
    %v1887 = vsel %vm618, %v1816, %v1818
    %v1888 = vsel %vm618, %v1818, %v1820
    %v1889 = vsel %vm618, %v1822, %v1824
    %v1890 = vsel %vm618, %v1824, %v1826
    %v1891 = vsel %vm618, %v1828, %v1830
    %v1892 = vsel %vm618, %v1830, %v1832
    %v1893 = vsel %vm618, %v1834, %v1836
    %v1894 = vsel %vm618, %v1836, %v1838
    %v1895 = vsel %vm618, %v1840, %v1842
    %v1896 = vsel %vm618, %v1842, %v1844
    %v1897 = vsel %vm618, %v1846, %v1848
    %v1898 = vsel %vm618, %v1848, %v1850
    %v1899 = vsel %vm618, %v1852, %v1854
    %v1900 = vsel %vm618, %v1854, %v1856
    %v1901 = vsel %vm618, %v1858, %v1860
    %v1902 = vsel %vm618, %v1860, %v1862
    %v1903 = vsel %vm618, %v1864, %v1866
    %v1904 = vsel %vm618, %v1866, %v1868
    %v1905 = vsel %vm618, %v1870, %v1872
    %v1906 = vsel %vm618, %v1872, %v1874
    %v1971 = vsel %vm618, %v1784, %v1780
    %v1972 = vsel %vm618, %v1790, %v1786
    %v1973 = vsel %vm618, %v1796, %v1792
    %v1974 = vsel %vm618, %v1802, %v1798
    %v1975 = vsel %vm618, %v1808, %v1804
    %v1976 = vsel %vm618, %v1814, %v1810
    %v1977 = vsel %vm618, %v1820, %v1816
    %v1978 = vsel %vm618, %v1826, %v1822
    %v1979 = vsel %vm618, %v1832, %v1828
    %v1980 = vsel %vm618, %v1838, %v1834
    %v1981 = vsel %vm618, %v1844, %v1840
    %v1982 = vsel %vm618, %v1850, %v1846
    %v1983 = vsel %vm618, %v1856, %v1852
    %v1984 = vsel %vm618, %v1862, %v1858
    %v1985 = vsel %vm618, %v1868, %v1864
    %v1986 = vsel %vm618, %v1874, %v1870
    %v1987 = vmax.f32 %v1683, %v1875
    %v1988 = vmax.f32 %v1684, %v1876
    %v1989 = vmax.f32 %v1685, %v1971
    %v1990 = vmax.f32 %v1686, %v1877
    %v1991 = vmax.f32 %v1687, %v1878
    %v1992 = vmax.f32 %v1688, %v1972
    %v1993 = vmax.f32 %v1689, %v1879
    %v1994 = vmax.f32 %v1690, %v1880
    %v1995 = vmax.f32 %v1691, %v1973
    %v1996 = vmax.f32 %v1692, %v1881
    %v1997 = vmax.f32 %v1693, %v1882
    %v1998 = vmax.f32 %v1694, %v1974
    %v1999 = vmax.f32 %v1695, %v1883
    %v2000 = vmax.f32 %v1696, %v1884
    %v2001 = vmax.f32 %v1697, %v1975
    %v2002 = vmax.f32 %v1698, %v1885
    %v2003 = vmax.f32 %v1699, %v1886
    %v2004 = vmax.f32 %v1700, %v1976
    %v2005 = vmax.f32 %v1701, %v1887
    %v2006 = vmax.f32 %v1702, %v1888
    %v2007 = vmax.f32 %v1703, %v1977
    %v2008 = vmax.f32 %v1704, %v1889
    %v2009 = vmax.f32 %v1705, %v1890
    %v2010 = vmax.f32 %v1706, %v1978
    %v2011 = vmax.f32 %v1707, %v1891
    %v2012 = vmax.f32 %v1708, %v1892
    %v2013 = vmax.f32 %v1709, %v1979
    %v2014 = vmax.f32 %v1710, %v1893
    %v2015 = vmax.f32 %v1711, %v1894
    %v2016 = vmax.f32 %v1712, %v1980
    %v2017 = vmax.f32 %v1713, %v1895
    %v2018 = vmax.f32 %v1714, %v1896
    %v2019 = vmax.f32 %v1715, %v1981
    %v2020 = vmax.f32 %v1716, %v1897
    %v2021 = vmax.f32 %v1717, %v1898
    %v2022 = vmax.f32 %v1718, %v1982
    %v2023 = vmax.f32 %v1719, %v1899
    %v2024 = vmax.f32 %v1720, %v1900
    %v2025 = vmax.f32 %v1721, %v1983
    %v2026 = vmax.f32 %v1722, %v1901
    %v2027 = vmax.f32 %v1723, %v1902
    %v2028 = vmax.f32 %v1724, %v1984
    %v2029 = vmax.f32 %v1725, %v1903
    %v2030 = vmax.f32 %v1726, %v1904
    %v2031 = vmax.f32 %v1727, %v1985
    %v2032 = vmax.f32 %v1728, %v1905
    %v2033 = vmax.f32 %v1729, %v1906
    %v2034 = vmax.f32 %v1730, %v1986
    %v2035 = vmax.f32 %v1987, 0.0
    %v2036 = vmax.f32 %v1988, 0.0
    %v2037 = vmax.f32 %v1989, 0.0
    %v2038 = vmax.f32 %v1990, 0.0
    %v2039 = vmax.f32 %v1991, 0.0
    %v2040 = vmax.f32 %v1992, 0.0
    %v2041 = vmax.f32 %v1993, 0.0
    %v2042 = vmax.f32 %v1994, 0.0
    %v2043 = vmax.f32 %v1995, 0.0
    %v2044 = vmax.f32 %v1996, 0.0
    %v2045 = vmax.f32 %v1997, 0.0
    %v2046 = vmax.f32 %v1998, 0.0
    %v2047 = vmax.f32 %v1999, 0.0
    %v2048 = vmax.f32 %v2000, 0.0
    %v2049 = vmax.f32 %v2001, 0.0
    %v2050 = vmax.f32 %v2002, 0.0
    %v2051 = vmax.f32 %v2003, 0.0
    %v2052 = vmax.f32 %v2004, 0.0
    %v2053 = vmax.f32 %v2005, 0.0
    %v2054 = vmax.f32 %v2006, 0.0
    %v2055 = vmax.f32 %v2007, 0.0
    %v2056 = vmax.f32 %v2008, 0.0
    %v2057 = vmax.f32 %v2009, 0.0
    %v2058 = vmax.f32 %v2010, 0.0
    %v2059 = vmax.f32 %v2011, 0.0
    %v2060 = vmax.f32 %v2012, 0.0
    %v2061 = vmax.f32 %v2013, 0.0
    %v2062 = vmax.f32 %v2014, 0.0
    %v2063 = vmax.f32 %v2015, 0.0
    %v2064 = vmax.f32 %v2016, 0.0
    %v2065 = vmax.f32 %v2017, 0.0
    %v2066 = vmax.f32 %v2018, 0.0
    %v2067 = vmax.f32 %v2019, 0.0
    %v2068 = vmax.f32 %v2020, 0.0
    %v2069 = vmax.f32 %v2021, 0.0
    %v2070 = vmax.f32 %v2022, 0.0
    %v2071 = vmax.f32 %v2023, 0.0
    %v2072 = vmax.f32 %v2024, 0.0
    %v2073 = vmax.f32 %v2025, 0.0
    %v2074 = vmax.f32 %v2026, 0.0
    %v2075 = vmax.f32 %v2027, 0.0
    %v2076 = vmax.f32 %v2028, 0.0
    %v2077 = vmax.f32 %v2029, 0.0
    %v2078 = vmax.f32 %v2030, 0.0
    %v2079 = vmax.f32 %v2031, 0.0
    %v2080 = vmax.f32 %v2032, 0.0
    %v2081 = vmax.f32 %v2033, 0.0
    %v2082 = vmax.f32 %v2034, 0.0
    %v2131 = vrot.slane %v2035, 1
    %v2132 = vrot.slane %v2038, 1
    %v2133 = vsel %vm229, %v2131, %v2132
    %v2134 = vrot.slane %v2036, 1
    %v2135 = vrot.slane %v2039, 1
    %v2136 = vsel %vm229, %v2134, %v2135
    %v2137 = vrot.slane %v2037, 1
    %v2138 = vrot.slane %v2040, 1
    %v2139 = vsel %vm229, %v2137, %v2138
    %v2140 = vrot.slane %v2041, 1
    %v2141 = vrot.slane %v2044, 1
    %v2142 = vsel %vm229, %v2140, %v2141
    %v2143 = vrot.slane %v2042, 1
    %v2144 = vrot.slane %v2045, 1
    %v2145 = vsel %vm229, %v2143, %v2144
    %v2146 = vrot.slane %v2043, 1
    %v2147 = vrot.slane %v2046, 1
    %v2148 = vsel %vm229, %v2146, %v2147
    %v2149 = vrot.slane %v2047, 1
    %v2150 = vrot.slane %v2050, 1
    %v2151 = vsel %vm229, %v2149, %v2150
    %v2152 = vrot.slane %v2048, 1
    %v2153 = vrot.slane %v2051, 1
    %v2154 = vsel %vm229, %v2152, %v2153
    %v2155 = vrot.slane %v2049, 1
    %v2156 = vrot.slane %v2052, 1
    %v2157 = vsel %vm229, %v2155, %v2156
    %v2158 = vrot.slane %v2053, 1
    %v2159 = vrot.slane %v2056, 1
    %v2160 = vsel %vm229, %v2158, %v2159
    %v2161 = vrot.slane %v2054, 1
    %v2162 = vrot.slane %v2057, 1
    %v2163 = vsel %vm229, %v2161, %v2162
    %v2164 = vrot.slane %v2055, 1
    %v2165 = vrot.slane %v2058, 1
    %v2166 = vsel %vm229, %v2164, %v2165
    %v2167 = vrot.slane %v2059, 1
    %v2168 = vrot.slane %v2062, 1
    %v2169 = vsel %vm229, %v2167, %v2168
    %v2170 = vrot.slane %v2060, 1
    %v2171 = vrot.slane %v2063, 1
    %v2172 = vsel %vm229, %v2170, %v2171
    %v2173 = vrot.slane %v2061, 1
    %v2174 = vrot.slane %v2064, 1
    %v2175 = vsel %vm229, %v2173, %v2174
    %v2176 = vrot.slane %v2065, 1
    %v2177 = vrot.slane %v2068, 1
    %v2178 = vsel %vm229, %v2176, %v2177
    %v2179 = vrot.slane %v2066, 1
    %v2180 = vrot.slane %v2069, 1
    %v2181 = vsel %vm229, %v2179, %v2180
    %v2182 = vrot.slane %v2067, 1
    %v2183 = vrot.slane %v2070, 1
    %v2184 = vsel %vm229, %v2182, %v2183
    %v2185 = vrot.slane %v2071, 1
    %v2186 = vrot.slane %v2074, 1
    %v2187 = vsel %vm229, %v2185, %v2186
    %v2188 = vrot.slane %v2072, 1
    %v2189 = vrot.slane %v2075, 1
    %v2190 = vsel %vm229, %v2188, %v2189
    %v2191 = vrot.slane %v2073, 1
    %v2192 = vrot.slane %v2076, 1
    %v2193 = vsel %vm229, %v2191, %v2192
    %v2194 = vrot.slane %v2077, 1
    %v2195 = vrot.slane %v2080, 1
    %v2196 = vsel %vm229, %v2194, %v2195
    %v2197 = vrot.slane %v2078, 1
    %v2198 = vrot.slane %v2081, 1
    %v2199 = vsel %vm229, %v2197, %v2198
    %v2200 = vrot.slane %v2079, 1
    %v2201 = vrot.slane %v2082, 1
    %v2202 = vsel %vm229, %v2200, %v2201
    %v2227 = vrot.slane %v2035, 2
    %v2228 = vrot.slane %v2038, 2
    %v2229 = vsel %vm334, %v2227, %v2228
    %v2230 = vrot.slane %v2036, 2
    %v2231 = vrot.slane %v2039, 2
    %v2232 = vsel %vm334, %v2230, %v2231
    %v2233 = vrot.slane %v2037, 2
    %v2234 = vrot.slane %v2040, 2
    %v2235 = vsel %vm334, %v2233, %v2234
    %v2236 = vrot.slane %v2041, 2
    %v2237 = vrot.slane %v2044, 2
    %v2238 = vsel %vm334, %v2236, %v2237
    %v2239 = vrot.slane %v2042, 2
    %v2240 = vrot.slane %v2045, 2
    %v2241 = vsel %vm334, %v2239, %v2240
    %v2242 = vrot.slane %v2043, 2
    %v2243 = vrot.slane %v2046, 2
    %v2244 = vsel %vm334, %v2242, %v2243
    %v2245 = vrot.slane %v2047, 2
    %v2246 = vrot.slane %v2050, 2
    %v2247 = vsel %vm334, %v2245, %v2246
    %v2248 = vrot.slane %v2048, 2
    %v2249 = vrot.slane %v2051, 2
    %v2250 = vsel %vm334, %v2248, %v2249
    %v2251 = vrot.slane %v2049, 2
    %v2252 = vrot.slane %v2052, 2
    %v2253 = vsel %vm334, %v2251, %v2252
    %v2254 = vrot.slane %v2053, 2
    %v2255 = vrot.slane %v2056, 2
    %v2256 = vsel %vm334, %v2254, %v2255
    %v2257 = vrot.slane %v2054, 2
    %v2258 = vrot.slane %v2057, 2
    %v2259 = vsel %vm334, %v2257, %v2258
    %v2260 = vrot.slane %v2055, 2
    %v2261 = vrot.slane %v2058, 2
    %v2262 = vsel %vm334, %v2260, %v2261
    %v2263 = vrot.slane %v2059, 2
    %v2264 = vrot.slane %v2062, 2
    %v2265 = vsel %vm334, %v2263, %v2264
    %v2266 = vrot.slane %v2060, 2
    %v2267 = vrot.slane %v2063, 2
    %v2268 = vsel %vm334, %v2266, %v2267
    %v2269 = vrot.slane %v2061, 2
    %v2270 = vrot.slane %v2064, 2
    %v2271 = vsel %vm334, %v2269, %v2270
    %v2272 = vrot.slane %v2065, 2
    %v2273 = vrot.slane %v2068, 2
    %v2274 = vsel %vm334, %v2272, %v2273
    %v2275 = vrot.slane %v2066, 2
    %v2276 = vrot.slane %v2069, 2
    %v2277 = vsel %vm334, %v2275, %v2276
    %v2278 = vrot.slane %v2067, 2
    %v2279 = vrot.slane %v2070, 2
    %v2280 = vsel %vm334, %v2278, %v2279
    %v2281 = vrot.slane %v2071, 2
    %v2282 = vrot.slane %v2074, 2
    %v2283 = vsel %vm334, %v2281, %v2282
    %v2284 = vrot.slane %v2072, 2
    %v2285 = vrot.slane %v2075, 2
    %v2286 = vsel %vm334, %v2284, %v2285
    %v2287 = vrot.slane %v2073, 2
    %v2288 = vrot.slane %v2076, 2
    %v2289 = vsel %vm334, %v2287, %v2288
    %v2290 = vrot.slane %v2077, 2
    %v2291 = vrot.slane %v2080, 2
    %v2292 = vsel %vm334, %v2290, %v2291
    %v2293 = vrot.slane %v2078, 2
    %v2294 = vrot.slane %v2081, 2
    %v2295 = vsel %vm334, %v2293, %v2294
    %v2296 = vrot.slane %v2079, 2
    %v2297 = vrot.slane %v2082, 2
    %v2298 = vsel %vm334, %v2296, %v2297
    %vm2323 = vcmask 1044480
    %v2324 = vrot.slane %v2035, 3
    %v2325 = vrot.slane %v2038, 3
    %v2326 = vsel %vm2323, %v2324, %v2325
    %v2327 = vrot.slane %v2036, 3
    %v2328 = vrot.slane %v2039, 3
    %v2329 = vsel %vm2323, %v2327, %v2328
    %v2330 = vrot.slane %v2037, 3
    %v2331 = vrot.slane %v2040, 3
    %v2332 = vsel %vm2323, %v2330, %v2331
    %v2333 = vrot.slane %v2041, 3
    %v2334 = vrot.slane %v2044, 3
    %v2335 = vsel %vm2323, %v2333, %v2334
    %v2336 = vrot.slane %v2042, 3
    %v2337 = vrot.slane %v2045, 3
    %v2338 = vsel %vm2323, %v2336, %v2337
    %v2339 = vrot.slane %v2043, 3
    %v2340 = vrot.slane %v2046, 3
    %v2341 = vsel %vm2323, %v2339, %v2340
    %v2342 = vrot.slane %v2047, 3
    %v2343 = vrot.slane %v2050, 3
    %v2344 = vsel %vm2323, %v2342, %v2343
    %v2345 = vrot.slane %v2048, 3
    %v2346 = vrot.slane %v2051, 3
    %v2347 = vsel %vm2323, %v2345, %v2346
    %v2348 = vrot.slane %v2049, 3
    %v2349 = vrot.slane %v2052, 3
    %v2350 = vsel %vm2323, %v2348, %v2349
    %v2351 = vrot.slane %v2053, 3
    %v2352 = vrot.slane %v2056, 3
    %v2353 = vsel %vm2323, %v2351, %v2352
    %v2354 = vrot.slane %v2054, 3
    %v2355 = vrot.slane %v2057, 3
    %v2356 = vsel %vm2323, %v2354, %v2355
    %v2357 = vrot.slane %v2055, 3
    %v2358 = vrot.slane %v2058, 3
    %v2359 = vsel %vm2323, %v2357, %v2358
    %v2360 = vrot.slane %v2059, 3
    %v2361 = vrot.slane %v2062, 3
    %v2362 = vsel %vm2323, %v2360, %v2361
    %v2363 = vrot.slane %v2060, 3
    %v2364 = vrot.slane %v2063, 3
    %v2365 = vsel %vm2323, %v2363, %v2364
    %v2366 = vrot.slane %v2061, 3
    %v2367 = vrot.slane %v2064, 3
    %v2368 = vsel %vm2323, %v2366, %v2367
    %v2369 = vrot.slane %v2065, 3
    %v2370 = vrot.slane %v2068, 3
    %v2371 = vsel %vm2323, %v2369, %v2370
    %v2372 = vrot.slane %v2066, 3
    %v2373 = vrot.slane %v2069, 3
    %v2374 = vsel %vm2323, %v2372, %v2373
    %v2375 = vrot.slane %v2067, 3
    %v2376 = vrot.slane %v2070, 3
    %v2377 = vsel %vm2323, %v2375, %v2376
    %v2378 = vrot.slane %v2071, 3
    %v2379 = vrot.slane %v2074, 3
    %v2380 = vsel %vm2323, %v2378, %v2379
    %v2381 = vrot.slane %v2072, 3
    %v2382 = vrot.slane %v2075, 3
    %v2383 = vsel %vm2323, %v2381, %v2382
    %v2384 = vrot.slane %v2073, 3
    %v2385 = vrot.slane %v2076, 3
    %v2386 = vsel %vm2323, %v2384, %v2385
    %v2387 = vrot.slane %v2077, 3
    %v2388 = vrot.slane %v2080, 3
    %v2389 = vsel %vm2323, %v2387, %v2388
    %v2390 = vrot.slane %v2078, 3
    %v2391 = vrot.slane %v2081, 3
    %v2392 = vsel %vm2323, %v2390, %v2391
    %v2393 = vrot.slane %v2079, 3
    %v2394 = vrot.slane %v2082, 3
    %v2395 = vsel %vm2323, %v2393, %v2394
    %v2420 = vrot.slane %v2035, 4
    %v2421 = vrot.slane %v2038, 4
    %v2422 = vsel %vm668, %v2420, %v2421
    %v2423 = vrot.slane %v2036, 4
    %v2424 = vrot.slane %v2039, 4
    %v2425 = vsel %vm668, %v2423, %v2424
    %v2426 = vrot.slane %v2037, 4
    %v2427 = vrot.slane %v2040, 4
    %v2428 = vsel %vm668, %v2426, %v2427
    %v2429 = vrot.slane %v2041, 4
    %v2430 = vrot.slane %v2044, 4
    %v2431 = vsel %vm668, %v2429, %v2430
    %v2432 = vrot.slane %v2042, 4
    %v2433 = vrot.slane %v2045, 4
    %v2434 = vsel %vm668, %v2432, %v2433
    %v2435 = vrot.slane %v2043, 4
    %v2436 = vrot.slane %v2046, 4
    %v2437 = vsel %vm668, %v2435, %v2436
    %v2438 = vrot.slane %v2047, 4
    %v2439 = vrot.slane %v2050, 4
    %v2440 = vsel %vm668, %v2438, %v2439
    %v2441 = vrot.slane %v2048, 4
    %v2442 = vrot.slane %v2051, 4
    %v2443 = vsel %vm668, %v2441, %v2442
    %v2444 = vrot.slane %v2049, 4
    %v2445 = vrot.slane %v2052, 4
    %v2446 = vsel %vm668, %v2444, %v2445
    %v2447 = vrot.slane %v2053, 4
    %v2448 = vrot.slane %v2056, 4
    %v2449 = vsel %vm668, %v2447, %v2448
    %v2450 = vrot.slane %v2054, 4
    %v2451 = vrot.slane %v2057, 4
    %v2452 = vsel %vm668, %v2450, %v2451
    %v2453 = vrot.slane %v2055, 4
    %v2454 = vrot.slane %v2058, 4
    %v2455 = vsel %vm668, %v2453, %v2454
    %v2456 = vrot.slane %v2059, 4
    %v2457 = vrot.slane %v2062, 4
    %v2458 = vsel %vm668, %v2456, %v2457
    %v2459 = vrot.slane %v2060, 4
    %v2460 = vrot.slane %v2063, 4
    %v2461 = vsel %vm668, %v2459, %v2460
    %v2462 = vrot.slane %v2061, 4
    %v2463 = vrot.slane %v2064, 4
    %v2464 = vsel %vm668, %v2462, %v2463
    %v2465 = vrot.slane %v2065, 4
    %v2466 = vrot.slane %v2068, 4
    %v2467 = vsel %vm668, %v2465, %v2466
    %v2468 = vrot.slane %v2066, 4
    %v2469 = vrot.slane %v2069, 4
    %v2470 = vsel %vm668, %v2468, %v2469
    %v2471 = vrot.slane %v2067, 4
    %v2472 = vrot.slane %v2070, 4
    %v2473 = vsel %vm668, %v2471, %v2472
    %v2474 = vrot.slane %v2071, 4
    %v2475 = vrot.slane %v2074, 4
    %v2476 = vsel %vm668, %v2474, %v2475
    %v2477 = vrot.slane %v2072, 4
    %v2478 = vrot.slane %v2075, 4
    %v2479 = vsel %vm668, %v2477, %v2478
    %v2480 = vrot.slane %v2073, 4
    %v2481 = vrot.slane %v2076, 4
    %v2482 = vsel %vm668, %v2480, %v2481
    %v2483 = vrot.slane %v2077, 4
    %v2484 = vrot.slane %v2080, 4
    %v2485 = vsel %vm668, %v2483, %v2484
    %v2486 = vrot.slane %v2078, 4
    %v2487 = vrot.slane %v2081, 4
    %v2488 = vsel %vm668, %v2486, %v2487
    %v2489 = vrot.slane %v2079, 4
    %v2490 = vrot.slane %v2082, 4
    %v2491 = vsel %vm668, %v2489, %v2490
    %v2516 = vld [vmem:[#allocation7] sm:$0xff]
    %v2517 = vld [vmem:[#allocation7 + $0x8] sm:$0xff]
    %v2518 = vld [vmem:[#allocation7 + $0x10] sm:$0xff]
    %v2519 = vld [vmem:[#allocation7 + $0x18] sm:$0xff]
    %v2520 = vld [vmem:[#allocation7 + $0x20] sm:$0xff]
    %v2521 = vld [vmem:[#allocation7 + $0x28] sm:$0xff]
    %v2522 = vld [vmem:[#allocation7 + $0x30] sm:$0xff]
    %v2523 = vld [vmem:[#allocation7 + $0x38] sm:$0xff]
    %v2524 = vld [vmem:[#allocation7 + $0x40] sm:$0xff]
    %v2525 = vld [vmem:[#allocation7 + $0x48] sm:$0xff]
    %v2526 = vld [vmem:[#allocation7 + $0x50] sm:$0xff]
    %v2527 = vld [vmem:[#allocation7 + $0x58] sm:$0xff]
    %v2528 = vld [vmem:[#allocation7 + $0x60] sm:$0xff]
    %v2529 = vld [vmem:[#allocation7 + $0x68] sm:$0xff]
    %v2530 = vld [vmem:[#allocation7 + $0x70] sm:$0xff]
    %v2531 = vld [vmem:[#allocation7 + $0x78] sm:$0xff]
    %v2532 = vld [vmem:[#allocation7 + $0x80] sm:$0xff]
    %v2533 = vld [vmem:[#allocation7 + $0x88] sm:$0xff]
    %v2534 = vld [vmem:[#allocation7 + $0x90] sm:$0xff]
    %v2535 = vld [vmem:[#allocation7 + $0x98] sm:$0xff]
    %v2536 = vld [vmem:[#allocation7 + $0xa0] sm:$0xff]
    %v2537 = vld [vmem:[#allocation7 + $0xa8] sm:$0xff]
    %v2538 = vld [vmem:[#allocation7 + $0xb0] sm:$0xff]
    %v2539 = vld [vmem:[#allocation7 + $0xb8] sm:$0xff]
    %v2540 = vld [vmem:[#allocation7 + $0xc0] sm:$0xff]
    %v2541 = vld [vmem:[#allocation7 + $0xc8] sm:$0xff]
    %v2542 = vld [vmem:[#allocation7 + $0xd0] sm:$0xff]
    %v2543 = vld [vmem:[#allocation7 + $0xd8] sm:$0xff]
    %v2544 = vld [vmem:[#allocation7 + $0xe0] sm:$0xff]
    %v2545 = vld [vmem:[#allocation7 + $0xe8] sm:$0xff]
    %v2546 = vld [vmem:[#allocation7 + $0xf0] sm:$0xff]
    %v2547 = vld [vmem:[#allocation7 + $0xf8] sm:$0xff]
    %v2548 = vld [vmem:[#allocation7 + $0x100] sm:$0xff]
    %v2549 = vld [vmem:[#allocation7 + $0x108] sm:$0xff]
    %v2550 = vld [vmem:[#allocation7 + $0x110] sm:$0xff]
    %v2551 = vld [vmem:[#allocation7 + $0x118] sm:$0xff]
    %v2552 = vld [vmem:[#allocation7 + $0x120] sm:$0xff]
    %v2553 = vld [vmem:[#allocation7 + $0x128] sm:$0xff]
    %v2554 = vld [vmem:[#allocation7 + $0x130] sm:$0xff]
    %v2555 = vld [vmem:[#allocation7 + $0x138] sm:$0xff]
    %v2556 = vld [vmem:[#allocation7 + $0x140] sm:$0xff]
    %v2557 = vld [vmem:[#allocation7 + $0x148] sm:$0xff]
    %v2558 = vld [vmem:[#allocation7 + $0x150] sm:$0xff]
    %v2559 = vld [vmem:[#allocation7 + $0x158] sm:$0xff]
    %v2560 = vld [vmem:[#allocation7 + $0x160] sm:$0xff]
    %v2561 = vld [vmem:[#allocation7 + $0x168] sm:$0xff]
    %v2562 = vld [vmem:[#allocation7 + $0x170] sm:$0xff]
    %v2563 = vld [vmem:[#allocation7 + $0x178] sm:$0xff]
    %v2564 = vld [vmem:[#allocation7 + $0x180] sm:$0xff]
    %v2565 = vld [vmem:[#allocation7 + $0x188] sm:$0xff]
    %v2566 = vld [vmem:[#allocation7 + $0x190] sm:$0xff]
    %v2567 = vld [vmem:[#allocation7 + $0x198] sm:$0xff]
    %v2568 = vld [vmem:[#allocation7 + $0x1a0] sm:$0xff]
    %v2569 = vld [vmem:[#allocation7 + $0x1a8] sm:$0xff]
    %v2570 = vld [vmem:[#allocation7 + $0x1b0] sm:$0xff]
    %v2571 = vld [vmem:[#allocation7 + $0x1b8] sm:$0xff]
    %v2572 = vld [vmem:[#allocation7 + $0x1c0] sm:$0xff]
    %v2573 = vld [vmem:[#allocation7 + $0x1c8] sm:$0xff]
    %v2574 = vld [vmem:[#allocation7 + $0x1d0] sm:$0xff]
    %v2575 = vld [vmem:[#allocation7 + $0x1d8] sm:$0xff]
    %v2576 = vld [vmem:[#allocation7 + $0x1e0] sm:$0xff]
    %v2577 = vld [vmem:[#allocation7 + $0x1e8] sm:$0xff]
    %v2578 = vld [vmem:[#allocation7 + $0x1f0] sm:$0xff]
    %v2579 = vld [vmem:[#allocation7 + $0x1f8] sm:$0xff]
    %v2580 = vld [vmem:[#allocation7 + $0x200] sm:$0xff]
    %v2581 = vld [vmem:[#allocation7 + $0x208] sm:$0xff]
    %v2582 = vld [vmem:[#allocation7 + $0x210] sm:$0xff]
    %v2583 = vld [vmem:[#allocation7 + $0x218] sm:$0xff]
    %v2584 = vld [vmem:[#allocation7 + $0x220] sm:$0xff]
    %v2585 = vld [vmem:[#allocation7 + $0x228] sm:$0xff]
    %v2586 = vld [vmem:[#allocation7 + $0x230] sm:$0xff]
    %v2587 = vld [vmem:[#allocation7 + $0x238] sm:$0xff]
    %v2588 = vld [vmem:[#allocation7 + $0x240] sm:$0xff]
    %v2589 = vld [vmem:[#allocation7 + $0x248] sm:$0xff]
    %v2590 = vld [vmem:[#allocation7 + $0x250] sm:$0xff]
    %v2591 = vld [vmem:[#allocation7 + $0x258] sm:$0xff]
    %v2592 = vld [vmem:[#allocation7 + $0x260] sm:$0xff]
    %v2593 = vld [vmem:[#allocation7 + $0x268] sm:$0xff]
    %v2594 = vld [vmem:[#allocation7 + $0x270] sm:$0xff]
    %v2595 = vld [vmem:[#allocation7 + $0x278] sm:$0xff]
    %v2596 = vld [vmem:[#allocation7 + $0x280] sm:$0xff]
    %v2597 = vld [vmem:[#allocation7 + $0x288] sm:$0xff]
    %v2598 = vld [vmem:[#allocation7 + $0x290] sm:$0xff]
    %v2599 = vld [vmem:[#allocation7 + $0x298] sm:$0xff]
    %v2600 = vld [vmem:[#allocation7 + $0x2a0] sm:$0xff]
    %v2601 = vld [vmem:[#allocation7 + $0x2a8] sm:$0xff]
    %v2602 = vld [vmem:[#allocation7 + $0x2b0] sm:$0xff]
    %v2603 = vld [vmem:[#allocation7 + $0x2b8] sm:$0xff]
    %v2604 = vld [vmem:[#allocation7 + $0x2c0] sm:$0xff]
    %v2605 = vld [vmem:[#allocation7 + $0x2c8] sm:$0xff]
    %v2606 = vld [vmem:[#allocation7 + $0x2d0] sm:$0xff]
    %v2607 = vld [vmem:[#allocation7 + $0x2d8] sm:$0xff]
    %v2608 = vld [vmem:[#allocation7 + $0x2e0] sm:$0xff]
    %v2609 = vld [vmem:[#allocation7 + $0x2e8] sm:$0xff]
    %v2610 = vld [vmem:[#allocation7 + $0x2f0] sm:$0xff]
    %v2611 = vld [vmem:[#allocation7 + $0x2f8] sm:$0xff]
    %v2612 = vld [vmem:[#allocation7 + $0x300] sm:$0xff]
    %v2613 = vld [vmem:[#allocation7 + $0x308] sm:$0xff]
    %v2614 = vld [vmem:[#allocation7 + $0x310] sm:$0xff]
    %v2615 = vld [vmem:[#allocation7 + $0x318] sm:$0xff]
    %v2616 = vld [vmem:[#allocation7 + $0x320] sm:$0xff]
    %v2617 = vld [vmem:[#allocation7 + $0x328] sm:$0xff]
    %v2618 = vld [vmem:[#allocation7 + $0x330] sm:$0xff]
    %v2619 = vld [vmem:[#allocation7 + $0x338] sm:$0xff]
    %v2620 = vld [vmem:[#allocation7 + $0x340] sm:$0xff]
    %v2621 = vld [vmem:[#allocation7 + $0x348] sm:$0xff]
    %v2622 = vld [vmem:[#allocation7 + $0x350] sm:$0xff]
    %v2623 = vld [vmem:[#allocation7 + $0x358] sm:$0xff]
    %v2624 = vld [vmem:[#allocation7 + $0x360] sm:$0xff]
    %v2625 = vld [vmem:[#allocation7 + $0x368] sm:$0xff]
    %v2626 = vld [vmem:[#allocation7 + $0x370] sm:$0xff]
    %v2627 = vld [vmem:[#allocation7 + $0x378] sm:$0xff]
    %v2628 = vld [vmem:[#allocation7 + $0x380] sm:$0xff]
    %v2629 = vld [vmem:[#allocation7 + $0x388] sm:$0xff]
    %v2630 = vld [vmem:[#allocation7 + $0x390] sm:$0xff]
    %v2631 = vld [vmem:[#allocation7 + $0x398] sm:$0xff]
    %v2632 = vld [vmem:[#allocation7 + $0x3a0] sm:$0xff]
    %v2633 = vld [vmem:[#allocation7 + $0x3a8] sm:$0xff]
    %v2634 = vld [vmem:[#allocation7 + $0x3b0] sm:$0xff]
    %v2635 = vld [vmem:[#allocation7 + $0x3b8] sm:$0xff]
    %v2636 = vld [vmem:[#allocation7 + $0x3c0] sm:$0xff]
    %v2637 = vld [vmem:[#allocation7 + $0x3c8] sm:$0xff]
    %v2638 = vld [vmem:[#allocation7 + $0x3d0] sm:$0xff]
    %v2639 = vld [vmem:[#allocation7 + $0x3d8] sm:$0xff]
    %v2640 = vld [vmem:[#allocation7 + $0x3e0] sm:$0xff]
    %v2641 = vld [vmem:[#allocation7 + $0x3e8] sm:$0xff]
    %v2642 = vld [vmem:[#allocation7 + $0x3f0] sm:$0xff]
    %v2643 = vld [vmem:[#allocation7 + $0x3f8] sm:$0xff]
    %v2644 = vld [vmem:[#allocation7 + $0x400] sm:$0xff]
    %v2645 = vld [vmem:[#allocation7 + $0x408] sm:$0xff]
    %v2646 = vld [vmem:[#allocation7 + $0x410] sm:$0xff]
    %v2647 = vld [vmem:[#allocation7 + $0x418] sm:$0xff]
    %v2648 = vld [vmem:[#allocation7 + $0x420] sm:$0xff]
    %v2649 = vld [vmem:[#allocation7 + $0x428] sm:$0xff]
    %v2650 = vld [vmem:[#allocation7 + $0x430] sm:$0xff]
    %v2651 = vld [vmem:[#allocation7 + $0x438] sm:$0xff]
    %v2652 = vld [vmem:[#allocation7 + $0x440] sm:$0xff]
    %v2653 = vld [vmem:[#allocation7 + $0x448] sm:$0xff]
    %v2654 = vld [vmem:[#allocation7 + $0x450] sm:$0xff]
    %v2655 = vld [vmem:[#allocation7 + $0x458] sm:$0xff]
    %v2656 = vld [vmem:[#allocation7 + $0x460] sm:$0xff]
    %v2657 = vld [vmem:[#allocation7 + $0x468] sm:$0xff]
    %v2658 = vld [vmem:[#allocation7 + $0x470] sm:$0xff]
    %v2659 = vld [vmem:[#allocation7 + $0x478] sm:$0xff]
    %v2660 = vld [vmem:[#allocation7 + $0x480] sm:$0xff]
    %v2661 = vld [vmem:[#allocation7 + $0x488] sm:$0xff]
    %v2662 = vld [vmem:[#allocation7 + $0x490] sm:$0xff]
    %v2663 = vld [vmem:[#allocation7 + $0x498] sm:$0xff]
    %v2664 = vld [vmem:[#allocation7 + $0x4a0] sm:$0xff]
    %v2665 = vld [vmem:[#allocation7 + $0x4a8] sm:$0xff]
    %v2666 = vld [vmem:[#allocation7 + $0x4b0] sm:$0xff]
    %v2667 = vld [vmem:[#allocation7 + $0x4b8] sm:$0xff]
    %v2668 = vld [vmem:[#allocation7 + $0x4c0] sm:$0xff]
    %v2669 = vld [vmem:[#allocation7 + $0x4c8] sm:$0xff]
    %v2670 = vld [vmem:[#allocation7 + $0x4d0] sm:$0xff]
    %v2671 = vld [vmem:[#allocation7 + $0x4d8] sm:$0xff]
    %v2672 = vld [vmem:[#allocation7 + $0x4e0] sm:$0xff]
    %v2673 = vld [vmem:[#allocation7 + $0x4e8] sm:$0xff]
    %v2674 = vld [vmem:[#allocation7 + $0x4f0] sm:$0xff]
    %v2675 = vld [vmem:[#allocation7 + $0x4f8] sm:$0xff]
    %v2676 = vld [vmem:[#allocation7 + $0x500] sm:$0xff]
    %v2677 = vld [vmem:[#allocation7 + $0x508] sm:$0xff]
    %v2678 = vld [vmem:[#allocation7 + $0x510] sm:$0xff]
    %v2679 = vld [vmem:[#allocation7 + $0x518] sm:$0xff]
    %v2680 = vld [vmem:[#allocation7 + $0x520] sm:$0xff]
    %v2681 = vld [vmem:[#allocation7 + $0x528] sm:$0xff]
    %v2682 = vld [vmem:[#allocation7 + $0x530] sm:$0xff]
    %v2683 = vld [vmem:[#allocation7 + $0x538] sm:$0xff]
    %v2684 = vld [vmem:[#allocation7 + $0x540] sm:$0xff]
    %v2685 = vld [vmem:[#allocation7 + $0x548] sm:$0xff]
    %v2686 = vld [vmem:[#allocation7 + $0x550] sm:$0xff]
    %v2687 = vld [vmem:[#allocation7 + $0x558] sm:$0xff]
    %v2688 = vld [vmem:[#allocation7 + $0x560] sm:$0xff]
    %v2689 = vld [vmem:[#allocation7 + $0x568] sm:$0xff]
    %v2690 = vld [vmem:[#allocation7 + $0x570] sm:$0xff]
    %v2691 = vld [vmem:[#allocation7 + $0x578] sm:$0xff]
    %v2692 = vld [vmem:[#allocation7 + $0x580] sm:$0xff]
    %v2693 = vld [vmem:[#allocation7 + $0x588] sm:$0xff]
    %v2694 = vld [vmem:[#allocation7 + $0x590] sm:$0xff]
    %v2695 = vld [vmem:[#allocation7 + $0x598] sm:$0xff]
    %v2696 = vld [vmem:[#allocation7 + $0x5a0] sm:$0xff]
    %v2697 = vld [vmem:[#allocation7 + $0x5a8] sm:$0xff]
    %v2698 = vld [vmem:[#allocation7 + $0x5b0] sm:$0xff]
    %v2699 = vld [vmem:[#allocation7 + $0x5b8] sm:$0xff]
    %v2700 = vld [vmem:[#allocation7 + $0x5c0] sm:$0xff]
    %v2701 = vld [vmem:[#allocation7 + $0x5c8] sm:$0xff]
    %v2702 = vld [vmem:[#allocation7 + $0x5d0] sm:$0xff]
    %v2703 = vld [vmem:[#allocation7 + $0x5d8] sm:$0xff]
    %v2704 = vld [vmem:[#allocation7 + $0x5e0] sm:$0xff]
    %v2705 = vld [vmem:[#allocation7 + $0x5e8] sm:$0xff]
    %v2706 = vld [vmem:[#allocation7 + $0x5f0] sm:$0xff]
    %v2707 = vld [vmem:[#allocation7 + $0x5f8] sm:$0xff]
    %v2708 = vld [vmem:[#allocation7 + $0x600] sm:$0xff]
    %v2709 = vld [vmem:[#allocation7 + $0x608] sm:$0xff]
    %v2710 = vld [vmem:[#allocation7 + $0x610] sm:$0xff]
    %v2711 = vld [vmem:[#allocation7 + $0x618] sm:$0xff]
    %v2712 = vld [vmem:[#allocation7 + $0x620] sm:$0xff]
    %v2713 = vld [vmem:[#allocation7 + $0x628] sm:$0xff]
    %v2714 = vld [vmem:[#allocation7 + $0x630] sm:$0xff]
    %v2715 = vld [vmem:[#allocation7 + $0x638] sm:$0xff]
    %v2716 = vld [vmem:[#allocation7 + $0x640] sm:$0xff]
    %v2717 = vld [vmem:[#allocation7 + $0x648] sm:$0xff]
    %v2718 = vld [vmem:[#allocation7 + $0x650] sm:$0xff]
    %v2719 = vld [vmem:[#allocation7 + $0x658] sm:$0xff]
    %v2720 = vld [vmem:[#allocation7 + $0x660] sm:$0xff]
    %v2721 = vld [vmem:[#allocation7 + $0x668] sm:$0xff]
    %v2722 = vld [vmem:[#allocation7 + $0x670] sm:$0xff]
    %v2723 = vld [vmem:[#allocation7 + $0x678] sm:$0xff]
    %v2724 = vld [vmem:[#allocation7 + $0x680] sm:$0xff]
    %v2725 = vld [vmem:[#allocation7 + $0x688] sm:$0xff]
    %v2726 = vld [vmem:[#allocation7 + $0x690] sm:$0xff]
    %v2727 = vld [vmem:[#allocation7 + $0x698] sm:$0xff]
    %v2728 = vld [vmem:[#allocation7 + $0x6a0] sm:$0xff]
    %v2729 = vld [vmem:[#allocation7 + $0x6a8] sm:$0xff]
    %v2730 = vld [vmem:[#allocation7 + $0x6b0] sm:$0xff]
    %v2731 = vld [vmem:[#allocation7 + $0x6b8] sm:$0xff]
    %v2732 = vld [vmem:[#allocation7 + $0x6c0] sm:$0xff]
    %v2733 = vld [vmem:[#allocation7 + $0x6c8] sm:$0xff]
    %v2734 = vld [vmem:[#allocation7 + $0x6d0] sm:$0xff]
    %v2735 = vld [vmem:[#allocation7 + $0x6d8] sm:$0xff]
    %v2736 = vld [vmem:[#allocation7 + $0x6e0] sm:$0xff]
    %v2737 = vld [vmem:[#allocation7 + $0x6e8] sm:$0xff]
    %v2738 = vld [vmem:[#allocation7 + $0x6f0] sm:$0xff]
    %v2739 = vld [vmem:[#allocation7 + $0x6f8] sm:$0xff]
    %v2740 = vld [vmem:[#allocation7 + $0x700] sm:$0xff]
    %v2741 = vld [vmem:[#allocation7 + $0x708] sm:$0xff]
    %v2742 = vld [vmem:[#allocation7 + $0x710] sm:$0xff]
    %v2743 = vld [vmem:[#allocation7 + $0x718] sm:$0xff]
    %v2744 = vld [vmem:[#allocation7 + $0x720] sm:$0xff]
    %v2745 = vld [vmem:[#allocation7 + $0x728] sm:$0xff]
    %v2746 = vld [vmem:[#allocation7 + $0x730] sm:$0xff]
    %v2747 = vld [vmem:[#allocation7 + $0x738] sm:$0xff]
    %v2748 = vld [vmem:[#allocation7 + $0x740] sm:$0xff]
    %v2749 = vld [vmem:[#allocation7 + $0x748] sm:$0xff]
    %v2750 = vld [vmem:[#allocation7 + $0x750] sm:$0xff]
    %v2751 = vld [vmem:[#allocation7 + $0x758] sm:$0xff]
    %v2752 = vld [vmem:[#allocation7 + $0x760] sm:$0xff]
    %v2753 = vld [vmem:[#allocation7 + $0x768] sm:$0xff]
    %v2754 = vld [vmem:[#allocation7 + $0x770] sm:$0xff]
    %v2755 = vld [vmem:[#allocation7 + $0x778] sm:$0xff]
    %v2756 = vld [vmem:[#allocation7 + $0x780] sm:$0xff]
    %v2757 = vld [vmem:[#allocation7 + $0x788] sm:$0xff]
    %v2758 = vld [vmem:[#allocation7 + $0x790] sm:$0xff]
    %v2759 = vld [vmem:[#allocation7 + $0x798] sm:$0xff]
    %v2760 = vld [vmem:[#allocation7 + $0x7a0] sm:$0xff]
    %v2761 = vld [vmem:[#allocation7 + $0x7a8] sm:$0xff]
    %v2762 = vld [vmem:[#allocation7 + $0x7b0] sm:$0xff]
    %v2763 = vld [vmem:[#allocation7 + $0x7b8] sm:$0xff]
    %v2764 = vld [vmem:[#allocation7 + $0x7c0] sm:$0xff]
    %v2765 = vld [vmem:[#allocation7 + $0x7c8] sm:$0xff]
    %v2766 = vld [vmem:[#allocation7 + $0x7d0] sm:$0xff]
    %v2767 = vld [vmem:[#allocation7 + $0x7d8] sm:$0xff]
    %v2768 = vld [vmem:[#allocation7 + $0x7e0] sm:$0xff]
    %v2769 = vld [vmem:[#allocation7 + $0x7e8] sm:$0xff]
    %v2770 = vld [vmem:[#allocation7 + $0x7f0] sm:$0xff]
    %v2771 = vld [vmem:[#allocation7 + $0x7f8] sm:$0xff]
    %v2772 = vld [vmem:[#allocation7 + $0x800] sm:$0xff]
    %v2773 = vld [vmem:[#allocation7 + $0x808] sm:$0xff]
    %v2774 = vld [vmem:[#allocation7 + $0x810] sm:$0xff]
    %v2775 = vld [vmem:[#allocation7 + $0x818] sm:$0xff]
    %v2776 = vld [vmem:[#allocation7 + $0x820] sm:$0xff]
    %v2777 = vld [vmem:[#allocation7 + $0x828] sm:$0xff]
    %v2778 = vld [vmem:[#allocation7 + $0x830] sm:$0xff]
    %v2779 = vld [vmem:[#allocation7 + $0x838] sm:$0xff]
    %v2780 = vld [vmem:[#allocation7 + $0x840] sm:$0xff]
    %v2781 = vld [vmem:[#allocation7 + $0x848] sm:$0xff]
    %v2782 = vld [vmem:[#allocation7 + $0x850] sm:$0xff]
    %v2783 = vld [vmem:[#allocation7 + $0x858] sm:$0xff]
    %v2784 = vld [vmem:[#allocation7 + $0x860] sm:$0xff]
    %v2785 = vld [vmem:[#allocation7 + $0x868] sm:$0xff]
    %v2786 = vld [vmem:[#allocation7 + $0x870] sm:$0xff]
    %v2787 = vld [vmem:[#allocation7 + $0x878] sm:$0xff]
    %v2788 = vld [vmem:[#allocation7 + $0x880] sm:$0xff]
    %v2789 = vld [vmem:[#allocation7 + $0x888] sm:$0xff]
    %v2790 = vld [vmem:[#allocation7 + $0x890] sm:$0xff]
    %v2791 = vld [vmem:[#allocation7 + $0x898] sm:$0xff]
    %v2792 = vld [vmem:[#allocation7 + $0x8a0] sm:$0xff]
    %v2793 = vld [vmem:[#allocation7 + $0x8a8] sm:$0xff]
    %v2794 = vld [vmem:[#allocation7 + $0x8b0] sm:$0xff]
    %v2795 = vld [vmem:[#allocation7 + $0x8b8] sm:$0xff]
    %v2796 = vld [vmem:[#allocation7 + $0x8c0] sm:$0xff]
    %v2797 = vld [vmem:[#allocation7 + $0x8c8] sm:$0xff]
    %v2798 = vld [vmem:[#allocation7 + $0x8d0] sm:$0xff]
    %v2799 = vld [vmem:[#allocation7 + $0x8d8] sm:$0xff]
    %v2800 = vld [vmem:[#allocation7 + $0x8e0] sm:$0xff]
    %v2801 = vld [vmem:[#allocation7 + $0x8e8] sm:$0xff]
    %v2802 = vld [vmem:[#allocation7 + $0x8f0] sm:$0xff]
    %v2803 = vld [vmem:[#allocation7 + $0x8f8] sm:$0xff]
    %v2804 = vld [vmem:[#allocation7 + $0x900] sm:$0xff]
    %v2805 = vld [vmem:[#allocation7 + $0x908] sm:$0xff]
    %v2806 = vld [vmem:[#allocation7 + $0x910] sm:$0xff]
    %v2807 = vld [vmem:[#allocation7 + $0x918] sm:$0xff]
    %v2808 = vld [vmem:[#allocation7 + $0x920] sm:$0xff]
    %v2809 = vld [vmem:[#allocation7 + $0x928] sm:$0xff]
    %v2810 = vld [vmem:[#allocation7 + $0x930] sm:$0xff]
    %v2811 = vld [vmem:[#allocation7 + $0x938] sm:$0xff]
    %v2812 = vld [vmem:[#allocation7 + $0x940] sm:$0xff]
    %v2813 = vld [vmem:[#allocation7 + $0x948] sm:$0xff]
    %v2814 = vld [vmem:[#allocation7 + $0x950] sm:$0xff]
    %v2815 = vld [vmem:[#allocation7 + $0x958] sm:$0xff]
    %v2816 = vld [vmem:[#allocation7 + $0x960] sm:$0xff]
    %v2817 = vld [vmem:[#allocation7 + $0x968] sm:$0xff]
    %v2818 = vld [vmem:[#allocation7 + $0x970] sm:$0xff]
    %v2819 = vld [vmem:[#allocation7 + $0x978] sm:$0xff]
    %v2820 = vld [vmem:[#allocation7 + $0x980] sm:$0xff]
    %v2821 = vld [vmem:[#allocation7 + $0x988] sm:$0xff]
    %v2822 = vld [vmem:[#allocation7 + $0x990] sm:$0xff]
    %v2823 = vld [vmem:[#allocation7 + $0x998] sm:$0xff]
    %v2824 = vld [vmem:[#allocation7 + $0x9a0] sm:$0xff]
    %v2825 = vld [vmem:[#allocation7 + $0x9a8] sm:$0xff]
    %v2826 = vld [vmem:[#allocation7 + $0x9b0] sm:$0xff]
    %v2827 = vld [vmem:[#allocation7 + $0x9b8] sm:$0xff]
    %v2828 = vld [vmem:[#allocation7 + $0x9c0] sm:$0xff]
    %v2829 = vld [vmem:[#allocation7 + $0x9c8] sm:$0xff]
    %v2830 = vld [vmem:[#allocation7 + $0x9d0] sm:$0xff]
    %v2831 = vld [vmem:[#allocation7 + $0x9d8] sm:$0xff]
    %v2832 = vld [vmem:[#allocation7 + $0x9e0] sm:$0xff]
    %v2833 = vld [vmem:[#allocation7 + $0x9e8] sm:$0xff]
    %v2834 = vld [vmem:[#allocation7 + $0x9f0] sm:$0xff]
    %v2835 = vld [vmem:[#allocation7 + $0x9f8] sm:$0xff]
    %v2836 = vld [vmem:[#allocation7 + $0xa00] sm:$0xff]
    %v2837 = vld [vmem:[#allocation7 + $0xa08] sm:$0xff]
    %v2838 = vld [vmem:[#allocation7 + $0xa10] sm:$0xff]
    %v2839 = vld [vmem:[#allocation7 + $0xa18] sm:$0xff]
    %v2840 = vld [vmem:[#allocation7 + $0xa20] sm:$0xff]
    %v2841 = vld [vmem:[#allocation7 + $0xa28] sm:$0xff]
    %v2842 = vld [vmem:[#allocation7 + $0xa30] sm:$0xff]
    %v2843 = vld [vmem:[#allocation7 + $0xa38] sm:$0xff]
    %v2844 = vld [vmem:[#allocation7 + $0xa40] sm:$0xff]
    %v2845 = vld [vmem:[#allocation7 + $0xa48] sm:$0xff]
    %v2846 = vld [vmem:[#allocation7 + $0xa50] sm:$0xff]
    %v2847 = vld [vmem:[#allocation7 + $0xa58] sm:$0xff]
    %v2848 = vld [vmem:[#allocation7 + $0xa60] sm:$0xff]
    %v2849 = vld [vmem:[#allocation7 + $0xa68] sm:$0xff]
    %v2850 = vld [vmem:[#allocation7 + $0xa70] sm:$0xff]
    %v2851 = vld [vmem:[#allocation7 + $0xa78] sm:$0xff]
    %v2852 = vld [vmem:[#allocation7 + $0xa80] sm:$0xff]
    %v2853 = vld [vmem:[#allocation7 + $0xa88] sm:$0xff]
    %v2854 = vld [vmem:[#allocation7 + $0xa90] sm:$0xff]
    %v2855 = vld [vmem:[#allocation7 + $0xa98] sm:$0xff]
    %v2856 = vld [vmem:[#allocation7 + $0xaa0] sm:$0xff]
    %v2857 = vld [vmem:[#allocation7 + $0xaa8] sm:$0xff]
    %v2858 = vld [vmem:[#allocation7 + $0xab0] sm:$0xff]
    %v2859 = vld [vmem:[#allocation7 + $0xab8] sm:$0xff]
    %v2860 = vld [vmem:[#allocation7 + $0xac0] sm:$0xff]
    %v2861 = vld [vmem:[#allocation7 + $0xac8] sm:$0xff]
    %v2862 = vld [vmem:[#allocation7 + $0xad0] sm:$0xff]
    %v2863 = vld [vmem:[#allocation7 + $0xad8] sm:$0xff]
    %v2864 = vld [vmem:[#allocation7 + $0xae0] sm:$0xff]
    %v2865 = vld [vmem:[#allocation7 + $0xae8] sm:$0xff]
    %v2866 = vld [vmem:[#allocation7 + $0xaf0] sm:$0xff]
    %v2867 = vld [vmem:[#allocation7 + $0xaf8] sm:$0xff]
    %v2868 = vld [vmem:[#allocation7 + $0xb00] sm:$0xff]
    %v2869 = vld [vmem:[#allocation7 + $0xb08] sm:$0xff]
    %v2870 = vld [vmem:[#allocation7 + $0xb10] sm:$0xff]
    %v2871 = vld [vmem:[#allocation7 + $0xb18] sm:$0xff]
    %v2872 = vld [vmem:[#allocation7 + $0xb20] sm:$0xff]
    %v2873 = vld [vmem:[#allocation7 + $0xb28] sm:$0xff]
    %v2874 = vld [vmem:[#allocation7 + $0xb30] sm:$0xff]
    %v2875 = vld [vmem:[#allocation7 + $0xb38] sm:$0xff]
    %v2876 = vld [vmem:[#allocation7 + $0xb40] sm:$0xff]
    %v2877 = vld [vmem:[#allocation7 + $0xb48] sm:$0xff]
    %v2878 = vld [vmem:[#allocation7 + $0xb50] sm:$0xff]
    %v2879 = vld [vmem:[#allocation7 + $0xb58] sm:$0xff]
    %v2880 = vld [vmem:[#allocation7 + $0xb60] sm:$0xff]
    %v2881 = vld [vmem:[#allocation7 + $0xb68] sm:$0xff]
    %v2882 = vld [vmem:[#allocation7 + $0xb70] sm:$0xff]
    %v2883 = vld [vmem:[#allocation7 + $0xb78] sm:$0xff]
    %v2884 = vld [vmem:[#allocation7 + $0xb80] sm:$0xff]
    %v2885 = vld [vmem:[#allocation7 + $0xb88] sm:$0xff]
    %v2886 = vld [vmem:[#allocation7 + $0xb90] sm:$0xff]
    %v2887 = vld [vmem:[#allocation7 + $0xb98] sm:$0xff]
    %v2888 = vld [vmem:[#allocation7 + $0xba0] sm:$0xff]
    %v2889 = vld [vmem:[#allocation7 + $0xba8] sm:$0xff]
    %v2890 = vld [vmem:[#allocation7 + $0xbb0] sm:$0xff]
    %v2891 = vld [vmem:[#allocation7 + $0xbb8] sm:$0xff]
    %v2892 = vld [vmem:[#allocation7 + $0xbc0] sm:$0xff]
    %v2893 = vld [vmem:[#allocation7 + $0xbc8] sm:$0xff]
    %v2894 = vld [vmem:[#allocation7 + $0xbd0] sm:$0xff]
    %v2895 = vld [vmem:[#allocation7 + $0xbd8] sm:$0xff]
    %v2896 = vld [vmem:[#allocation7 + $0xbe0] sm:$0xff]
    %v2897 = vld [vmem:[#allocation7 + $0xbe8] sm:$0xff]
    %v2898 = vld [vmem:[#allocation7 + $0xbf0] sm:$0xff]
    %v2899 = vld [vmem:[#allocation7 + $0xbf8] sm:$0xff]
    %v2900 = vld [vmem:[#allocation7 + $0xc00] sm:$0xff]
    %v2901 = vld [vmem:[#allocation7 + $0xc08] sm:$0xff]
    %v2902 = vld [vmem:[#allocation7 + $0xc10] sm:$0xff]
    %v2903 = vld [vmem:[#allocation7 + $0xc18] sm:$0xff]
    %v2904 = vld [vmem:[#allocation7 + $0xc20] sm:$0xff]
    %v2905 = vld [vmem:[#allocation7 + $0xc28] sm:$0xff]
    %v2906 = vld [vmem:[#allocation7 + $0xc30] sm:$0xff]
    %v2907 = vld [vmem:[#allocation7 + $0xc38] sm:$0xff]
    %v2908 = vld [vmem:[#allocation7 + $0xc40] sm:$0xff]
    %v2909 = vld [vmem:[#allocation7 + $0xc48] sm:$0xff]
    %v2910 = vld [vmem:[#allocation7 + $0xc50] sm:$0xff]
    %v2911 = vld [vmem:[#allocation7 + $0xc58] sm:$0xff]
    %v2912 = vld [vmem:[#allocation7 + $0xc60] sm:$0xff]
    %v2913 = vld [vmem:[#allocation7 + $0xc68] sm:$0xff]
    %v2914 = vld [vmem:[#allocation7 + $0xc70] sm:$0xff]
    %v2915 = vld [vmem:[#allocation7 + $0xc78] sm:$0xff]
    %v2916 = vld [vmem:[#allocation7 + $0xc80] sm:$0xff]
    %v2917 = vld [vmem:[#allocation7 + $0xc88] sm:$0xff]
    %v2918 = vld [vmem:[#allocation7 + $0xc90] sm:$0xff]
    %v2919 = vld [vmem:[#allocation7 + $0xc98] sm:$0xff]
    %v2920 = vld [vmem:[#allocation7 + $0xca0] sm:$0xff]
    %v2921 = vld [vmem:[#allocation7 + $0xca8] sm:$0xff]
    %v2922 = vld [vmem:[#allocation7 + $0xcb0] sm:$0xff]
    %v2923 = vld [vmem:[#allocation7 + $0xcb8] sm:$0xff]
    %v2924 = vld [vmem:[#allocation7 + $0xcc0] sm:$0xff]
    %v2925 = vld [vmem:[#allocation7 + $0xcc8] sm:$0xff]
    %v2926 = vld [vmem:[#allocation7 + $0xcd0] sm:$0xff]
    %v2927 = vld [vmem:[#allocation7 + $0xcd8] sm:$0xff]
    %v2928 = vld [vmem:[#allocation7 + $0xce0] sm:$0xff]
    %v2929 = vld [vmem:[#allocation7 + $0xce8] sm:$0xff]
    %v2930 = vld [vmem:[#allocation7 + $0xcf0] sm:$0xff]
    %v2931 = vld [vmem:[#allocation7 + $0xcf8] sm:$0xff]
    %v2932 = vld [vmem:[#allocation7 + $0xd00] sm:$0xff]
    %v2933 = vld [vmem:[#allocation7 + $0xd08] sm:$0xff]
    %v2934 = vld [vmem:[#allocation7 + $0xd10] sm:$0xff]
    %v2935 = vld [vmem:[#allocation7 + $0xd18] sm:$0xff]
    %v2936 = vld [vmem:[#allocation7 + $0xd20] sm:$0xff]
    %v2937 = vld [vmem:[#allocation7 + $0xd28] sm:$0xff]
    %v2938 = vld [vmem:[#allocation7 + $0xd30] sm:$0xff]
    %v2939 = vld [vmem:[#allocation7 + $0xd38] sm:$0xff]
    %v2940 = vld [vmem:[#allocation7 + $0xd40] sm:$0xff]
    %v2941 = vld [vmem:[#allocation7 + $0xd48] sm:$0xff]
    %v2942 = vld [vmem:[#allocation7 + $0xd50] sm:$0xff]
    %v2943 = vld [vmem:[#allocation7 + $0xd58] sm:$0xff]
    %v2944 = vld [vmem:[#allocation7 + $0xd60] sm:$0xff]
    %v2945 = vld [vmem:[#allocation7 + $0xd68] sm:$0xff]
    %v2946 = vld [vmem:[#allocation7 + $0xd70] sm:$0xff]
    %v2947 = vld [vmem:[#allocation7 + $0xd78] sm:$0xff]
    %v2948 = vld [vmem:[#allocation7 + $0xd80] sm:$0xff]
    %v2949 = vld [vmem:[#allocation7 + $0xd88] sm:$0xff]
    %v2950 = vld [vmem:[#allocation7 + $0xd90] sm:$0xff]
    %v2951 = vld [vmem:[#allocation7 + $0xd98] sm:$0xff]
    %v2952 = vld [vmem:[#allocation7 + $0xda0] sm:$0xff]
    %v2953 = vld [vmem:[#allocation7 + $0xda8] sm:$0xff]
    %v2954 = vld [vmem:[#allocation7 + $0xdb0] sm:$0xff]
    %v2955 = vld [vmem:[#allocation7 + $0xdb8] sm:$0xff]
    %v2956 = vld [vmem:[#allocation7 + $0xdc0] sm:$0xff]
    %v2957 = vld [vmem:[#allocation7 + $0xdc8] sm:$0xff]
    %v2958 = vld [vmem:[#allocation7 + $0xdd0] sm:$0xff]
    %v2959 = vld [vmem:[#allocation7 + $0xdd8] sm:$0xff]
    %v2960 = vld [vmem:[#allocation7 + $0xde0] sm:$0xff]
    %v2961 = vld [vmem:[#allocation7 + $0xde8] sm:$0xff]
    %v2962 = vld [vmem:[#allocation7 + $0xdf0] sm:$0xff]
    %v2963 = vld [vmem:[#allocation7 + $0xdf8] sm:$0xff]
    %v2964 = vld [vmem:[#allocation7 + $0xe00] sm:$0xff]
    %v2965 = vld [vmem:[#allocation7 + $0xe08] sm:$0xff]
    %v2966 = vld [vmem:[#allocation7 + $0xe10] sm:$0xff]
    %v2967 = vld [vmem:[#allocation7 + $0xe18] sm:$0xff]
    %v2968 = vld [vmem:[#allocation7 + $0xe20] sm:$0xff]
    %v2969 = vld [vmem:[#allocation7 + $0xe28] sm:$0xff]
    %v2970 = vld [vmem:[#allocation7 + $0xe30] sm:$0xff]
    %v2971 = vld [vmem:[#allocation7 + $0xe38] sm:$0xff]
    %v2972 = vld [vmem:[#allocation7 + $0xe40] sm:$0xff]
    %v2973 = vld [vmem:[#allocation7 + $0xe48] sm:$0xff]
    %v2974 = vld [vmem:[#allocation7 + $0xe50] sm:$0xff]
    %v2975 = vld [vmem:[#allocation7 + $0xe58] sm:$0xff]
    %v2976 = vld [vmem:[#allocation7 + $0xe60] sm:$0xff]
    %v2977 = vld [vmem:[#allocation7 + $0xe68] sm:$0xff]
    %v2978 = vld [vmem:[#allocation7 + $0xe70] sm:$0xff]
    %v2979 = vld [vmem:[#allocation7 + $0xe78] sm:$0xff]
    %v2980 = vld [vmem:[#allocation7 + $0xe80] sm:$0xff]
    %v2981 = vld [vmem:[#allocation7 + $0xe88] sm:$0xff]
    %v2982 = vld [vmem:[#allocation7 + $0xe90] sm:$0xff]
    %v2983 = vld [vmem:[#allocation7 + $0xe98] sm:$0xff]
    %v2984 = vld [vmem:[#allocation7 + $0xea0] sm:$0xff]
    %v2985 = vld [vmem:[#allocation7 + $0xea8] sm:$0xff]
    %v2986 = vld [vmem:[#allocation7 + $0xeb0] sm:$0xff]
    %v2987 = vld [vmem:[#allocation7 + $0xeb8] sm:$0xff]
    %v2988 = vld [vmem:[#allocation7 + $0xec0] sm:$0xff]
    %v2989 = vld [vmem:[#allocation7 + $0xec8] sm:$0xff]
    %v2990 = vld [vmem:[#allocation7 + $0xed0] sm:$0xff]
    %v2991 = vld [vmem:[#allocation7 + $0xed8] sm:$0xff]
    %v2992 = vld [vmem:[#allocation7 + $0xee0] sm:$0xff]
    %v2993 = vld [vmem:[#allocation7 + $0xee8] sm:$0xff]
    %v2994 = vld [vmem:[#allocation7 + $0xef0] sm:$0xff]
    %v2995 = vld [vmem:[#allocation7 + $0xef8] sm:$0xff]
    %2996 = vmatprep.subr.mxu0 %v2547
    %2997 = vmatpush1.msra.mxu0 %v2546
    %2998 = vmatprep.subr.mxu0 %v2545
    %2999 = vmatpush1.msra.mxu0 %v2544
    %3000 = vmatprep.subr.mxu0 %v2543
    %3001 = vmatpush1.msra.mxu0 %v2542
    %3002 = vmatprep.subr.mxu0 %v2541
    %3003 = vmatpush1.msra.mxu0 %v2540
    %3004 = vmatprep.subr.mxu0 %v2539
    %3005 = vmatpush1.msra.mxu0 %v2538
    %3006 = vmatprep.subr.mxu0 %v2537
    %3007 = vmatpush1.msra.mxu0 %v2536
    %3008 = vmatprep.subr.mxu0 %v2535
    %3009 = vmatpush1.msra.mxu0 %v2534
    %3010 = vmatprep.subr.mxu0 %v2533
    %3011 = vmatpush1.msra.mxu0 %v2532
    %3012 = vmatprep.subr.mxu0 %v2531
    %3013 = vmatpush1.msra.mxu0 %v2530
    %3014 = vmatprep.subr.mxu0 %v2529
    %3015 = vmatpush1.msra.mxu0 %v2528
    %3016 = vmatprep.subr.mxu0 %v2527
    %3017 = vmatpush1.msra.mxu0 %v2526
    %3018 = vmatprep.subr.mxu0 %v2525
    %3019 = vmatpush1.msra.mxu0 %v2524
    %3020 = vmatprep.subr.mxu0 %v2523
    %3021 = vmatpush1.msra.mxu0 %v2522
    %3022 = vmatprep.subr.mxu0 %v2521
    %3023 = vmatpush1.msra.mxu0 %v2520
    %3024 = vmatprep.subr.mxu0 %v2519
    %3025 = vmatpush1.msra.mxu0 %v2518
    %3026 = vmatprep.subr.mxu0 %v2517
    %3027 = vmatpush1.msra.mxu0 %v2516
    %3028 = vmatprep.subr.mxu0 %v2579
    %3029 = vmatpush2.msra.mxu0 %v2578
    %3030 = vmatprep.subr.mxu0 %v2577
    %3031 = vmatpush2.msra.mxu0 %v2576
    %3032 = vmatprep.subr.mxu0 %v2575
    %3033 = vmatpush2.msra.mxu0 %v2574
    %3034 = vmatprep.subr.mxu0 %v2573
    %3035 = vmatpush2.msra.mxu0 %v2572
    %3036 = vmatprep.subr.mxu0 %v2571
    %3037 = vmatpush2.msra.mxu0 %v2570
    %3038 = vmatprep.subr.mxu0 %v2569
    %3039 = vmatpush2.msra.mxu0 %v2568
    %3040 = vmatprep.subr.mxu0 %v2567
    %3041 = vmatpush2.msra.mxu0 %v2566
    %3042 = vmatprep.subr.mxu0 %v2565
    %3043 = vmatpush2.msra.mxu0 %v2564
    %3044 = vmatprep.subr.mxu0 %v2563
    %3045 = vmatpush2.msra.mxu0 %v2562
    %3046 = vmatprep.subr.mxu0 %v2561
    %3047 = vmatpush2.msra.mxu0 %v2560
    %3048 = vmatprep.subr.mxu0 %v2559
    %3049 = vmatpush2.msra.mxu0 %v2558
    %3050 = vmatprep.subr.mxu0 %v2557
    %3051 = vmatpush2.msra.mxu0 %v2556
    %3052 = vmatprep.subr.mxu0 %v2555
    %3053 = vmatpush2.msra.mxu0 %v2554
    %3054 = vmatprep.subr.mxu0 %v2553
    %3055 = vmatpush2.msra.mxu0 %v2552
    %3056 = vmatprep.subr.mxu0 %v2551
    %3057 = vmatpush2.msra.mxu0 %v2550
    %3058 = vmatprep.subr.mxu0 %v2549
    %3059 = vmatpush2.msra.mxu0 %v2548
    %3060 = vmatprep.mubr.f32.mxu0 %v2036
    %3061 = vmatmul.mubr.f32.gmra.mxu0 %v2035
    %v3062 = vpop.f32.mrf.mxu0
    %v3063 = vadd.f32 0.0, %v3062
    %v3064 = vpop.f32.mrf.mxu0
    %v3065 = vadd.f32 0.0, %v3064
    %3066 = vmatprep.mubr.f32.mxu0 %v2042
    %3067 = vmatmul.mubr.f32.gmra.mxu0 %v2041
    %v3068 = vpop.f32.mrf.mxu0
    %v3069 = vadd.f32 0.0, %v3068
    %v3070 = vpop.f32.mrf.mxu0
    %v3071 = vadd.f32 0.0, %v3070
    %3072 = vmatprep.mubr.f32.mxu0 %v2048
    %3073 = vmatmul.mubr.f32.gmra.mxu0 %v2047
    %v3074 = vpop.f32.mrf.mxu0
    %v3075 = vadd.f32 0.0, %v3074
    %v3076 = vpop.f32.mrf.mxu0
    %v3077 = vadd.f32 0.0, %v3076
    %3078 = vmatprep.mubr.f32.mxu0 %v2054
    %3079 = vmatmul.mubr.f32.gmra.mxu0 %v2053
    %v3080 = vpop.f32.mrf.mxu0
    %v3081 = vadd.f32 0.0, %v3080
    %v3082 = vpop.f32.mrf.mxu0
    %v3083 = vadd.f32 0.0, %v3082
    %3084 = vmatprep.mubr.f32.mxu0 %v2060
    %3085 = vmatmul.mubr.f32.gmra.mxu0 %v2059
    %v3086 = vpop.f32.mrf.mxu0
    %v3087 = vadd.f32 0.0, %v3086
    %v3088 = vpop.f32.mrf.mxu0
    %v3089 = vadd.f32 0.0, %v3088
    %3090 = vmatprep.mubr.f32.mxu0 %v2066
    %3091 = vmatmul.mubr.f32.gmra.mxu0 %v2065
    %v3092 = vpop.f32.mrf.mxu0
    %v3093 = vadd.f32 0.0, %v3092
    %v3094 = vpop.f32.mrf.mxu0
    %v3095 = vadd.f32 0.0, %v3094
    %3096 = vmatprep.mubr.f32.mxu0 %v2072
    %3097 = vmatmul.mubr.f32.gmra.mxu0 %v2071
    %v3098 = vpop.f32.mrf.mxu0
    %v3099 = vadd.f32 0.0, %v3098
    %v3100 = vpop.f32.mrf.mxu0
    %v3101 = vadd.f32 0.0, %v3100
    %3102 = vmatprep.mubr.f32.mxu0 %v2078
    %3103 = vmatmul.mubr.f32.gmra.mxu0 %v2077
    %v3104 = vpop.f32.mrf.mxu0
    %v3105 = vadd.f32 0.0, %v3104
    %v3106 = vpop.f32.mrf.mxu0
    %v3107 = vadd.f32 0.0, %v3106
    %3108 = vdwg.mxu0
    %3109 = vmatprep.subr.mxu0 %v2611
    %3110 = vmatpush1.msra.mxu0 %v2610
    %3111 = vmatprep.subr.mxu0 %v2609
    %3112 = vmatpush1.msra.mxu0 %v2608
    %3113 = vmatprep.subr.mxu0 %v2607
    %3114 = vmatpush1.msra.mxu0 %v2606
    %3115 = vmatprep.subr.mxu0 %v2605
    %3116 = vmatpush1.msra.mxu0 %v2604
    %3117 = vmatprep.subr.mxu0 %v2603
    %3118 = vmatpush1.msra.mxu0 %v2602
    %3119 = vmatprep.subr.mxu0 %v2601
    %3120 = vmatpush1.msra.mxu0 %v2600
    %3121 = vmatprep.subr.mxu0 %v2599
    %3122 = vmatpush1.msra.mxu0 %v2598
    %3123 = vmatprep.subr.mxu0 %v2597
    %3124 = vmatpush1.msra.mxu0 %v2596
    %3125 = vmatprep.subr.mxu0 %v2595
    %3126 = vmatpush1.msra.mxu0 %v2594
    %3127 = vmatprep.subr.mxu0 %v2593
    %3128 = vmatpush1.msra.mxu0 %v2592
    %3129 = vmatprep.subr.mxu0 %v2591
    %3130 = vmatpush1.msra.mxu0 %v2590
    %3131 = vmatprep.subr.mxu0 %v2589
    %3132 = vmatpush1.msra.mxu0 %v2588
    %3133 = vmatprep.subr.mxu0 %v2587
    %3134 = vmatpush1.msra.mxu0 %v2586
    %3135 = vmatprep.subr.mxu0 %v2585
    %3136 = vmatpush1.msra.mxu0 %v2584
    %3137 = vmatprep.subr.mxu0 %v2583
    %3138 = vmatpush1.msra.mxu0 %v2582
    %3139 = vmatprep.subr.mxu0 %v2581
    %3140 = vmatpush1.msra.mxu0 %v2580
    %3141 = vmatprep.subr.mxu0 %v2643
    %3142 = vmatpush2.msra.mxu0 %v2642
    %3143 = vmatprep.subr.mxu0 %v2641
    %3144 = vmatpush2.msra.mxu0 %v2640
    %3145 = vmatprep.subr.mxu0 %v2639
    %3146 = vmatpush2.msra.mxu0 %v2638
    %3147 = vmatprep.subr.mxu0 %v2637
    %3148 = vmatpush2.msra.mxu0 %v2636
    %3149 = vmatprep.subr.mxu0 %v2635
    %3150 = vmatpush2.msra.mxu0 %v2634
    %3151 = vmatprep.subr.mxu0 %v2633
    %3152 = vmatpush2.msra.mxu0 %v2632
    %3153 = vmatprep.subr.mxu0 %v2631
    %3154 = vmatpush2.msra.mxu0 %v2630
    %3155 = vmatprep.subr.mxu0 %v2629
    %3156 = vmatpush2.msra.mxu0 %v2628
    %3157 = vmatprep.subr.mxu0 %v2627
    %3158 = vmatpush2.msra.mxu0 %v2626
    %3159 = vmatprep.subr.mxu0 %v2625
    %3160 = vmatpush2.msra.mxu0 %v2624
    %3161 = vmatprep.subr.mxu0 %v2623
    %3162 = vmatpush2.msra.mxu0 %v2622
    %3163 = vmatprep.subr.mxu0 %v2621
    %3164 = vmatpush2.msra.mxu0 %v2620
    %3165 = vmatprep.subr.mxu0 %v2619
    %3166 = vmatpush2.msra.mxu0 %v2618
    %3167 = vmatprep.subr.mxu0 %v2617
    %3168 = vmatpush2.msra.mxu0 %v2616
    %3169 = vmatprep.subr.mxu0 %v2615
    %3170 = vmatpush2.msra.mxu0 %v2614
    %3171 = vmatprep.subr.mxu0 %v2613
    %3172 = vmatpush2.msra.mxu0 %v2612
    %3173 = vmatprep.mubr.f32.mxu0 %v2133
    %3174 = vmatmul.mubr.f32.gmra.mxu0 %v2037
    %v3175 = vpop.f32.mrf.mxu0
    %v3176 = vadd.f32 %v3063, %v3175
    %v3177 = vpop.f32.mrf.mxu0
    %v3178 = vadd.f32 %v3065, %v3177
    %3179 = vmatprep.mubr.f32.mxu0 %v2142
    %3180 = vmatmul.mubr.f32.gmra.mxu0 %v2043
    %v3181 = vpop.f32.mrf.mxu0
    %v3182 = vadd.f32 %v3069, %v3181
    %v3183 = vpop.f32.mrf.mxu0
    %v3184 = vadd.f32 %v3071, %v3183
    %3185 = vmatprep.mubr.f32.mxu0 %v2151
    %3186 = vmatmul.mubr.f32.gmra.mxu0 %v2049
    %v3187 = vpop.f32.mrf.mxu0
    %v3188 = vadd.f32 %v3075, %v3187
    %v3189 = vpop.f32.mrf.mxu0
    %v3190 = vadd.f32 %v3077, %v3189
    %3191 = vmatprep.mubr.f32.mxu0 %v2160
    %3192 = vmatmul.mubr.f32.gmra.mxu0 %v2055
    %v3193 = vpop.f32.mrf.mxu0
    %v3194 = vadd.f32 %v3081, %v3193
    %v3195 = vpop.f32.mrf.mxu0
    %v3196 = vadd.f32 %v3083, %v3195
    %3197 = vmatprep.mubr.f32.mxu0 %v2169
    %3198 = vmatmul.mubr.f32.gmra.mxu0 %v2061
    %v3199 = vpop.f32.mrf.mxu0
    %v3200 = vadd.f32 %v3087, %v3199
    %v3201 = vpop.f32.mrf.mxu0
    %v3202 = vadd.f32 %v3089, %v3201
    %3203 = vmatprep.mubr.f32.mxu0 %v2178
    %3204 = vmatmul.mubr.f32.gmra.mxu0 %v2067
    %v3205 = vpop.f32.mrf.mxu0
    %v3206 = vadd.f32 %v3093, %v3205
    %v3207 = vpop.f32.mrf.mxu0
    %v3208 = vadd.f32 %v3095, %v3207
    %3209 = vmatprep.mubr.f32.mxu0 %v2187
    %3210 = vmatmul.mubr.f32.gmra.mxu0 %v2073
    %v3211 = vpop.f32.mrf.mxu0
    %v3212 = vadd.f32 %v3099, %v3211
    %v3213 = vpop.f32.mrf.mxu0
    %v3214 = vadd.f32 %v3101, %v3213
    %3215 = vmatprep.mubr.f32.mxu0 %v2196
    %3216 = vmatmul.mubr.f32.gmra.mxu0 %v2079
    %v3217 = vpop.f32.mrf.mxu0
    %v3218 = vadd.f32 %v3105, %v3217
    %v3219 = vpop.f32.mrf.mxu0
    %v3220 = vadd.f32 %v3107, %v3219
    %3221 = vdwg.mxu0
    %3222 = vmatprep.subr.mxu0 %v2675
    %3223 = vmatpush1.msra.mxu0 %v2674
    %3224 = vmatprep.subr.mxu0 %v2673
    %3225 = vmatpush1.msra.mxu0 %v2672
    %3226 = vmatprep.subr.mxu0 %v2671
    %3227 = vmatpush1.msra.mxu0 %v2670
    %3228 = vmatprep.subr.mxu0 %v2669
    %3229 = vmatpush1.msra.mxu0 %v2668
    %3230 = vmatprep.subr.mxu0 %v2667
    %3231 = vmatpush1.msra.mxu0 %v2666
    %3232 = vmatprep.subr.mxu0 %v2665
    %3233 = vmatpush1.msra.mxu0 %v2664
    %3234 = vmatprep.subr.mxu0 %v2663
    %3235 = vmatpush1.msra.mxu0 %v2662
    %3236 = vmatprep.subr.mxu0 %v2661
    %3237 = vmatpush1.msra.mxu0 %v2660
    %3238 = vmatprep.subr.mxu0 %v2659
    %3239 = vmatpush1.msra.mxu0 %v2658
    %3240 = vmatprep.subr.mxu0 %v2657
    %3241 = vmatpush1.msra.mxu0 %v2656
    %3242 = vmatprep.subr.mxu0 %v2655
    %3243 = vmatpush1.msra.mxu0 %v2654
    %3244 = vmatprep.subr.mxu0 %v2653
    %3245 = vmatpush1.msra.mxu0 %v2652
    %3246 = vmatprep.subr.mxu0 %v2651
    %3247 = vmatpush1.msra.mxu0 %v2650
    %3248 = vmatprep.subr.mxu0 %v2649
    %3249 = vmatpush1.msra.mxu0 %v2648
    %3250 = vmatprep.subr.mxu0 %v2647
    %3251 = vmatpush1.msra.mxu0 %v2646
    %3252 = vmatprep.subr.mxu0 %v2645
    %3253 = vmatpush1.msra.mxu0 %v2644
    %3254 = vmatprep.subr.mxu0 %v2707
    %3255 = vmatpush2.msra.mxu0 %v2706
    %3256 = vmatprep.subr.mxu0 %v2705
    %3257 = vmatpush2.msra.mxu0 %v2704
    %3258 = vmatprep.subr.mxu0 %v2703
    %3259 = vmatpush2.msra.mxu0 %v2702
    %3260 = vmatprep.subr.mxu0 %v2701
    %3261 = vmatpush2.msra.mxu0 %v2700
    %3262 = vmatprep.subr.mxu0 %v2699
    %3263 = vmatpush2.msra.mxu0 %v2698
    %3264 = vmatprep.subr.mxu0 %v2697
    %3265 = vmatpush2.msra.mxu0 %v2696
    %3266 = vmatprep.subr.mxu0 %v2695
    %3267 = vmatpush2.msra.mxu0 %v2694
    %3268 = vmatprep.subr.mxu0 %v2693
    %3269 = vmatpush2.msra.mxu0 %v2692
    %3270 = vmatprep.subr.mxu0 %v2691
    %3271 = vmatpush2.msra.mxu0 %v2690
    %3272 = vmatprep.subr.mxu0 %v2689
    %3273 = vmatpush2.msra.mxu0 %v2688
    %3274 = vmatprep.subr.mxu0 %v2687
    %3275 = vmatpush2.msra.mxu0 %v2686
    %3276 = vmatprep.subr.mxu0 %v2685
    %3277 = vmatpush2.msra.mxu0 %v2684
    %3278 = vmatprep.subr.mxu0 %v2683
    %3279 = vmatpush2.msra.mxu0 %v2682
    %3280 = vmatprep.subr.mxu0 %v2681
    %3281 = vmatpush2.msra.mxu0 %v2680
    %3282 = vmatprep.subr.mxu0 %v2679
    %3283 = vmatpush2.msra.mxu0 %v2678
    %3284 = vmatprep.subr.mxu0 %v2677
    %3285 = vmatpush2.msra.mxu0 %v2676
    %3286 = vmatprep.mubr.f32.mxu0 %v2139
    %3287 = vmatmul.mubr.f32.gmra.mxu0 %v2136
    %v3288 = vpop.f32.mrf.mxu0
    %v3289 = vadd.f32 %v3176, %v3288
    %v3290 = vpop.f32.mrf.mxu0
    %v3291 = vadd.f32 %v3178, %v3290
    %3292 = vmatprep.mubr.f32.mxu0 %v2148
    %3293 = vmatmul.mubr.f32.gmra.mxu0 %v2145
    %v3294 = vpop.f32.mrf.mxu0
    %v3295 = vadd.f32 %v3182, %v3294
    %v3296 = vpop.f32.mrf.mxu0
    %v3297 = vadd.f32 %v3184, %v3296
    %3298 = vmatprep.mubr.f32.mxu0 %v2157
    %3299 = vmatmul.mubr.f32.gmra.mxu0 %v2154
    %v3300 = vpop.f32.mrf.mxu0
    %v3301 = vadd.f32 %v3188, %v3300
    %v3302 = vpop.f32.mrf.mxu0
    %v3303 = vadd.f32 %v3190, %v3302
    %3304 = vmatprep.mubr.f32.mxu0 %v2166
    %3305 = vmatmul.mubr.f32.gmra.mxu0 %v2163
    %v3306 = vpop.f32.mrf.mxu0
    %v3307 = vadd.f32 %v3194, %v3306
    %v3308 = vpop.f32.mrf.mxu0
    %v3309 = vadd.f32 %v3196, %v3308
    %3310 = vmatprep.mubr.f32.mxu0 %v2175
    %3311 = vmatmul.mubr.f32.gmra.mxu0 %v2172
    %v3312 = vpop.f32.mrf.mxu0
    %v3313 = vadd.f32 %v3200, %v3312
    %v3314 = vpop.f32.mrf.mxu0
    %v3315 = vadd.f32 %v3202, %v3314
    %3316 = vmatprep.mubr.f32.mxu0 %v2184
    %3317 = vmatmul.mubr.f32.gmra.mxu0 %v2181
    %v3318 = vpop.f32.mrf.mxu0
    %v3319 = vadd.f32 %v3206, %v3318
    %v3320 = vpop.f32.mrf.mxu0
    %v3321 = vadd.f32 %v3208, %v3320
    %3322 = vmatprep.mubr.f32.mxu0 %v2193
    %3323 = vmatmul.mubr.f32.gmra.mxu0 %v2190
    %v3324 = vpop.f32.mrf.mxu0
    %v3325 = vadd.f32 %v3212, %v3324
    %v3326 = vpop.f32.mrf.mxu0
    %v3327 = vadd.f32 %v3214, %v3326
    %3328 = vmatprep.mubr.f32.mxu0 %v2202
    %3329 = vmatmul.mubr.f32.gmra.mxu0 %v2199
    %v3330 = vpop.f32.mrf.mxu0
    %v3331 = vadd.f32 %v3218, %v3330
    %v3332 = vpop.f32.mrf.mxu0
    %v3333 = vadd.f32 %v3220, %v3332
    %3334 = vdwg.mxu0
    %3335 = vmatprep.subr.mxu0 %v2739
    %3336 = vmatpush1.msra.mxu0 %v2738
    %3337 = vmatprep.subr.mxu0 %v2737
    %3338 = vmatpush1.msra.mxu0 %v2736
    %3339 = vmatprep.subr.mxu0 %v2735
    %3340 = vmatpush1.msra.mxu0 %v2734
    %3341 = vmatprep.subr.mxu0 %v2733
    %3342 = vmatpush1.msra.mxu0 %v2732
    %3343 = vmatprep.subr.mxu0 %v2731
    %3344 = vmatpush1.msra.mxu0 %v2730
    %3345 = vmatprep.subr.mxu0 %v2729
    %3346 = vmatpush1.msra.mxu0 %v2728
    %3347 = vmatprep.subr.mxu0 %v2727
    %3348 = vmatpush1.msra.mxu0 %v2726
    %3349 = vmatprep.subr.mxu0 %v2725
    %3350 = vmatpush1.msra.mxu0 %v2724
    %3351 = vmatprep.subr.mxu0 %v2723
    %3352 = vmatpush1.msra.mxu0 %v2722
    %3353 = vmatprep.subr.mxu0 %v2721
    %3354 = vmatpush1.msra.mxu0 %v2720
    %3355 = vmatprep.subr.mxu0 %v2719
    %3356 = vmatpush1.msra.mxu0 %v2718
    %3357 = vmatprep.subr.mxu0 %v2717
    %3358 = vmatpush1.msra.mxu0 %v2716
    %3359 = vmatprep.subr.mxu0 %v2715
    %3360 = vmatpush1.msra.mxu0 %v2714
    %3361 = vmatprep.subr.mxu0 %v2713
    %3362 = vmatpush1.msra.mxu0 %v2712
    %3363 = vmatprep.subr.mxu0 %v2711
    %3364 = vmatpush1.msra.mxu0 %v2710
    %3365 = vmatprep.subr.mxu0 %v2709
    %3366 = vmatpush1.msra.mxu0 %v2708
    %3367 = vmatprep.subr.mxu0 %v2771
    %3368 = vmatpush2.msra.mxu0 %v2770
    %3369 = vmatprep.subr.mxu0 %v2769
    %3370 = vmatpush2.msra.mxu0 %v2768
    %3371 = vmatprep.subr.mxu0 %v2767
    %3372 = vmatpush2.msra.mxu0 %v2766
    %3373 = vmatprep.subr.mxu0 %v2765
    %3374 = vmatpush2.msra.mxu0 %v2764
    %3375 = vmatprep.subr.mxu0 %v2763
    %3376 = vmatpush2.msra.mxu0 %v2762
    %3377 = vmatprep.subr.mxu0 %v2761
    %3378 = vmatpush2.msra.mxu0 %v2760
    %3379 = vmatprep.subr.mxu0 %v2759
    %3380 = vmatpush2.msra.mxu0 %v2758
    %3381 = vmatprep.subr.mxu0 %v2757
    %3382 = vmatpush2.msra.mxu0 %v2756
    %3383 = vmatprep.subr.mxu0 %v2755
    %3384 = vmatpush2.msra.mxu0 %v2754
    %3385 = vmatprep.subr.mxu0 %v2753
    %3386 = vmatpush2.msra.mxu0 %v2752
    %3387 = vmatprep.subr.mxu0 %v2751
    %3388 = vmatpush2.msra.mxu0 %v2750
    %3389 = vmatprep.subr.mxu0 %v2749
    %3390 = vmatpush2.msra.mxu0 %v2748
    %3391 = vmatprep.subr.mxu0 %v2747
    %3392 = vmatpush2.msra.mxu0 %v2746
    %3393 = vmatprep.subr.mxu0 %v2745
    %3394 = vmatpush2.msra.mxu0 %v2744
    %3395 = vmatprep.subr.mxu0 %v2743
    %3396 = vmatpush2.msra.mxu0 %v2742
    %3397 = vmatprep.subr.mxu0 %v2741
    %3398 = vmatpush2.msra.mxu0 %v2740
    %3399 = vmatprep.mubr.f32.mxu0 %v2232
    %3400 = vmatmul.mubr.f32.gmra.mxu0 %v2229
    %v3401 = vpop.f32.mrf.mxu0
    %v3402 = vadd.f32 %v3289, %v3401
    %v3403 = vpop.f32.mrf.mxu0
    %v3404 = vadd.f32 %v3291, %v3403
    %3405 = vmatprep.mubr.f32.mxu0 %v2241
    %3406 = vmatmul.mubr.f32.gmra.mxu0 %v2238
    %v3407 = vpop.f32.mrf.mxu0
    %v3408 = vadd.f32 %v3295, %v3407
    %v3409 = vpop.f32.mrf.mxu0
    %v3410 = vadd.f32 %v3297, %v3409
    %3411 = vmatprep.mubr.f32.mxu0 %v2250
    %3412 = vmatmul.mubr.f32.gmra.mxu0 %v2247
    %v3413 = vpop.f32.mrf.mxu0
    %v3414 = vadd.f32 %v3301, %v3413
    %v3415 = vpop.f32.mrf.mxu0
    %v3416 = vadd.f32 %v3303, %v3415
    %3417 = vmatprep.mubr.f32.mxu0 %v2259
    %3418 = vmatmul.mubr.f32.gmra.mxu0 %v2256
    %v3419 = vpop.f32.mrf.mxu0
    %v3420 = vadd.f32 %v3307, %v3419
    %v3421 = vpop.f32.mrf.mxu0
    %v3422 = vadd.f32 %v3309, %v3421
    %3423 = vmatprep.mubr.f32.mxu0 %v2268
    %3424 = vmatmul.mubr.f32.gmra.mxu0 %v2265
    %v3425 = vpop.f32.mrf.mxu0
    %v3426 = vadd.f32 %v3313, %v3425
    %v3427 = vpop.f32.mrf.mxu0
    %v3428 = vadd.f32 %v3315, %v3427
    %3429 = vmatprep.mubr.f32.mxu0 %v2277
    %3430 = vmatmul.mubr.f32.gmra.mxu0 %v2274
    %v3431 = vpop.f32.mrf.mxu0
    %v3432 = vadd.f32 %v3319, %v3431
    %v3433 = vpop.f32.mrf.mxu0
    %v3434 = vadd.f32 %v3321, %v3433
    %3435 = vmatprep.mubr.f32.mxu0 %v2286
    %3436 = vmatmul.mubr.f32.gmra.mxu0 %v2283
    %v3437 = vpop.f32.mrf.mxu0
    %v3438 = vadd.f32 %v3325, %v3437
    %v3439 = vpop.f32.mrf.mxu0
    %v3440 = vadd.f32 %v3327, %v3439
    %3441 = vmatprep.mubr.f32.mxu0 %v2295
    %3442 = vmatmul.mubr.f32.gmra.mxu0 %v2292
    %v3443 = vpop.f32.mrf.mxu0
    %v3444 = vadd.f32 %v3331, %v3443
    %v3445 = vpop.f32.mrf.mxu0
    %v3446 = vadd.f32 %v3333, %v3445
    %3447 = vdwg.mxu0
    %3448 = vmatprep.subr.mxu0 %v2803
    %3449 = vmatpush1.msra.mxu0 %v2802
    %3450 = vmatprep.subr.mxu0 %v2801
    %3451 = vmatpush1.msra.mxu0 %v2800
    %3452 = vmatprep.subr.mxu0 %v2799
    %3453 = vmatpush1.msra.mxu0 %v2798
    %3454 = vmatprep.subr.mxu0 %v2797
    %3455 = vmatpush1.msra.mxu0 %v2796
    %3456 = vmatprep.subr.mxu0 %v2795
    %3457 = vmatpush1.msra.mxu0 %v2794
    %3458 = vmatprep.subr.mxu0 %v2793
    %3459 = vmatpush1.msra.mxu0 %v2792
    %3460 = vmatprep.subr.mxu0 %v2791
    %3461 = vmatpush1.msra.mxu0 %v2790
    %3462 = vmatprep.subr.mxu0 %v2789
    %3463 = vmatpush1.msra.mxu0 %v2788
    %3464 = vmatprep.subr.mxu0 %v2787
    %3465 = vmatpush1.msra.mxu0 %v2786
    %3466 = vmatprep.subr.mxu0 %v2785
    %3467 = vmatpush1.msra.mxu0 %v2784
    %3468 = vmatprep.subr.mxu0 %v2783
    %3469 = vmatpush1.msra.mxu0 %v2782
    %3470 = vmatprep.subr.mxu0 %v2781
    %3471 = vmatpush1.msra.mxu0 %v2780
    %3472 = vmatprep.subr.mxu0 %v2779
    %3473 = vmatpush1.msra.mxu0 %v2778
    %3474 = vmatprep.subr.mxu0 %v2777
    %3475 = vmatpush1.msra.mxu0 %v2776
    %3476 = vmatprep.subr.mxu0 %v2775
    %3477 = vmatpush1.msra.mxu0 %v2774
    %3478 = vmatprep.subr.mxu0 %v2773
    %3479 = vmatpush1.msra.mxu0 %v2772
    %3480 = vmatprep.subr.mxu0 %v2835
    %3481 = vmatpush2.msra.mxu0 %v2834
    %3482 = vmatprep.subr.mxu0 %v2833
    %3483 = vmatpush2.msra.mxu0 %v2832
    %3484 = vmatprep.subr.mxu0 %v2831
    %3485 = vmatpush2.msra.mxu0 %v2830
    %3486 = vmatprep.subr.mxu0 %v2829
    %3487 = vmatpush2.msra.mxu0 %v2828
    %3488 = vmatprep.subr.mxu0 %v2827
    %3489 = vmatpush2.msra.mxu0 %v2826
    %3490 = vmatprep.subr.mxu0 %v2825
    %3491 = vmatpush2.msra.mxu0 %v2824
    %3492 = vmatprep.subr.mxu0 %v2823
    %3493 = vmatpush2.msra.mxu0 %v2822
    %3494 = vmatprep.subr.mxu0 %v2821
    %3495 = vmatpush2.msra.mxu0 %v2820
    %3496 = vmatprep.subr.mxu0 %v2819
    %3497 = vmatpush2.msra.mxu0 %v2818
    %3498 = vmatprep.subr.mxu0 %v2817
    %3499 = vmatpush2.msra.mxu0 %v2816
    %3500 = vmatprep.subr.mxu0 %v2815
    %3501 = vmatpush2.msra.mxu0 %v2814
    %3502 = vmatprep.subr.mxu0 %v2813
    %3503 = vmatpush2.msra.mxu0 %v2812
    %3504 = vmatprep.subr.mxu0 %v2811
    %3505 = vmatpush2.msra.mxu0 %v2810
    %3506 = vmatprep.subr.mxu0 %v2809
    %3507 = vmatpush2.msra.mxu0 %v2808
    %3508 = vmatprep.subr.mxu0 %v2807
    %3509 = vmatpush2.msra.mxu0 %v2806
    %3510 = vmatprep.subr.mxu0 %v2805
    %3511 = vmatpush2.msra.mxu0 %v2804
    %3512 = vmatprep.mubr.f32.mxu0 %v2326
    %3513 = vmatmul.mubr.f32.gmra.mxu0 %v2235
    %v3514 = vpop.f32.mrf.mxu0
    %v3515 = vadd.f32 %v3402, %v3514
    %v3516 = vpop.f32.mrf.mxu0
    %v3517 = vadd.f32 %v3404, %v3516
    %3518 = vmatprep.mubr.f32.mxu0 %v2335
    %3519 = vmatmul.mubr.f32.gmra.mxu0 %v2244
    %v3520 = vpop.f32.mrf.mxu0
    %v3521 = vadd.f32 %v3408, %v3520
    %v3522 = vpop.f32.mrf.mxu0
    %v3523 = vadd.f32 %v3410, %v3522
    %3524 = vmatprep.mubr.f32.mxu0 %v2344
    %3525 = vmatmul.mubr.f32.gmra.mxu0 %v2253
    %v3526 = vpop.f32.mrf.mxu0
    %v3527 = vadd.f32 %v3414, %v3526
    %v3528 = vpop.f32.mrf.mxu0
    %v3529 = vadd.f32 %v3416, %v3528
    %3530 = vmatprep.mubr.f32.mxu0 %v2353
    %3531 = vmatmul.mubr.f32.gmra.mxu0 %v2262
    %v3532 = vpop.f32.mrf.mxu0
    %v3533 = vadd.f32 %v3420, %v3532
    %v3534 = vpop.f32.mrf.mxu0
    %v3535 = vadd.f32 %v3422, %v3534
    %3536 = vmatprep.mubr.f32.mxu0 %v2362
    %3537 = vmatmul.mubr.f32.gmra.mxu0 %v2271
    %v3538 = vpop.f32.mrf.mxu0
    %v3539 = vadd.f32 %v3426, %v3538
    %v3540 = vpop.f32.mrf.mxu0
    %v3541 = vadd.f32 %v3428, %v3540
    %3542 = vmatprep.mubr.f32.mxu0 %v2371
    %3543 = vmatmul.mubr.f32.gmra.mxu0 %v2280
    %v3544 = vpop.f32.mrf.mxu0
    %v3545 = vadd.f32 %v3432, %v3544
    %v3546 = vpop.f32.mrf.mxu0
    %v3547 = vadd.f32 %v3434, %v3546
    %3548 = vmatprep.mubr.f32.mxu0 %v2380
    %3549 = vmatmul.mubr.f32.gmra.mxu0 %v2289
    %v3550 = vpop.f32.mrf.mxu0
    %v3551 = vadd.f32 %v3438, %v3550
    %v3552 = vpop.f32.mrf.mxu0
    %v3553 = vadd.f32 %v3440, %v3552
    %3554 = vmatprep.mubr.f32.mxu0 %v2389
    %3555 = vmatmul.mubr.f32.gmra.mxu0 %v2298
    %v3556 = vpop.f32.mrf.mxu0
    %v3557 = vadd.f32 %v3444, %v3556
    %v3558 = vpop.f32.mrf.mxu0
    %v3559 = vadd.f32 %v3446, %v3558
    %3560 = vdwg.mxu0
    %3561 = vmatprep.subr.mxu0 %v2867
    %3562 = vmatpush1.msra.mxu0 %v2866
    %3563 = vmatprep.subr.mxu0 %v2865
    %3564 = vmatpush1.msra.mxu0 %v2864
    %3565 = vmatprep.subr.mxu0 %v2863
    %3566 = vmatpush1.msra.mxu0 %v2862
    %3567 = vmatprep.subr.mxu0 %v2861
    %3568 = vmatpush1.msra.mxu0 %v2860
    %3569 = vmatprep.subr.mxu0 %v2859
    %3570 = vmatpush1.msra.mxu0 %v2858
    %3571 = vmatprep.subr.mxu0 %v2857
    %3572 = vmatpush1.msra.mxu0 %v2856
    %3573 = vmatprep.subr.mxu0 %v2855
    %3574 = vmatpush1.msra.mxu0 %v2854
    %3575 = vmatprep.subr.mxu0 %v2853
    %3576 = vmatpush1.msra.mxu0 %v2852
    %3577 = vmatprep.subr.mxu0 %v2851
    %3578 = vmatpush1.msra.mxu0 %v2850
    %3579 = vmatprep.subr.mxu0 %v2849
    %3580 = vmatpush1.msra.mxu0 %v2848
    %3581 = vmatprep.subr.mxu0 %v2847
    %3582 = vmatpush1.msra.mxu0 %v2846
    %3583 = vmatprep.subr.mxu0 %v2845
    %3584 = vmatpush1.msra.mxu0 %v2844
    %3585 = vmatprep.subr.mxu0 %v2843
    %3586 = vmatpush1.msra.mxu0 %v2842
    %3587 = vmatprep.subr.mxu0 %v2841
    %3588 = vmatpush1.msra.mxu0 %v2840
    %3589 = vmatprep.subr.mxu0 %v2839
    %3590 = vmatpush1.msra.mxu0 %v2838
    %3591 = vmatprep.subr.mxu0 %v2837
    %3592 = vmatpush1.msra.mxu0 %v2836
    %3593 = vmatprep.subr.mxu0 %v2899
    %3594 = vmatpush2.msra.mxu0 %v2898
    %3595 = vmatprep.subr.mxu0 %v2897
    %3596 = vmatpush2.msra.mxu0 %v2896
    %3597 = vmatprep.subr.mxu0 %v2895
    %3598 = vmatpush2.msra.mxu0 %v2894
    %3599 = vmatprep.subr.mxu0 %v2893
    %3600 = vmatpush2.msra.mxu0 %v2892
    %3601 = vmatprep.subr.mxu0 %v2891
    %3602 = vmatpush2.msra.mxu0 %v2890
    %3603 = vmatprep.subr.mxu0 %v2889
    %3604 = vmatpush2.msra.mxu0 %v2888
    %3605 = vmatprep.subr.mxu0 %v2887
    %3606 = vmatpush2.msra.mxu0 %v2886
    %3607 = vmatprep.subr.mxu0 %v2885
    %3608 = vmatpush2.msra.mxu0 %v2884
    %3609 = vmatprep.subr.mxu0 %v2883
    %3610 = vmatpush2.msra.mxu0 %v2882
    %3611 = vmatprep.subr.mxu0 %v2881
    %3612 = vmatpush2.msra.mxu0 %v2880
    %3613 = vmatprep.subr.mxu0 %v2879
    %3614 = vmatpush2.msra.mxu0 %v2878
    %3615 = vmatprep.subr.mxu0 %v2877
    %3616 = vmatpush2.msra.mxu0 %v2876
    %3617 = vmatprep.subr.mxu0 %v2875
    %3618 = vmatpush2.msra.mxu0 %v2874
    %3619 = vmatprep.subr.mxu0 %v2873
    %3620 = vmatpush2.msra.mxu0 %v2872
    %3621 = vmatprep.subr.mxu0 %v2871
    %3622 = vmatpush2.msra.mxu0 %v2870
    %3623 = vmatprep.subr.mxu0 %v2869
    %3624 = vmatpush2.msra.mxu0 %v2868
    %3625 = vmatprep.mubr.f32.mxu0 %v2332
    %3626 = vmatmul.mubr.f32.gmra.mxu0 %v2329
    %v3627 = vpop.f32.mrf.mxu0
    %v3628 = vadd.f32 %v3515, %v3627
    %v3629 = vpop.f32.mrf.mxu0
    %v3630 = vadd.f32 %v3517, %v3629
    %3631 = vmatprep.mubr.f32.mxu0 %v2341
    %3632 = vmatmul.mubr.f32.gmra.mxu0 %v2338
    %v3633 = vpop.f32.mrf.mxu0
    %v3634 = vadd.f32 %v3521, %v3633
    %v3635 = vpop.f32.mrf.mxu0
    %v3636 = vadd.f32 %v3523, %v3635
    %3637 = vmatprep.mubr.f32.mxu0 %v2350
    %3638 = vmatmul.mubr.f32.gmra.mxu0 %v2347
    %v3639 = vpop.f32.mrf.mxu0
    %v3640 = vadd.f32 %v3527, %v3639
    %v3641 = vpop.f32.mrf.mxu0
    %v3642 = vadd.f32 %v3529, %v3641
    %3643 = vmatprep.mubr.f32.mxu0 %v2359
    %3644 = vmatmul.mubr.f32.gmra.mxu0 %v2356
    %v3645 = vpop.f32.mrf.mxu0
    %v3646 = vadd.f32 %v3533, %v3645
    %v3647 = vpop.f32.mrf.mxu0
    %v3648 = vadd.f32 %v3535, %v3647
    %3649 = vmatprep.mubr.f32.mxu0 %v2368
    %3650 = vmatmul.mubr.f32.gmra.mxu0 %v2365
    %v3651 = vpop.f32.mrf.mxu0
    %v3652 = vadd.f32 %v3539, %v3651
    %v3653 = vpop.f32.mrf.mxu0
    %v3654 = vadd.f32 %v3541, %v3653
    %3655 = vmatprep.mubr.f32.mxu0 %v2377
    %3656 = vmatmul.mubr.f32.gmra.mxu0 %v2374
    %v3657 = vpop.f32.mrf.mxu0
    %v3658 = vadd.f32 %v3545, %v3657
    %v3659 = vpop.f32.mrf.mxu0
    %v3660 = vadd.f32 %v3547, %v3659
    %3661 = vmatprep.mubr.f32.mxu0 %v2386
    %3662 = vmatmul.mubr.f32.gmra.mxu0 %v2383
    %v3663 = vpop.f32.mrf.mxu0
    %v3664 = vadd.f32 %v3551, %v3663
    %v3665 = vpop.f32.mrf.mxu0
    %v3666 = vadd.f32 %v3553, %v3665
    %3667 = vmatprep.mubr.f32.mxu0 %v2395
    %3668 = vmatmul.mubr.f32.gmra.mxu0 %v2392
    %v3669 = vpop.f32.mrf.mxu0
    %v3670 = vadd.f32 %v3557, %v3669
    %v3671 = vpop.f32.mrf.mxu0
    %v3672 = vadd.f32 %v3559, %v3671
    %3673 = vdwg.mxu0
    %3674 = vmatprep.subr.mxu0 %v2931
    %3675 = vmatpush1.msra.mxu0 %v2930
    %3676 = vmatprep.subr.mxu0 %v2929
    %3677 = vmatpush1.msra.mxu0 %v2928
    %3678 = vmatprep.subr.mxu0 %v2927
    %3679 = vmatpush1.msra.mxu0 %v2926
    %3680 = vmatprep.subr.mxu0 %v2925
    %3681 = vmatpush1.msra.mxu0 %v2924
    %3682 = vmatprep.subr.mxu0 %v2923
    %3683 = vmatpush1.msra.mxu0 %v2922
    %3684 = vmatprep.subr.mxu0 %v2921
    %3685 = vmatpush1.msra.mxu0 %v2920
    %3686 = vmatprep.subr.mxu0 %v2919
    %3687 = vmatpush1.msra.mxu0 %v2918
    %3688 = vmatprep.subr.mxu0 %v2917
    %3689 = vmatpush1.msra.mxu0 %v2916
    %3690 = vmatprep.subr.mxu0 %v2915
    %3691 = vmatpush1.msra.mxu0 %v2914
    %3692 = vmatprep.subr.mxu0 %v2913
    %3693 = vmatpush1.msra.mxu0 %v2912
    %3694 = vmatprep.subr.mxu0 %v2911
    %3695 = vmatpush1.msra.mxu0 %v2910
    %3696 = vmatprep.subr.mxu0 %v2909
    %3697 = vmatpush1.msra.mxu0 %v2908
    %3698 = vmatprep.subr.mxu0 %v2907
    %3699 = vmatpush1.msra.mxu0 %v2906
    %3700 = vmatprep.subr.mxu0 %v2905
    %3701 = vmatpush1.msra.mxu0 %v2904
    %3702 = vmatprep.subr.mxu0 %v2903
    %3703 = vmatpush1.msra.mxu0 %v2902
    %3704 = vmatprep.subr.mxu0 %v2901
    %3705 = vmatpush1.msra.mxu0 %v2900
    %3706 = vmatprep.subr.mxu0 %v2963
    %3707 = vmatpush2.msra.mxu0 %v2962
    %3708 = vmatprep.subr.mxu0 %v2961
    %3709 = vmatpush2.msra.mxu0 %v2960
    %3710 = vmatprep.subr.mxu0 %v2959
    %3711 = vmatpush2.msra.mxu0 %v2958
    %3712 = vmatprep.subr.mxu0 %v2957
    %3713 = vmatpush2.msra.mxu0 %v2956
    %3714 = vmatprep.subr.mxu0 %v2955
    %3715 = vmatpush2.msra.mxu0 %v2954
    %3716 = vmatprep.subr.mxu0 %v2953
    %3717 = vmatpush2.msra.mxu0 %v2952
    %3718 = vmatprep.subr.mxu0 %v2951
    %3719 = vmatpush2.msra.mxu0 %v2950
    %3720 = vmatprep.subr.mxu0 %v2949
    %3721 = vmatpush2.msra.mxu0 %v2948
    %3722 = vmatprep.subr.mxu0 %v2947
    %3723 = vmatpush2.msra.mxu0 %v2946
    %3724 = vmatprep.subr.mxu0 %v2945
    %3725 = vmatpush2.msra.mxu0 %v2944
    %3726 = vmatprep.subr.mxu0 %v2943
    %3727 = vmatpush2.msra.mxu0 %v2942
    %3728 = vmatprep.subr.mxu0 %v2941
    %3729 = vmatpush2.msra.mxu0 %v2940
    %3730 = vmatprep.subr.mxu0 %v2939
    %3731 = vmatpush2.msra.mxu0 %v2938
    %3732 = vmatprep.subr.mxu0 %v2937
    %3733 = vmatpush2.msra.mxu0 %v2936
    %3734 = vmatprep.subr.mxu0 %v2935
    %3735 = vmatpush2.msra.mxu0 %v2934
    %3736 = vmatprep.subr.mxu0 %v2933
    %3737 = vmatpush2.msra.mxu0 %v2932
    %3738 = vmatprep.mubr.f32.mxu0 %v2425
    %3739 = vmatmul.mubr.f32.gmra.mxu0 %v2422
    %v3740 = vpop.f32.mrf.mxu0
    %v3741 = vadd.f32 %v3628, %v3740
    %v3742 = vpop.f32.mrf.mxu0
    %v3743 = vadd.f32 %v3630, %v3742
    %3744 = vmatprep.mubr.f32.mxu0 %v2434
    %3745 = vmatmul.mubr.f32.gmra.mxu0 %v2431
    %v3746 = vpop.f32.mrf.mxu0
    %v3747 = vadd.f32 %v3634, %v3746
    %v3748 = vpop.f32.mrf.mxu0
    %v3749 = vadd.f32 %v3636, %v3748
    %3750 = vmatprep.mubr.f32.mxu0 %v2443
    %3751 = vmatmul.mubr.f32.gmra.mxu0 %v2440
    %v3752 = vpop.f32.mrf.mxu0
    %v3753 = vadd.f32 %v3640, %v3752
    %v3754 = vpop.f32.mrf.mxu0
    %v3755 = vadd.f32 %v3642, %v3754
    %3756 = vmatprep.mubr.f32.mxu0 %v2452
    %3757 = vmatmul.mubr.f32.gmra.mxu0 %v2449
    %v3758 = vpop.f32.mrf.mxu0
    %v3759 = vadd.f32 %v3646, %v3758
    %v3760 = vpop.f32.mrf.mxu0
    %v3761 = vadd.f32 %v3648, %v3760
    %3762 = vmatprep.mubr.f32.mxu0 %v2461
    %3763 = vmatmul.mubr.f32.gmra.mxu0 %v2458
    %v3764 = vpop.f32.mrf.mxu0
    %v3765 = vadd.f32 %v3652, %v3764
    %v3766 = vpop.f32.mrf.mxu0
    %v3767 = vadd.f32 %v3654, %v3766
    %3768 = vmatprep.mubr.f32.mxu0 %v2470
    %3769 = vmatmul.mubr.f32.gmra.mxu0 %v2467
    %v3770 = vpop.f32.mrf.mxu0
    %v3771 = vadd.f32 %v3658, %v3770
    %v3772 = vpop.f32.mrf.mxu0
    %v3773 = vadd.f32 %v3660, %v3772
    %3774 = vmatprep.mubr.f32.mxu0 %v2479
    %3775 = vmatmul.mubr.f32.gmra.mxu0 %v2476
    %v3776 = vpop.f32.mrf.mxu0
    %v3777 = vadd.f32 %v3664, %v3776
    %v3778 = vpop.f32.mrf.mxu0
    %v3779 = vadd.f32 %v3666, %v3778
    %3780 = vmatprep.mubr.f32.mxu0 %v2488
    %3781 = vmatmul.mubr.f32.gmra.mxu0 %v2485
    %v3782 = vpop.f32.mrf.mxu0
    %v3783 = vadd.f32 %v3670, %v3782
    %v3784 = vpop.f32.mrf.mxu0
    %v3785 = vadd.f32 %v3672, %v3784
    %3786 = vdwg.mxu0
    %3787 = vmatprep.subr.mxu0 %v2995
    %3788 = vmatpush1.msra.mxu0 %v2994
    %3789 = vmatprep.subr.mxu0 %v2993
    %3790 = vmatpush1.msra.mxu0 %v2992
    %3791 = vmatprep.subr.mxu0 %v2991
    %3792 = vmatpush1.msra.mxu0 %v2990
    %3793 = vmatprep.subr.mxu0 %v2989
    %3794 = vmatpush1.msra.mxu0 %v2988
    %3795 = vmatprep.subr.mxu0 %v2987
    %3796 = vmatpush1.msra.mxu0 %v2986
    %3797 = vmatprep.subr.mxu0 %v2985
    %3798 = vmatpush1.msra.mxu0 %v2984
    %3799 = vmatprep.subr.mxu0 %v2983
    %3800 = vmatpush1.msra.mxu0 %v2982
    %3801 = vmatprep.subr.mxu0 %v2981
    %3802 = vmatpush1.msra.mxu0 %v2980
    %3803 = vmatprep.subr.mxu0 %v2979
    %3804 = vmatpush1.msra.mxu0 %v2978
    %3805 = vmatprep.subr.mxu0 %v2977
    %3806 = vmatpush1.msra.mxu0 %v2976
    %3807 = vmatprep.subr.mxu0 %v2975
    %3808 = vmatpush1.msra.mxu0 %v2974
    %3809 = vmatprep.subr.mxu0 %v2973
    %3810 = vmatpush1.msra.mxu0 %v2972
    %3811 = vmatprep.subr.mxu0 %v2971
    %3812 = vmatpush1.msra.mxu0 %v2970
    %3813 = vmatprep.subr.mxu0 %v2969
    %3814 = vmatpush1.msra.mxu0 %v2968
    %3815 = vmatprep.subr.mxu0 %v2967
    %3816 = vmatpush1.msra.mxu0 %v2966
    %3817 = vmatprep.subr.mxu0 %v2965
    %3818 = vmatpush1.msra.mxu0 %v2964
    %3819 = vmatprep.subr.mxu0 0.0
    %3820 = vmatpush2.msra.mxu0 0.0
    %3821 = vmatprep.subr.mxu0 0.0
    %3822 = vmatpush2.msra.mxu0 0.0
    %3823 = vmatprep.subr.mxu0 0.0
    %3824 = vmatpush2.msra.mxu0 0.0
    %3825 = vmatprep.subr.mxu0 0.0
    %3826 = vmatpush2.msra.mxu0 0.0
    %3827 = vmatprep.subr.mxu0 0.0
    %3828 = vmatpush2.msra.mxu0 0.0
    %3829 = vmatprep.subr.mxu0 0.0
    %3830 = vmatpush2.msra.mxu0 0.0
    %3831 = vmatprep.subr.mxu0 0.0
    %3832 = vmatpush2.msra.mxu0 0.0
    %3833 = vmatprep.subr.mxu0 0.0
    %3834 = vmatpush2.msra.mxu0 0.0
    %3835 = vmatprep.subr.mxu0 0.0
    %3836 = vmatpush2.msra.mxu0 0.0
    %3837 = vmatprep.subr.mxu0 0.0
    %3838 = vmatpush2.msra.mxu0 0.0
    %3839 = vmatprep.subr.mxu0 0.0
    %3840 = vmatpush2.msra.mxu0 0.0
    %3841 = vmatprep.subr.mxu0 0.0
    %3842 = vmatpush2.msra.mxu0 0.0
    %3843 = vmatprep.subr.mxu0 0.0
    %3844 = vmatpush2.msra.mxu0 0.0
    %3845 = vmatprep.subr.mxu0 0.0
    %3846 = vmatpush2.msra.mxu0 0.0
    %3847 = vmatprep.subr.mxu0 0.0
    %3848 = vmatpush2.msra.mxu0 0.0
    %3849 = vmatprep.subr.mxu0 0.0
    %3850 = vmatpush2.msra.mxu0 0.0
    %3851 = vmatprep.mubr.f32.mxu0 0.0
    %3852 = vmatmul.mubr.f32.gmra.mxu0 %v2428
    %v3853 = vpop.f32.mrf.mxu0
    %v3854 = vadd.f32 %v3741, %v3853
    %v3855 = vpop.f32.mrf.mxu0
    %v3856 = vadd.f32 %v3743, %v3855
    %3857 = vmatprep.mubr.f32.mxu0 0.0
    %3858 = vmatmul.mubr.f32.gmra.mxu0 %v2437
    %v3859 = vpop.f32.mrf.mxu0
    %v3860 = vadd.f32 %v3747, %v3859
    %v3861 = vpop.f32.mrf.mxu0
    %v3862 = vadd.f32 %v3749, %v3861
    %3863 = vmatprep.mubr.f32.mxu0 0.0
    %3864 = vmatmul.mubr.f32.gmra.mxu0 %v2446
    %v3865 = vpop.f32.mrf.mxu0
    %v3866 = vadd.f32 %v3753, %v3865
    %v3867 = vpop.f32.mrf.mxu0
    %v3868 = vadd.f32 %v3755, %v3867
    %3869 = vmatprep.mubr.f32.mxu0 0.0
    %3870 = vmatmul.mubr.f32.gmra.mxu0 %v2455
    %v3871 = vpop.f32.mrf.mxu0
    %v3872 = vadd.f32 %v3759, %v3871
    %v3873 = vpop.f32.mrf.mxu0
    %v3874 = vadd.f32 %v3761, %v3873
    %3875 = vmatprep.mubr.f32.mxu0 0.0
    %3876 = vmatmul.mubr.f32.gmra.mxu0 %v2464
    %v3877 = vpop.f32.mrf.mxu0
    %v3878 = vadd.f32 %v3765, %v3877
    %v3879 = vpop.f32.mrf.mxu0
    %v3880 = vadd.f32 %v3767, %v3879
    %3881 = vmatprep.mubr.f32.mxu0 0.0
    %3882 = vmatmul.mubr.f32.gmra.mxu0 %v2473
    %v3883 = vpop.f32.mrf.mxu0
    %v3884 = vadd.f32 %v3771, %v3883
    %v3885 = vpop.f32.mrf.mxu0
    %v3886 = vadd.f32 %v3773, %v3885
    %3887 = vmatprep.mubr.f32.mxu0 0.0
    %3888 = vmatmul.mubr.f32.gmra.mxu0 %v2482
    %v3889 = vpop.f32.mrf.mxu0
    %v3890 = vadd.f32 %v3777, %v3889
    %v3891 = vpop.f32.mrf.mxu0
    %v3892 = vadd.f32 %v3779, %v3891
    %3893 = vmatprep.mubr.f32.mxu0 0.0
    %3894 = vmatmul.mubr.f32.gmra.mxu0 %v2491
    %v3895 = vpop.f32.mrf.mxu0
    %v3896 = vadd.f32 %v3783, %v3895
    %v3897 = vpop.f32.mrf.mxu0
    %v3898 = vadd.f32 %v3785, %v3897
    %3899 = vdwg.mxu0
    %v3916 = vrot.slane %v3854, 1
    %v3917 = vrot.slane %v3856, 1
    %v3918 = vrot.slane %v3860, 1
    %v3919 = vrot.slane %v3862, 1
    %v3920 = vrot.slane %v3866, 1
    %v3921 = vrot.slane %v3868, 1
    %v3922 = vrot.slane %v3872, 1
    %v3923 = vrot.slane %v3874, 1
    %v3924 = vrot.slane %v3878, 1
    %v3925 = vrot.slane %v3880, 1
    %v3926 = vrot.slane %v3884, 1
    %v3927 = vrot.slane %v3886, 1
    %v3928 = vrot.slane %v3890, 1
    %v3929 = vrot.slane %v3892, 1
    %v3930 = vrot.slane %v3896, 1
    %v3931 = vrot.slane %v3898, 1
    %v3948 = vmax.f32 %v3854, %v3916
    %v3949 = vmax.f32 %v3856, %v3917
    %v3950 = vmax.f32 %v3860, %v3918
    %v3951 = vmax.f32 %v3862, %v3919
    %v3952 = vmax.f32 %v3866, %v3920
    %v3953 = vmax.f32 %v3868, %v3921
    %v3954 = vmax.f32 %v3872, %v3922
    %v3955 = vmax.f32 %v3874, %v3923
    %v3956 = vmax.f32 %v3878, %v3924
    %v3957 = vmax.f32 %v3880, %v3925
    %v3958 = vmax.f32 %v3884, %v3926
    %v3959 = vmax.f32 %v3886, %v3927
    %v3960 = vmax.f32 %v3890, %v3928
    %v3961 = vmax.f32 %v3892, %v3929
    %v3962 = vmax.f32 %v3896, %v3930
    %v3963 = vmax.f32 %v3898, %v3931
    %3980 = vrot.lane.b32.xlu0 %v3948, 96
    %v3981 = vpop.permute.xlu0 %3980
    %3982 = vrot.lane.b32.xlu0 %v3949, 96
    %v3983 = vpop.permute.xlu0 %3982
    %3984 = vrot.lane.b32.xlu0 %v3950, 96
    %v3985 = vpop.permute.xlu0 %3984
    %3986 = vrot.lane.b32.xlu0 %v3951, 96
    %v3987 = vpop.permute.xlu0 %3986
    %3988 = vrot.lane.b32.xlu0 %v3952, 96
    %v3989 = vpop.permute.xlu0 %3988
    %3990 = vrot.lane.b32.xlu0 %v3953, 96
    %v3991 = vpop.permute.xlu0 %3990
    %3992 = vrot.lane.b32.xlu0 %v3954, 96
    %v3993 = vpop.permute.xlu0 %3992
    %3994 = vrot.lane.b32.xlu0 %v3955, 96
    %v3995 = vpop.permute.xlu0 %3994
    %3996 = vrot.lane.b32.xlu0 %v3956, 96
    %v3997 = vpop.permute.xlu0 %3996
    %3998 = vrot.lane.b32.xlu0 %v3957, 96
    %v3999 = vpop.permute.xlu0 %3998
    %4000 = vrot.lane.b32.xlu0 %v3958, 96
    %v4001 = vpop.permute.xlu0 %4000
    %4002 = vrot.lane.b32.xlu0 %v3959, 96
    %v4003 = vpop.permute.xlu0 %4002
    %4004 = vrot.lane.b32.xlu0 %v3960, 96
    %v4005 = vpop.permute.xlu0 %4004
    %4006 = vrot.lane.b32.xlu0 %v3961, 96
    %v4007 = vpop.permute.xlu0 %4006
    %4008 = vrot.lane.b32.xlu0 %v3962, 96
    %v4009 = vpop.permute.xlu0 %4008
    %4010 = vrot.lane.b32.xlu0 %v3963, 96
    %v4011 = vpop.permute.xlu0 %4010
    %vm4012 = vcmask 785408
    %v4013 = vsel %vm4012, %v3981, %v3983
    %v4014 = vsel %vm4012, %v3985, %v3987
    %v4015 = vsel %vm4012, %v3989, %v3991
    %v4016 = vsel %vm4012, %v3993, %v3995
    %v4017 = vsel %vm4012, %v3997, %v3999
    %v4018 = vsel %vm4012, %v4001, %v4003
    %v4019 = vsel %vm4012, %v4005, %v4007
    %v4020 = vsel %vm4012, %v4009, %v4011
    %v4037 = vmax.f32 %v3948, %v4013
    %v4038 = vmax.f32 %v3949, %v3983
    %v4039 = vmax.f32 %v3950, %v4014
    %v4040 = vmax.f32 %v3951, %v3987
    %v4041 = vmax.f32 %v3952, %v4015
    %v4042 = vmax.f32 %v3953, %v3991
    %v4043 = vmax.f32 %v3954, %v4016
    %v4044 = vmax.f32 %v3955, %v3995
    %v4045 = vmax.f32 %v3956, %v4017
    %v4046 = vmax.f32 %v3957, %v3999
    %v4047 = vmax.f32 %v3958, %v4018
    %v4048 = vmax.f32 %v3959, %v4003
    %v4049 = vmax.f32 %v3960, %v4019
    %v4050 = vmax.f32 %v3961, %v4007
    %v4051 = vmax.f32 %v3962, %v4020
    %v4052 = vmax.f32 %v3963, %v4011
    %v4053 = vld [vmem:[#allocation8] sm:$0x3]
    %v4055 = vlaneseq
    %v4056 = vshrl.u32 %v4055, 7
    %v4057 = vsub.s32 0, %v4056
    %v4058 = vrot.slane %v4053, %v4057
    %v4059 = vlaneseq
    %v4060 = vshrl.u32 %v4059, 7
    %v4061 = vsub.s32 1, %v4060
    %v4062 = vrot.slane %v4053, %v4061
    %v4065 = vadd.f32 %v4037, %v4058
    %v4066 = vadd.f32 %v4038, %v4062
    %v4067 = vadd.f32 %v4039, %v4058
    %v4068 = vadd.f32 %v4040, %v4062
    %v4069 = vadd.f32 %v4041, %v4058
    %v4070 = vadd.f32 %v4042, %v4062
    %v4071 = vadd.f32 %v4043, %v4058
    %v4072 = vadd.f32 %v4044, %v4062
    %v4073 = vadd.f32 %v4045, %v4058
    %v4074 = vadd.f32 %v4046, %v4062
    %v4075 = vadd.f32 %v4047, %v4058
    %v4076 = vadd.f32 %v4048, %v4062
    %v4077 = vadd.f32 %v4049, %v4058
    %v4078 = vadd.f32 %v4050, %v4062
    %v4079 = vadd.f32 %v4051, %v4058
    %v4080 = vadd.f32 %v4052, %v4062
    %v4081 = vmax.f32 %v4065, 0.0
    %v4082 = vmax.f32 %v4066, 0.0
    %v4083 = vmax.f32 %v4067, 0.0
    %v4084 = vmax.f32 %v4068, 0.0
    %v4085 = vmax.f32 %v4069, 0.0
    %v4086 = vmax.f32 %v4070, 0.0
    %v4087 = vmax.f32 %v4071, 0.0
    %v4088 = vmax.f32 %v4072, 0.0
    %v4089 = vmax.f32 %v4073, 0.0
    %v4090 = vmax.f32 %v4074, 0.0
    %v4091 = vmax.f32 %v4075, 0.0
    %v4092 = vmax.f32 %v4076, 0.0
    %v4093 = vmax.f32 %v4077, 0.0
    %v4094 = vmax.f32 %v4078, 0.0
    %v4095 = vmax.f32 %v4079, 0.0
    %v4096 = vmax.f32 %v4080, 0.0
    %v4113 = vrot.slane %v4083, 7
    %vm4114 = vcmask 1041409
    %v4115 = vsel %vm4114, %v4113, %v4081
    %v4116 = vrot.slane %v4085, 6
    %vm4117 = vcmask 1042434
    %v4118 = vsel %vm4117, %v4116, %v4115
    %v4119 = vrot.slane %v4087, 5
    %vm4120 = vcmask 1043459
    %v4121 = vsel %vm4120, %v4119, %v4118
    %v4122 = vrot.slane %v4089, 4
    %vm4123 = vcmask 1044484
    %v4124 = vsel %vm4123, %v4122, %v4121
    %v4125 = vrot.slane %v4091, 3
    %vm4126 = vcmask 1045509
    %v4127 = vsel %vm4126, %v4125, %v4124
    %v4128 = vrot.slane %v4093, 2
    %vm4129 = vcmask 1046534
    %v4130 = vsel %vm4129, %v4128, %v4127
    %v4131 = vrot.slane %v4095, 1
    %vm4132 = vcmask 1047559
    %v4133 = vsel %vm4132, %v4131, %v4130
    %v4134 = vrot.slane %v4084, 7
    %v4135 = vsel %vm4114, %v4134, %v4082
    %v4136 = vrot.slane %v4086, 6
    %v4137 = vsel %vm4117, %v4136, %v4135
    %v4138 = vrot.slane %v4088, 5
    %v4139 = vsel %vm4120, %v4138, %v4137
    %v4140 = vrot.slane %v4090, 4
    %v4141 = vsel %vm4123, %v4140, %v4139
    %v4142 = vrot.slane %v4092, 3
    %v4143 = vsel %vm4126, %v4142, %v4141
    %v4144 = vrot.slane %v4094, 2
    %v4145 = vsel %vm4129, %v4144, %v4143
    %v4146 = vrot.slane %v4096, 1
    %v4147 = vsel %vm4132, %v4146, %v4145
    %v4150 = vrot.slane %v4081, 2
    %v4151 = vrot.slane %v4083, 1
    %v4152 = vsel %vm4114, %v4151, %v4150
    %v4153 = vsel %vm4117, %v4085, %v4152
    %v4154 = vrot.slane %v4087, 7
    %v4155 = vsel %vm4120, %v4154, %v4153
    %v4156 = vrot.slane %v4089, 6
    %v4157 = vsel %vm4123, %v4156, %v4155
    %v4158 = vrot.slane %v4091, 5
    %v4159 = vsel %vm4126, %v4158, %v4157
    %v4160 = vrot.slane %v4093, 4
    %v4161 = vsel %vm4129, %v4160, %v4159
    %v4162 = vrot.slane %v4095, 3
    %v4163 = vsel %vm4132, %v4162, %v4161
    %v4164 = vrot.slane %v4082, 2
    %v4165 = vrot.slane %v4084, 1
    %v4166 = vsel %vm4114, %v4165, %v4164
    %v4167 = vsel %vm4117, %v4086, %v4166
    %v4168 = vrot.slane %v4088, 7
    %v4169 = vsel %vm4120, %v4168, %v4167
    %v4170 = vrot.slane %v4090, 6
    %v4171 = vsel %vm4123, %v4170, %v4169
    %v4172 = vrot.slane %v4092, 5
    %v4173 = vsel %vm4126, %v4172, %v4171
    %v4174 = vrot.slane %v4094, 4
    %v4175 = vsel %vm4129, %v4174, %v4173
    %v4176 = vrot.slane %v4096, 3
    %v4177 = vsel %vm4132, %v4176, %v4175
    %4178 = vrot.lane.b32.xlu0 %v4163, 96
    %v4179 = vpop.permute.xlu0 %4178
    %4180 = vrot.lane.b32.xlu0 %v4177, 96
    %v4181 = vpop.permute.xlu0 %4180
    %v4182 = vsel %vm4012, %v4179, %v4181
    %v4186 = vrot.slane %v4081, 4
    %v4187 = vrot.slane %v4083, 3
    %v4188 = vsel %vm4114, %v4187, %v4186
    %v4189 = vrot.slane %v4085, 2
    %v4190 = vsel %vm4117, %v4189, %v4188
    %v4191 = vrot.slane %v4087, 1
    %v4192 = vsel %vm4120, %v4191, %v4190
    %v4193 = vsel %vm4123, %v4089, %v4192
    %v4194 = vrot.slane %v4091, 7
    %v4195 = vsel %vm4126, %v4194, %v4193
    %v4196 = vrot.slane %v4093, 6
    %v4197 = vsel %vm4129, %v4196, %v4195
    %v4198 = vrot.slane %v4095, 5
    %v4199 = vsel %vm4132, %v4198, %v4197
    %v4200 = vrot.slane %v4082, 4
    %v4201 = vrot.slane %v4084, 3
    %v4202 = vsel %vm4114, %v4201, %v4200
    %v4203 = vrot.slane %v4086, 2
    %v4204 = vsel %vm4117, %v4203, %v4202
    %v4205 = vrot.slane %v4088, 1
    %v4206 = vsel %vm4120, %v4205, %v4204
    %v4207 = vsel %vm4123, %v4090, %v4206
    %v4208 = vrot.slane %v4092, 7
    %v4209 = vsel %vm4126, %v4208, %v4207
    %v4210 = vrot.slane %v4094, 6
    %v4211 = vsel %vm4129, %v4210, %v4209
    %v4212 = vrot.slane %v4096, 5
    %v4213 = vsel %vm4132, %v4212, %v4211
    %4214 = vrot.lane.b32.xlu0 %v4199, 64
    %v4215 = vpop.permute.xlu0 %4214
    %4216 = vrot.lane.b32.xlu0 %v4213, 64
    %v4217 = vpop.permute.xlu0 %4216
    %vm4218 = vcmask 523264
    %v4219 = vsel %vm4218, %v4215, %v4217
    %v4223 = vrot.slane %v4081, 6
    %v4224 = vrot.slane %v4083, 5
    %v4225 = vsel %vm4114, %v4224, %v4223
    %v4226 = vrot.slane %v4085, 4
    %v4227 = vsel %vm4117, %v4226, %v4225
    %v4228 = vrot.slane %v4087, 3
    %v4229 = vsel %vm4120, %v4228, %v4227
    %v4230 = vrot.slane %v4089, 2
    %v4231 = vsel %vm4123, %v4230, %v4229
    %v4232 = vrot.slane %v4091, 1
    %v4233 = vsel %vm4126, %v4232, %v4231
    %v4234 = vsel %vm4129, %v4093, %v4233
    %v4235 = vrot.slane %v4095, 7
    %v4236 = vsel %vm4132, %v4235, %v4234
    %v4237 = vrot.slane %v4082, 6
    %v4238 = vrot.slane %v4084, 5
    %v4239 = vsel %vm4114, %v4238, %v4237
    %v4240 = vrot.slane %v4086, 4
    %v4241 = vsel %vm4117, %v4240, %v4239
    %v4242 = vrot.slane %v4088, 3
    %v4243 = vsel %vm4120, %v4242, %v4241
    %v4244 = vrot.slane %v4090, 2
    %v4245 = vsel %vm4123, %v4244, %v4243
    %v4246 = vrot.slane %v4092, 1
    %v4247 = vsel %vm4126, %v4246, %v4245
    %v4248 = vsel %vm4129, %v4094, %v4247
    %v4249 = vrot.slane %v4096, 7
    %v4250 = vsel %vm4132, %v4249, %v4248
    %4251 = vrot.lane.b32.xlu0 %v4236, 32
    %v4252 = vpop.permute.xlu0 %4251
    %4253 = vrot.lane.b32.xlu0 %v4250, 32
    %v4254 = vpop.permute.xlu0 %4253
    %vm4255 = vcmask 261120
    %v4256 = vsel %vm4255, %v4252, %v4254
    %v4259 = vsel %vm4012, %v4147, %v4179
    %v4260 = vsel %vm4218, %v4181, %v4215
    %v4261 = vsel %vm4255, %v4217, %v4252
    %v4262 = vld [vmem:[#allocation10] sm:$0xff]
    %v4263 = vld [vmem:[#allocation10 + $0x8] sm:$0xff]
    %v4264 = vld [vmem:[#allocation10 + $0x10] sm:$0xff]
    %v4265 = vld [vmem:[#allocation10 + $0x18] sm:$0xff]
    %v4266 = vld [vmem:[#allocation10 + $0x20] sm:$0xff]
    %v4267 = vld [vmem:[#allocation10 + $0x28] sm:$0xff]
    %v4268 = vld [vmem:[#allocation10 + $0x30] sm:$0xff]
    %v4269 = vld [vmem:[#allocation10 + $0x38] sm:$0xff]
    %v4270 = vld [vmem:[#allocation10 + $0x40] sm:$0xff]
    %v4271 = vld [vmem:[#allocation10 + $0x48] sm:$0xff]
    %v4272 = vld [vmem:[#allocation10 + $0x50] sm:$0xff]
    %v4273 = vld [vmem:[#allocation10 + $0x58] sm:$0xff]
    %v4274 = vld [vmem:[#allocation10 + $0x60] sm:$0xff]
    %v4275 = vld [vmem:[#allocation10 + $0x68] sm:$0xff]
    %v4276 = vld [vmem:[#allocation10 + $0x70] sm:$0xff]
    %v4277 = vld [vmem:[#allocation10 + $0x78] sm:$0xff]
    %v4278 = vld [vmem:[#allocation10 + $0x80] sm:$0xff]
    %v4279 = vld [vmem:[#allocation10 + $0x88] sm:$0xff]
    %v4280 = vld [vmem:[#allocation10 + $0x90] sm:$0xff]
    %v4281 = vld [vmem:[#allocation10 + $0x98] sm:$0xff]
    %v4282 = vld [vmem:[#allocation10 + $0xa0] sm:$0xff]
    %v4283 = vld [vmem:[#allocation10 + $0xa8] sm:$0xff]
    %v4284 = vld [vmem:[#allocation10 + $0xb0] sm:$0xff]
    %v4285 = vld [vmem:[#allocation10 + $0xb8] sm:$0xff]
    %v4286 = vld [vmem:[#allocation10 + $0xc0] sm:$0xff]
    %v4287 = vld [vmem:[#allocation10 + $0xc8] sm:$0xff]
    %v4288 = vld [vmem:[#allocation10 + $0xd0] sm:$0xff]
    %v4289 = vld [vmem:[#allocation10 + $0xd8] sm:$0xff]
    %v4290 = vld [vmem:[#allocation10 + $0xe0] sm:$0xff]
    %v4291 = vld [vmem:[#allocation10 + $0xe8] sm:$0xff]
    %v4292 = vld [vmem:[#allocation10 + $0xf0] sm:$0xff]
    %v4293 = vld [vmem:[#allocation10 + $0xf8] sm:$0xff]
    %v4294 = vld [vmem:[#allocation10 + $0x100] sm:$0xff]
    %v4295 = vld [vmem:[#allocation10 + $0x108] sm:$0xff]
    %v4296 = vld [vmem:[#allocation10 + $0x110] sm:$0xff]
    %v4297 = vld [vmem:[#allocation10 + $0x118] sm:$0xff]
    %v4298 = vld [vmem:[#allocation10 + $0x120] sm:$0xff]
    %v4299 = vld [vmem:[#allocation10 + $0x128] sm:$0xff]
    %v4300 = vld [vmem:[#allocation10 + $0x130] sm:$0xff]
    %v4301 = vld [vmem:[#allocation10 + $0x138] sm:$0xff]
    %v4302 = vld [vmem:[#allocation10 + $0x140] sm:$0xff]
    %v4303 = vld [vmem:[#allocation10 + $0x148] sm:$0xff]
    %v4304 = vld [vmem:[#allocation10 + $0x150] sm:$0xff]
    %v4305 = vld [vmem:[#allocation10 + $0x158] sm:$0xff]
    %v4306 = vld [vmem:[#allocation10 + $0x160] sm:$0xff]
    %v4307 = vld [vmem:[#allocation10 + $0x168] sm:$0xff]
    %v4308 = vld [vmem:[#allocation10 + $0x170] sm:$0xff]
    %v4309 = vld [vmem:[#allocation10 + $0x178] sm:$0xff]
    %v4310 = vld [vmem:[#allocation10 + $0x180] sm:$0xff]
    %v4311 = vld [vmem:[#allocation10 + $0x188] sm:$0xff]
    %v4312 = vld [vmem:[#allocation10 + $0x190] sm:$0xff]
    %v4313 = vld [vmem:[#allocation10 + $0x198] sm:$0xff]
    %v4314 = vld [vmem:[#allocation10 + $0x1a0] sm:$0xff]
    %v4315 = vld [vmem:[#allocation10 + $0x1a8] sm:$0xff]
    %v4316 = vld [vmem:[#allocation10 + $0x1b0] sm:$0xff]
    %v4317 = vld [vmem:[#allocation10 + $0x1b8] sm:$0xff]
    %v4318 = vld [vmem:[#allocation10 + $0x1c0] sm:$0xff]
    %v4319 = vld [vmem:[#allocation10 + $0x1c8] sm:$0xff]
    %v4320 = vld [vmem:[#allocation10 + $0x1d0] sm:$0xff]
    %v4321 = vld [vmem:[#allocation10 + $0x1d8] sm:$0xff]
    %v4322 = vld [vmem:[#allocation10 + $0x1e0] sm:$0xff]
    %v4323 = vld [vmem:[#allocation10 + $0x1e8] sm:$0xff]
    %v4324 = vld [vmem:[#allocation10 + $0x1f0] sm:$0xff]
    %v4325 = vld [vmem:[#allocation10 + $0x1f8] sm:$0xff]
    %v4326 = vld [vmem:[#allocation10 + $0x200] sm:$0xff]
    %v4327 = vld [vmem:[#allocation10 + $0x208] sm:$0xff]
    %v4328 = vld [vmem:[#allocation10 + $0x210] sm:$0xff]
    %v4329 = vld [vmem:[#allocation10 + $0x218] sm:$0xff]
    %v4330 = vld [vmem:[#allocation10 + $0x220] sm:$0xff]
    %v4331 = vld [vmem:[#allocation10 + $0x228] sm:$0xff]
    %v4332 = vld [vmem:[#allocation10 + $0x230] sm:$0xff]
    %v4333 = vld [vmem:[#allocation10 + $0x238] sm:$0xff]
    %v4334 = vld [vmem:[#allocation10 + $0x240] sm:$0xff]
    %v4335 = vld [vmem:[#allocation10 + $0x248] sm:$0xff]
    %v4336 = vld [vmem:[#allocation10 + $0x250] sm:$0xff]
    %v4337 = vld [vmem:[#allocation10 + $0x258] sm:$0xff]
    %v4338 = vld [vmem:[#allocation10 + $0x260] sm:$0xff]
    %v4339 = vld [vmem:[#allocation10 + $0x268] sm:$0xff]
    %v4340 = vld [vmem:[#allocation10 + $0x270] sm:$0xff]
    %v4341 = vld [vmem:[#allocation10 + $0x278] sm:$0xff]
    %v4342 = vld [vmem:[#allocation10 + $0x280] sm:$0xff]
    %v4343 = vld [vmem:[#allocation10 + $0x288] sm:$0xff]
    %v4344 = vld [vmem:[#allocation10 + $0x290] sm:$0xff]
    %v4345 = vld [vmem:[#allocation10 + $0x298] sm:$0xff]
    %v4346 = vld [vmem:[#allocation10 + $0x2a0] sm:$0xff]
    %v4347 = vld [vmem:[#allocation10 + $0x2a8] sm:$0xff]
    %v4348 = vld [vmem:[#allocation10 + $0x2b0] sm:$0xff]
    %v4349 = vld [vmem:[#allocation10 + $0x2b8] sm:$0xff]
    %v4350 = vld [vmem:[#allocation10 + $0x2c0] sm:$0xff]
    %v4351 = vld [vmem:[#allocation10 + $0x2c8] sm:$0xff]
    %v4352 = vld [vmem:[#allocation10 + $0x2d0] sm:$0xff]
    %v4353 = vld [vmem:[#allocation10 + $0x2d8] sm:$0xff]
    %v4354 = vld [vmem:[#allocation10 + $0x2e0] sm:$0xff]
    %v4355 = vld [vmem:[#allocation10 + $0x2e8] sm:$0xff]
    %v4356 = vld [vmem:[#allocation10 + $0x2f0] sm:$0xff]
    %v4357 = vld [vmem:[#allocation10 + $0x2f8] sm:$0xff]
    %v4358 = vld [vmem:[#allocation10 + $0x300] sm:$0xff]
    %v4359 = vld [vmem:[#allocation10 + $0x308] sm:$0xff]
    %v4360 = vld [vmem:[#allocation10 + $0x310] sm:$0xff]
    %v4361 = vld [vmem:[#allocation10 + $0x318] sm:$0xff]
    %v4362 = vld [vmem:[#allocation10 + $0x320] sm:$0xff]
    %v4363 = vld [vmem:[#allocation10 + $0x328] sm:$0xff]
    %v4364 = vld [vmem:[#allocation10 + $0x330] sm:$0xff]
    %v4365 = vld [vmem:[#allocation10 + $0x338] sm:$0xff]
    %v4366 = vld [vmem:[#allocation10 + $0x340] sm:$0xff]
    %v4367 = vld [vmem:[#allocation10 + $0x348] sm:$0xff]
    %v4368 = vld [vmem:[#allocation10 + $0x350] sm:$0xff]
    %v4369 = vld [vmem:[#allocation10 + $0x358] sm:$0xff]
    %v4370 = vld [vmem:[#allocation10 + $0x360] sm:$0xff]
    %v4371 = vld [vmem:[#allocation10 + $0x368] sm:$0xff]
    %v4372 = vld [vmem:[#allocation10 + $0x370] sm:$0xff]
    %v4373 = vld [vmem:[#allocation10 + $0x378] sm:$0xff]
    %v4374 = vld [vmem:[#allocation11] sm:$0x1]
    %v4376 = vlaneseq
    %v4377 = vshrl.u32 %v4376, 7
    %v4378 = vsub.s32 0, %v4377
    %v4379 = vrot.slane %v4374, %v4378
    %4381 = vmatprep.subr.mxu0 0.0
    %4382 = vmatpush1.msra.mxu0 %v4277
    %4383 = vmatprep.subr.mxu0 0.0
    %4384 = vmatpush1.msra.mxu0 %v4276
    %4385 = vmatprep.subr.mxu0 0.0
    %4386 = vmatpush1.msra.mxu0 %v4275
    %4387 = vmatprep.subr.mxu0 0.0
    %4388 = vmatpush1.msra.mxu0 %v4274
    %4389 = vmatprep.subr.mxu0 0.0
    %4390 = vmatpush1.msra.mxu0 %v4273
    %4391 = vmatprep.subr.mxu0 0.0
    %4392 = vmatpush1.msra.mxu0 %v4272
    %4393 = vmatprep.subr.mxu0 0.0
    %4394 = vmatpush1.msra.mxu0 %v4271
    %4395 = vmatprep.subr.mxu0 0.0
    %4396 = vmatpush1.msra.mxu0 %v4270
    %4397 = vmatprep.subr.mxu0 0.0
    %4398 = vmatpush1.msra.mxu0 %v4269
    %4399 = vmatprep.subr.mxu0 0.0
    %4400 = vmatpush1.msra.mxu0 %v4268
    %4401 = vmatprep.subr.mxu0 0.0
    %4402 = vmatpush1.msra.mxu0 %v4267
    %4403 = vmatprep.subr.mxu0 0.0
    %4404 = vmatpush1.msra.mxu0 %v4266
    %4405 = vmatprep.subr.mxu0 0.0
    %4406 = vmatpush1.msra.mxu0 %v4265
    %4407 = vmatprep.subr.mxu0 0.0
    %4408 = vmatpush1.msra.mxu0 %v4264
    %4409 = vmatprep.subr.mxu0 0.0
    %4410 = vmatpush1.msra.mxu0 %v4263
    %4411 = vmatprep.subr.mxu0 0.0
    %4412 = vmatpush1.msra.mxu0 %v4262
    %4413 = vmatprep.subr.mxu0 0.0
    %4414 = vmatpush2.msra.mxu0 %v4293
    %4415 = vmatprep.subr.mxu0 0.0
    %4416 = vmatpush2.msra.mxu0 %v4292
    %4417 = vmatprep.subr.mxu0 0.0
    %4418 = vmatpush2.msra.mxu0 %v4291
    %4419 = vmatprep.subr.mxu0 0.0
    %4420 = vmatpush2.msra.mxu0 %v4290
    %4421 = vmatprep.subr.mxu0 0.0
    %4422 = vmatpush2.msra.mxu0 %v4289
    %4423 = vmatprep.subr.mxu0 0.0
    %4424 = vmatpush2.msra.mxu0 %v4288
    %4425 = vmatprep.subr.mxu0 0.0
    %4426 = vmatpush2.msra.mxu0 %v4287
    %4427 = vmatprep.subr.mxu0 0.0
    %4428 = vmatpush2.msra.mxu0 %v4286
    %4429 = vmatprep.subr.mxu0 0.0
    %4430 = vmatpush2.msra.mxu0 %v4285
    %4431 = vmatprep.subr.mxu0 0.0
    %4432 = vmatpush2.msra.mxu0 %v4284
    %4433 = vmatprep.subr.mxu0 0.0
    %4434 = vmatpush2.msra.mxu0 %v4283
    %4435 = vmatprep.subr.mxu0 0.0
    %4436 = vmatpush2.msra.mxu0 %v4282
    %4437 = vmatprep.subr.mxu0 0.0
    %4438 = vmatpush2.msra.mxu0 %v4281
    %4439 = vmatprep.subr.mxu0 0.0
    %4440 = vmatpush2.msra.mxu0 %v4280
    %4441 = vmatprep.subr.mxu0 0.0
    %4442 = vmatpush2.msra.mxu0 %v4279
    %4443 = vmatprep.subr.mxu0 0.0
    %4444 = vmatpush2.msra.mxu0 %v4278
    %4445 = vmatprep.mubr.f32.mxu0 %v4259
    %4446 = vmatmul.mubr.f32.gmra.mxu0 %v4133
    %v4447 = vpop.f32.mrf.mxu0
    %v4448 = vadd.f32 %v4379, %v4447
    %v4449 = vpop.f32.mrf.mxu0
    %4450 = vdwg.mxu0
    %4451 = vmatprep.subr.mxu0 0.0
    %4452 = vmatpush1.msra.mxu0 %v4309
    %4453 = vmatprep.subr.mxu0 0.0
    %4454 = vmatpush1.msra.mxu0 %v4308
    %4455 = vmatprep.subr.mxu0 0.0
    %4456 = vmatpush1.msra.mxu0 %v4307
    %4457 = vmatprep.subr.mxu0 0.0
    %4458 = vmatpush1.msra.mxu0 %v4306
    %4459 = vmatprep.subr.mxu0 0.0
    %4460 = vmatpush1.msra.mxu0 %v4305
    %4461 = vmatprep.subr.mxu0 0.0
    %4462 = vmatpush1.msra.mxu0 %v4304
    %4463 = vmatprep.subr.mxu0 0.0
    %4464 = vmatpush1.msra.mxu0 %v4303
    %4465 = vmatprep.subr.mxu0 0.0
    %4466 = vmatpush1.msra.mxu0 %v4302
    %4467 = vmatprep.subr.mxu0 0.0
    %4468 = vmatpush1.msra.mxu0 %v4301
    %4469 = vmatprep.subr.mxu0 0.0
    %4470 = vmatpush1.msra.mxu0 %v4300
    %4471 = vmatprep.subr.mxu0 0.0
    %4472 = vmatpush1.msra.mxu0 %v4299
    %4473 = vmatprep.subr.mxu0 0.0
    %4474 = vmatpush1.msra.mxu0 %v4298
    %4475 = vmatprep.subr.mxu0 0.0
    %4476 = vmatpush1.msra.mxu0 %v4297
    %4477 = vmatprep.subr.mxu0 0.0
    %4478 = vmatpush1.msra.mxu0 %v4296
    %4479 = vmatprep.subr.mxu0 0.0
    %4480 = vmatpush1.msra.mxu0 %v4295
    %4481 = vmatprep.subr.mxu0 0.0
    %4482 = vmatpush1.msra.mxu0 %v4294
    %4483 = vmatprep.subr.mxu0 0.0
    %4484 = vmatpush2.msra.mxu0 %v4325
    %4485 = vmatprep.subr.mxu0 0.0
    %4486 = vmatpush2.msra.mxu0 %v4324
    %4487 = vmatprep.subr.mxu0 0.0
    %4488 = vmatpush2.msra.mxu0 %v4323
    %4489 = vmatprep.subr.mxu0 0.0
    %4490 = vmatpush2.msra.mxu0 %v4322
    %4491 = vmatprep.subr.mxu0 0.0
    %4492 = vmatpush2.msra.mxu0 %v4321
    %4493 = vmatprep.subr.mxu0 0.0
    %4494 = vmatpush2.msra.mxu0 %v4320
    %4495 = vmatprep.subr.mxu0 0.0
    %4496 = vmatpush2.msra.mxu0 %v4319
    %4497 = vmatprep.subr.mxu0 0.0
    %4498 = vmatpush2.msra.mxu0 %v4318
    %4499 = vmatprep.subr.mxu0 0.0
    %4500 = vmatpush2.msra.mxu0 %v4317
    %4501 = vmatprep.subr.mxu0 0.0
    %4502 = vmatpush2.msra.mxu0 %v4316
    %4503 = vmatprep.subr.mxu0 0.0
    %4504 = vmatpush2.msra.mxu0 %v4315
    %4505 = vmatprep.subr.mxu0 0.0
    %4506 = vmatpush2.msra.mxu0 %v4314
    %4507 = vmatprep.subr.mxu0 0.0
    %4508 = vmatpush2.msra.mxu0 %v4313
    %4509 = vmatprep.subr.mxu0 0.0
    %4510 = vmatpush2.msra.mxu0 %v4312
    %4511 = vmatprep.subr.mxu0 0.0
    %4512 = vmatpush2.msra.mxu0 %v4311
    %4513 = vmatprep.subr.mxu0 0.0
    %4514 = vmatpush2.msra.mxu0 %v4310
    %4515 = vmatprep.mubr.f32.mxu0 %v4260
    %4516 = vmatmul.mubr.f32.gmra.mxu0 %v4182
    %v4517 = vpop.f32.mrf.mxu0
    %v4518 = vadd.f32 %v4448, %v4517
    %v4519 = vpop.f32.mrf.mxu0
    %4520 = vdwg.mxu0
    %4521 = vmatprep.subr.mxu0 0.0
    %4522 = vmatpush1.msra.mxu0 %v4341
    %4523 = vmatprep.subr.mxu0 0.0
    %4524 = vmatpush1.msra.mxu0 %v4340
    %4525 = vmatprep.subr.mxu0 0.0
    %4526 = vmatpush1.msra.mxu0 %v4339
    %4527 = vmatprep.subr.mxu0 0.0
    %4528 = vmatpush1.msra.mxu0 %v4338
    %4529 = vmatprep.subr.mxu0 0.0
    %4530 = vmatpush1.msra.mxu0 %v4337
    %4531 = vmatprep.subr.mxu0 0.0
    %4532 = vmatpush1.msra.mxu0 %v4336
    %4533 = vmatprep.subr.mxu0 0.0
    %4534 = vmatpush1.msra.mxu0 %v4335
    %4535 = vmatprep.subr.mxu0 0.0
    %4536 = vmatpush1.msra.mxu0 %v4334
    %4537 = vmatprep.subr.mxu0 0.0
    %4538 = vmatpush1.msra.mxu0 %v4333
    %4539 = vmatprep.subr.mxu0 0.0
    %4540 = vmatpush1.msra.mxu0 %v4332
    %4541 = vmatprep.subr.mxu0 0.0
    %4542 = vmatpush1.msra.mxu0 %v4331
    %4543 = vmatprep.subr.mxu0 0.0
    %4544 = vmatpush1.msra.mxu0 %v4330
    %4545 = vmatprep.subr.mxu0 0.0
    %4546 = vmatpush1.msra.mxu0 %v4329
    %4547 = vmatprep.subr.mxu0 0.0
    %4548 = vmatpush1.msra.mxu0 %v4328
    %4549 = vmatprep.subr.mxu0 0.0
    %4550 = vmatpush1.msra.mxu0 %v4327
    %4551 = vmatprep.subr.mxu0 0.0
    %4552 = vmatpush1.msra.mxu0 %v4326
    %4553 = vmatprep.subr.mxu0 0.0
    %4554 = vmatpush2.msra.mxu0 %v4357
    %4555 = vmatprep.subr.mxu0 0.0
    %4556 = vmatpush2.msra.mxu0 %v4356
    %4557 = vmatprep.subr.mxu0 0.0
    %4558 = vmatpush2.msra.mxu0 %v4355
    %4559 = vmatprep.subr.mxu0 0.0
    %4560 = vmatpush2.msra.mxu0 %v4354
    %4561 = vmatprep.subr.mxu0 0.0
    %4562 = vmatpush2.msra.mxu0 %v4353
    %4563 = vmatprep.subr.mxu0 0.0
    %4564 = vmatpush2.msra.mxu0 %v4352
    %4565 = vmatprep.subr.mxu0 0.0
    %4566 = vmatpush2.msra.mxu0 %v4351
    %4567 = vmatprep.subr.mxu0 0.0
    %4568 = vmatpush2.msra.mxu0 %v4350
    %4569 = vmatprep.subr.mxu0 0.0
    %4570 = vmatpush2.msra.mxu0 %v4349
    %4571 = vmatprep.subr.mxu0 0.0
    %4572 = vmatpush2.msra.mxu0 %v4348
    %4573 = vmatprep.subr.mxu0 0.0
    %4574 = vmatpush2.msra.mxu0 %v4347
    %4575 = vmatprep.subr.mxu0 0.0
    %4576 = vmatpush2.msra.mxu0 %v4346
    %4577 = vmatprep.subr.mxu0 0.0
    %4578 = vmatpush2.msra.mxu0 %v4345
    %4579 = vmatprep.subr.mxu0 0.0
    %4580 = vmatpush2.msra.mxu0 %v4344
    %4581 = vmatprep.subr.mxu0 0.0
    %4582 = vmatpush2.msra.mxu0 %v4343
    %4583 = vmatprep.subr.mxu0 0.0
    %4584 = vmatpush2.msra.mxu0 %v4342
    %4585 = vmatprep.mubr.f32.mxu0 %v4261
    %4586 = vmatmul.mubr.f32.gmra.mxu0 %v4219
    %v4587 = vpop.f32.mrf.mxu0
    %v4588 = vadd.f32 %v4518, %v4587
    %v4589 = vpop.f32.mrf.mxu0
    %4590 = vdwg.mxu0
    %4591 = vmatprep.subr.mxu0 0.0
    %4592 = vmatpush1.msra.mxu0 %v4373
    %4593 = vmatprep.subr.mxu0 0.0
    %4594 = vmatpush1.msra.mxu0 %v4372
    %4595 = vmatprep.subr.mxu0 0.0
    %4596 = vmatpush1.msra.mxu0 %v4371
    %4597 = vmatprep.subr.mxu0 0.0
    %4598 = vmatpush1.msra.mxu0 %v4370
    %4599 = vmatprep.subr.mxu0 0.0
    %4600 = vmatpush1.msra.mxu0 %v4369
    %4601 = vmatprep.subr.mxu0 0.0
    %4602 = vmatpush1.msra.mxu0 %v4368
    %4603 = vmatprep.subr.mxu0 0.0
    %4604 = vmatpush1.msra.mxu0 %v4367
    %4605 = vmatprep.subr.mxu0 0.0
    %4606 = vmatpush1.msra.mxu0 %v4366
    %4607 = vmatprep.subr.mxu0 0.0
    %4608 = vmatpush1.msra.mxu0 %v4365
    %4609 = vmatprep.subr.mxu0 0.0
    %4610 = vmatpush1.msra.mxu0 %v4364
    %4611 = vmatprep.subr.mxu0 0.0
    %4612 = vmatpush1.msra.mxu0 %v4363
    %4613 = vmatprep.subr.mxu0 0.0
    %4614 = vmatpush1.msra.mxu0 %v4362
    %4615 = vmatprep.subr.mxu0 0.0
    %4616 = vmatpush1.msra.mxu0 %v4361
    %4617 = vmatprep.subr.mxu0 0.0
    %4618 = vmatpush1.msra.mxu0 %v4360
    %4619 = vmatprep.subr.mxu0 0.0
    %4620 = vmatpush1.msra.mxu0 %v4359
    %4621 = vmatprep.subr.mxu0 0.0
    %4622 = vmatpush1.msra.mxu0 %v4358
    %4623 = vmatprep.subr.mxu0 0.0
    %4624 = vmatpush2.msra.mxu0 0.0
    %4625 = vmatprep.subr.mxu0 0.0
    %4626 = vmatpush2.msra.mxu0 0.0
    %4627 = vmatprep.subr.mxu0 0.0
    %4628 = vmatpush2.msra.mxu0 0.0
    %4629 = vmatprep.subr.mxu0 0.0
    %4630 = vmatpush2.msra.mxu0 0.0
    %4631 = vmatprep.subr.mxu0 0.0
    %4632 = vmatpush2.msra.mxu0 0.0
    %4633 = vmatprep.subr.mxu0 0.0
    %4634 = vmatpush2.msra.mxu0 0.0
    %4635 = vmatprep.subr.mxu0 0.0
    %4636 = vmatpush2.msra.mxu0 0.0
    %4637 = vmatprep.subr.mxu0 0.0
    %4638 = vmatpush2.msra.mxu0 0.0
    %4639 = vmatprep.subr.mxu0 0.0
    %4640 = vmatpush2.msra.mxu0 0.0
    %4641 = vmatprep.subr.mxu0 0.0
    %4642 = vmatpush2.msra.mxu0 0.0
    %4643 = vmatprep.subr.mxu0 0.0
    %4644 = vmatpush2.msra.mxu0 0.0
    %4645 = vmatprep.subr.mxu0 0.0
    %4646 = vmatpush2.msra.mxu0 0.0
    %4647 = vmatprep.subr.mxu0 0.0
    %4648 = vmatpush2.msra.mxu0 0.0
    %4649 = vmatprep.subr.mxu0 0.0
    %4650 = vmatpush2.msra.mxu0 0.0
    %4651 = vmatprep.subr.mxu0 0.0
    %4652 = vmatpush2.msra.mxu0 0.0
    %4653 = vmatprep.subr.mxu0 0.0
    %4654 = vmatpush2.msra.mxu0 0.0
    %4655 = vmatprep.mubr.f32.mxu0 0.0
    %4656 = vmatmul.mubr.f32.gmra.mxu0 %v4256
    %v4657 = vpop.f32.mrf.mxu0
    %v4658 = vadd.f32 %v4588, %v4657
    %v4659 = vpop.f32.mrf.mxu0
    %4660 = vdwg.mxu0
    %4661 = vmax.xlane.f32.xlu0 %v4658
    %v4662 = vpop.xlane.xlu0 %4661
    %v4663 = vsub.f32 %v4658, %v4662
    %v4664 = vmul.f32 %v4663, 1.442695
    %v4665 = vpow.pop %v4664
    %4666 = vadd.xlane.f32.xlu0 %v4665
    %v4667 = vpop.xlane.xlu0 %4666
    %v4668 = vlog2.pop %v4667
    %v4669 = vmul.f32 %v4668, 0.6931472
    %v4670 = vsub.f32 %v4663, %v4669
    %4671 = vst [vmem:[#allocation13] sm:$0xff] %v4670
    // Predicated region
    $region54: #{tpu_custom_call.1} parent=1 // pred_check
      _
    $region55: #{tpu_custom_call.1} parent=1 // pred_check_branch
      %4673 = sbr.rel (0) target = $region57
    $region56: #{tpu_custom_call.1} parent=1 // pred_region
      %s4675 = ssub.s32 128, 128
      %4676 = vsyncadd [#allocation4], %s4675
      %s4678 = sshll.u32 [#allocation13], 4
      %s4679 = int_to_ptr.vmem [resolvable:$true] %s4678
      %4681 = dma.vmem_to_hbm [thread:$0]  %s4679, 128, %s7, [#allocation4]
    $region57: #{tpu_custom_call.1} parent=1 // pred_fallthru
      _
    // Predicated region
    $region58: #{tpu_custom_call.1} parent=1 // pred_check
      _
    $region59: #{tpu_custom_call.1} parent=1 // pred_check_branch
      %4683 = sbr.rel (0) target = $region61
    $region60: #{tpu_custom_call.1} parent=1 // pred_region
      %4684 = dma.done [#allocation4], 128
    $region61: #{tpu_custom_call.1} parent=1 // pred_fallthru
      _
    %4685 = vsyncpa [#allocation3], 1
    %4686 = vsyncpa [#allocation6], 1
    %4687 = vsyncpa [#allocation9], 1
    %4688 = vsyncpa [#allocation12], 1
    %4689 = vsyncpa [#allocation4], 1

</llo_original>
